<compile_context>
chip_gen: v7x
topology: tpu7x:2x2x1
jax: 0.10.0
libtpu: 0.0.40
codegen_flags: <defaults>
</compile_context>

<pallas_src>
import functools

import jax
import jax.numpy as jnp
from jax.experimental import pallas as pl
from jax.experimental.pallas import tpu as pltpu


# (ksize, stride, pad, activation) per conv layer, mirroring the ModuleList.
_LAYER_CFG = [(4, 2, 1, "relu")] * 4 + [(4, 1, 0, "relu"), (1, 1, 0, "tanh")]


# ---------------------------------------------------------------------------
# Fused whole-encoder kernel (one grid step = one image).
# ---------------------------------------------------------------------------
def _encoder_kernel(*refs, cfgs):
    """refs = (x_ref, M1, R1, M2, R2, M3, R3, M4, R4, M5, R5, M6, out_ref).

    Per layer (all values, VMEM resident):
      z = a @ M                          # (Hin, K*OW*CO)   kw taps + W padding
      y = sum_kh R[kh] @ z[:, kh-block]  # (OH,  OW*CO)     kh taps + H padding
      a = act(y)
    """
    x_ref, o_ref = refs[0], refs[-1]
    ops = refs[1:-1]

    a = x_ref[0]                       # (Hin, Win*Cin) f32 rows=(h), lanes=(w,c)
    oi = 0
    for ksize, width, act in cfgs:
        m_ref = ops[oi]
        oi += 1
        z = jnp.dot(a, m_ref[...], preferred_element_type=jnp.float32)
        if ksize > 1:
            r_ref = ops[oi]
            oi += 1
            y = jnp.dot(r_ref[0], z[:, :width],
                        preferred_element_type=jnp.float32)
            for kh in range(1, ksize):
                y = y + jnp.dot(r_ref[kh], z[:, kh * width:(kh + 1) * width],
                                preferred_element_type=jnp.float32)
        else:
            y = z
        a = jnp.tanh(y) if act == "tanh" else jnp.maximum(y, 0.0)

    o_ref[0] = a.astype(o_ref.dtype)   # final activation is (1, ch_output)


# ---------------------------------------------------------------------------
# Parameter creation and one-time weight transformation.
# ---------------------------------------------------------------------------
def init_encoder_params(key, ch_img, ch_latent, ch_output):
    """Deterministic synthetic weights, shapes matching nn.Conv2d(..., bias=False)."""
    specs = []
    ch_in = ch_img
    for i in range(4):
        ch_out = ch_latent * 2 ** i
        specs.append((ch_out, ch_in, 4, 4))             # Conv2d(ch_in, ch_out, 4, 2, 1)
        ch_in = ch_out
    specs.append((ch_latent * 8, ch_latent * 8, 4, 4))  # Conv2d(.., 4, 1, 0)
    specs.append((ch_output, ch_latent * 8, 1, 1))      # Conv2d(.., 1, 1, 0)
    keys = jax.random.split(key, len(specs))
    params = []
    for k, s in zip(keys, specs):
        co, ci, kh, kw = s
        fan_in = ci * kh * kw
        params.append(jax.random.normal(k, s, jnp.float32) / jnp.sqrt(fan_in))
    return params


def prepare_encoder(params, hw):
    """Pre-transform OIHW conv weights into matmul-ready operands (run once).

    Returns:
      mats: flat list [M1, R1, M2, R2, ..., M5, R5, M6]
      cfgs: static per-layer tuple (ksize, OW*CO, activation)
    """
    hin = win = hw
    mats, cfgs = [], []
    for w_oihw, (k, s, p, act) in zip(params, _LAYER_CFG):
        co, ci, _, _ = w_oihw.shape
        oh = (hin + 2 * p - k) // s + 1
        ow = (win + 2 * p - k) // s + 1

        kq = jnp.arange(k)
        # Ind[kw, t, w] = 1 iff w == s*t + kw - p (out-of-range taps vanish ->
        # implicit zero padding along W).
        ind_w = (jnp.arange(win)[None, None, :] ==
                 (s * jnp.arange(ow)[None, :, None] + kq[:, None, None] - p)
                 ).astype(jnp.float32)                              # (k, ow, win)
        m = jnp.einsum("ochq,qtw->wchto", w_oihw, ind_w)            # (w,c,kh,t,co)
        mats.append(m.reshape(win * ci, k * ow * co))

        if k > 1:
            # R[kh, i, h] = 1 iff h == s*i + kh - p (implicit zero padding along H).
            r = (jnp.arange(hin)[None, None, :] ==
                 (s * jnp.arange(oh)[None, :, None] + kq[:, None, None] - p)
                 ).astype(jnp.float32)                              # (k, oh, hin)
            mats.append(r)

        cfgs.append((k, ow * co, act))
        hin, win = oh, ow
    return mats, tuple(cfgs)


def _const_index_map(ndim):
    zeros = (0,) * ndim
    return lambda b: zeros


# ---------------------------------------------------------------------------
# Forward pass: a single fused pallas_call.
# ---------------------------------------------------------------------------
def encoder_forward(x_nchw, mats, cfgs, ch_output):
    B, C, H, W = x_nchw.shape
    # NCHW -> NHWC -> (B, H, W*C): rows = image rows, lanes = (w, c).
    x = jnp.transpose(x_nchw, (0, 2, 3, 1)).reshape(B, H, W * C)

    in_specs = [pl.BlockSpec((1, H, W * C), lambda b: (b, 0, 0))]
    for arr in mats:
        in_specs.append(pl.BlockSpec(arr.shape, _const_index_map(arr.ndim)))
    out_specs = pl.BlockSpec((1, 1, ch_output), lambda b: (b, 0, 0))

    # Advisory cost estimate (static python ints).
    flops, rows, mi = 0, H, 0
    for ksize, width, _ in cfgs:
        m = mats[mi]
        mi += 1
        flops += 2 * rows * m.shape[0] * m.shape[1]
        if ksize > 1:
            r = mats[mi]
            mi += 1
            flops += 2 * ksize * r.shape[1] * r.shape[2] * width
            rows = r.shape[1]
    flops *= B
    bytes_accessed = 4 * (x.size + sum(a.size for a in mats) + B * ch_output)

    out = pl.pallas_call(
        functools.partial(_encoder_kernel, cfgs=cfgs),
        out_shape=jax.ShapeDtypeStruct((B, 1, ch_output), jnp.float32),
        grid_spec=pltpu.PrefetchScalarGridSpec(
            num_scalar_prefetch=0,
            grid=(B,),
            in_specs=in_specs,
            out_specs=out_specs),
        compiler_params=pltpu.CompilerParams(
            dimension_semantics=("parallel",),
            vmem_limit_bytes=32 * 1024 * 1024),
        cost_estimate=pl.CostEstimate(
            flops=flops,
            transcendentals=B * ch_output,
            bytes_accessed=bytes_accessed),
    )(x, *mats)
    # PyTorch x.view(B, -1) on a (B, CO, 1, 1) tensor == (B, CO).
    return out.reshape(B, ch_output)


# ---------------------------------------------------------------------------
# Pure-JAX reference (self-check only).
# ---------------------------------------------------------------------------
def encoder_ref(x_nchw, params):
    x = x_nchw
    for w, (k, s, p, act) in zip(params, _LAYER_CFG):
        x = jax.lax.conv_general_dilated(
            x, w, (s, s), [(p, p), (p, p)],
            dimension_numbers=("NCHW", "OIHW", "NCHW"))
        x = jnp.tanh(x) if act == "tanh" else jax.nn.relu(x)
    return x.reshape(x.shape[0], -1)


if __name__ == "__main__":
    # The architecture (4 stride-2 convs, then a 4x4 VALID conv) needs 64x64
    # input for the final spatial size to be 1x1 (64 -> 32 -> 16 -> 8 -> 4 -> 1),
    # so the flattened output is exactly (B, ch_output).
    B, CH_IMG, CH_LATENT, CH_OUTPUT, HW = 2, 3, 8, 16, 64

    key = jax.random.PRNGKey(0)
    kx, kp = jax.random.split(key)
    x = jax.random.normal(kx, (B, CH_IMG, HW, HW), jnp.float32)
    params = init_encoder_params(kp, CH_IMG, CH_LATENT, CH_OUTPUT)

    # One-time weight transformation (hoisted out of the forward path).
    mats, cfgs = prepare_encoder(params, HW)

    fwd = jax.jit(encoder_forward, static_argnums=(2, 3))
    out = jax.block_until_ready(fwd(x, mats, cfgs, CH_OUTPUT))
    ref = jax.block_until_ready(encoder_ref(x, params))

    assert out.shape == (B, CH_OUTPUT), out.shape
    assert jnp.allclose(out, ref, atol=1e-3, rtol=1e-3), float(
        jnp.max(jnp.abs(out - ref)))
    print("KERNEL_OK")
</pallas_src>

<mosaic_0001>
module attributes {stable_mosaic.version = 11 : i64} {
  func.func @_encoder_kernel(%arg0: i32, %arg1: memref<1x64x192xf32, #tpu.memory_space<vmem>>, %arg2: memref<192x1024xf32, #tpu.memory_space<vmem>>, %arg3: memref<4x32x64xf32, #tpu.memory_space<vmem>>, %arg4: memref<256x1024xf32, #tpu.memory_space<vmem>>, %arg5: memref<4x16x32xf32, #tpu.memory_space<vmem>>, %arg6: memref<256x1024xf32, #tpu.memory_space<vmem>>, %arg7: memref<4x8x16xf32, #tpu.memory_space<vmem>>, %arg8: memref<256x1024xf32, #tpu.memory_space<vmem>>, %arg9: memref<4x4x8xf32, #tpu.memory_space<vmem>>, %arg10: memref<256x256xf32, #tpu.memory_space<vmem>>, %arg11: memref<4x1x4xf32, #tpu.memory_space<vmem>>, %arg12: memref<64x16xf32, #tpu.memory_space<vmem>>, %arg13: memref<1x1x16xf32, #tpu.memory_space<vmem>>) attributes {dimension_semantics = [#tpu.dimension_semantics<parallel>], iteration_bounds = array<i64: 2>, scalar_prefetch = 0 : i64, scratch_operands = 0 : i64, tpu.core_type = #tpu.core_type<tc>, window_params = [{transform_indices = @transform_0, window_bounds = array<i64: 1, 64, 192>}, {pipeline_mode = #tpu.pipeline_mode<synchronous>, transform_indices = @transform_1, window_bounds = array<i64: 192, 1024>}, {pipeline_mode = #tpu.pipeline_mode<synchronous>, transform_indices = @transform_2, window_bounds = array<i64: 4, 32, 64>}, {pipeline_mode = #tpu.pipeline_mode<synchronous>, transform_indices = @transform_3, window_bounds = array<i64: 256, 1024>}, {pipeline_mode = #tpu.pipeline_mode<synchronous>, transform_indices = @transform_4, window_bounds = array<i64: 4, 16, 32>}, {pipeline_mode = #tpu.pipeline_mode<synchronous>, transform_indices = @transform_5, window_bounds = array<i64: 256, 1024>}, {pipeline_mode = #tpu.pipeline_mode<synchronous>, transform_indices = @transform_6, window_bounds = array<i64: 4, 8, 16>}, {pipeline_mode = #tpu.pipeline_mode<synchronous>, transform_indices = @transform_7, window_bounds = array<i64: 256, 1024>}, {pipeline_mode = #tpu.pipeline_mode<synchronous>, transform_indices = @transform_8, window_bounds = array<i64: 4, 4, 8>}, {pipeline_mode = #tpu.pipeline_mode<synchronous>, transform_indices = @transform_9, window_bounds = array<i64: 256, 256>}, {pipeline_mode = #tpu.pipeline_mode<synchronous>, transform_indices = @transform_10, window_bounds = array<i64: 4, 1, 4>}, {pipeline_mode = #tpu.pipeline_mode<synchronous>, transform_indices = @transform_11, window_bounds = array<i64: 64, 16>}, {transform_indices = @transform_12, window_bounds = array<i64: 1, 1, 16>}]} {
    %c0 = arith.constant 0 : index
    %c0_0 = arith.constant 0 : index
    %c0_1 = arith.constant 0 : index
    %0 = vector.load %arg1[%c0, %c0_0, %c0_1] : memref<1x64x192xf32, #tpu.memory_space<vmem>>, vector<1x64x192xf32>
    %1 = vector.shape_cast %0 : vector<1x64x192xf32> to vector<64x192xf32>
    %c0_2 = arith.constant 0 : index
    %c0_3 = arith.constant 0 : index
    %2 = vector.load %arg2[%c0_2, %c0_3] : memref<192x1024xf32, #tpu.memory_space<vmem>>, vector<192x1024xf32>
    %cst = arith.constant dense<0.000000e+00> : vector<64x1024xf32>
    %3 = tpu.matmul %1, %2, %cst {dimension_numbers = #tpu.dot_dimension_numbers<[1], [0], [0], [1], [0, 0, 1, 1], [], []>} : vector<64x192xf32>, vector<192x1024xf32>, vector<64x1024xf32> -> vector<64x1024xf32>
    %c0_4 = arith.constant 0 : index
    %c0_5 = arith.constant 0 : index
    %c0_6 = arith.constant 0 : index
    %4 = vector.load %arg3[%c0_4, %c0_5, %c0_6] : memref<4x32x64xf32, #tpu.memory_space<vmem>>, vector<1x32x64xf32>
    %5 = vector.shape_cast %4 : vector<1x32x64xf32> to vector<32x64xf32>
    %6 = vector.extract_strided_slice %3 {offsets = [0, 0], sizes = [64, 256], strides = [1, 1]} : vector<64x1024xf32> to vector<64x256xf32>
    %cst_7 = arith.constant dense<0.000000e+00> : vector<32x256xf32>
    %7 = tpu.matmul %5, %6, %cst_7 {dimension_numbers = #tpu.dot_dimension_numbers<[1], [0], [0], [1], [0, 0, 1, 1], [], []>} : vector<32x64xf32>, vector<64x256xf32>, vector<32x256xf32> -> vector<32x256xf32>
    %c1 = arith.constant 1 : index
    %c0_8 = arith.constant 0 : index
    %c0_9 = arith.constant 0 : index
    %8 = vector.load %arg3[%c1, %c0_8, %c0_9] : memref<4x32x64xf32, #tpu.memory_space<vmem>>, vector<1x32x64xf32>
    %9 = vector.shape_cast %8 : vector<1x32x64xf32> to vector<32x64xf32>
    %10 = vector.extract_strided_slice %3 {offsets = [0, 256], sizes = [64, 256], strides = [1, 1]} : vector<64x1024xf32> to vector<64x256xf32>
    %cst_10 = arith.constant dense<0.000000e+00> : vector<32x256xf32>
    %11 = tpu.matmul %9, %10, %cst_10 {dimension_numbers = #tpu.dot_dimension_numbers<[1], [0], [0], [1], [0, 0, 1, 1], [], []>} : vector<32x64xf32>, vector<64x256xf32>, vector<32x256xf32> -> vector<32x256xf32>
    %12 = arith.addf %7, %11 : vector<32x256xf32>
    %c2 = arith.constant 2 : index
    %c0_11 = arith.constant 0 : index
    %c0_12 = arith.constant 0 : index
    %13 = vector.load %arg3[%c2, %c0_11, %c0_12] : memref<4x32x64xf32, #tpu.memory_space<vmem>>, vector<1x32x64xf32>
    %14 = vector.shape_cast %13 : vector<1x32x64xf32> to vector<32x64xf32>
    %15 = vector.extract_strided_slice %3 {offsets = [0, 512], sizes = [64, 256], strides = [1, 1]} : vector<64x1024xf32> to vector<64x256xf32>
    %cst_13 = arith.constant dense<0.000000e+00> : vector<32x256xf32>
    %16 = tpu.matmul %14, %15, %cst_13 {dimension_numbers = #tpu.dot_dimension_numbers<[1], [0], [0], [1], [0, 0, 1, 1], [], []>} : vector<32x64xf32>, vector<64x256xf32>, vector<32x256xf32> -> vector<32x256xf32>
    %17 = arith.addf %12, %16 : vector<32x256xf32>
    %c3 = arith.constant 3 : index
    %c0_14 = arith.constant 0 : index
    %c0_15 = arith.constant 0 : index
    %18 = vector.load %arg3[%c3, %c0_14, %c0_15] : memref<4x32x64xf32, #tpu.memory_space<vmem>>, vector<1x32x64xf32>
    %19 = vector.shape_cast %18 : vector<1x32x64xf32> to vector<32x64xf32>
    %20 = vector.extract_strided_slice %3 {offsets = [0, 768], sizes = [64, 256], strides = [1, 1]} : vector<64x1024xf32> to vector<64x256xf32>
    %cst_16 = arith.constant dense<0.000000e+00> : vector<32x256xf32>
    %21 = tpu.matmul %19, %20, %cst_16 {dimension_numbers = #tpu.dot_dimension_numbers<[1], [0], [0], [1], [0, 0, 1, 1], [], []>} : vector<32x64xf32>, vector<64x256xf32>, vector<32x256xf32> -> vector<32x256xf32>
    %22 = arith.addf %17, %21 : vector<32x256xf32>
    %cst_17 = arith.constant 0.000000e+00 : f32
    %23 = vector.broadcast %cst_17 : f32 to vector<32x256xf32>
    %24 = arith.maximumf %22, %23 : vector<32x256xf32>
    %c0_18 = arith.constant 0 : index
    %c0_19 = arith.constant 0 : index
    %25 = vector.load %arg4[%c0_18, %c0_19] : memref<256x1024xf32, #tpu.memory_space<vmem>>, vector<256x1024xf32>
    %cst_20 = arith.constant dense<0.000000e+00> : vector<32x1024xf32>
    %26 = tpu.matmul %24, %25, %cst_20 {dimension_numbers = #tpu.dot_dimension_numbers<[1], [0], [0], [1], [0, 0, 1, 1], [], []>} : vector<32x256xf32>, vector<256x1024xf32>, vector<32x1024xf32> -> vector<32x1024xf32>
    %c0_21 = arith.constant 0 : index
    %c0_22 = arith.constant 0 : index
    %c0_23 = arith.constant 0 : index
    %27 = vector.load %arg5[%c0_21, %c0_22, %c0_23] : memref<4x16x32xf32, #tpu.memory_space<vmem>>, vector<1x16x32xf32>
    %28 = vector.shape_cast %27 : vector<1x16x32xf32> to vector<16x32xf32>
    %29 = vector.extract_strided_slice %26 {offsets = [0, 0], sizes = [32, 256], strides = [1, 1]} : vector<32x1024xf32> to vector<32x256xf32>
    %cst_24 = arith.constant dense<0.000000e+00> : vector<16x256xf32>
    %30 = tpu.matmul %28, %29, %cst_24 {dimension_numbers = #tpu.dot_dimension_numbers<[1], [0], [0], [1], [0, 0, 1, 1], [], []>} : vector<16x32xf32>, vector<32x256xf32>, vector<16x256xf32> -> vector<16x256xf32>
    %c1_25 = arith.constant 1 : index
    %c0_26 = arith.constant 0 : index
    %c0_27 = arith.constant 0 : index
    %31 = vector.load %arg5[%c1_25, %c0_26, %c0_27] : memref<4x16x32xf32, #tpu.memory_space<vmem>>, vector<1x16x32xf32>
    %32 = vector.shape_cast %31 : vector<1x16x32xf32> to vector<16x32xf32>
    %33 = vector.extract_strided_slice %26 {offsets = [0, 256], sizes = [32, 256], strides = [1, 1]} : vector<32x1024xf32> to vector<32x256xf32>
    %cst_28 = arith.constant dense<0.000000e+00> : vector<16x256xf32>
    %34 = tpu.matmul %32, %33, %cst_28 {dimension_numbers = #tpu.dot_dimension_numbers<[1], [0], [0], [1], [0, 0, 1, 1], [], []>} : vector<16x32xf32>, vector<32x256xf32>, vector<16x256xf32> -> vector<16x256xf32>
    %35 = arith.addf %30, %34 : vector<16x256xf32>
    %c2_29 = arith.constant 2 : index
    %c0_30 = arith.constant 0 : index
    %c0_31 = arith.constant 0 : index
    %36 = vector.load %arg5[%c2_29, %c0_30, %c0_31] : memref<4x16x32xf32, #tpu.memory_space<vmem>>, vector<1x16x32xf32>
    %37 = vector.shape_cast %36 : vector<1x16x32xf32> to vector<16x32xf32>
    %38 = vector.extract_strided_slice %26 {offsets = [0, 512], sizes = [32, 256], strides = [1, 1]} : vector<32x1024xf32> to vector<32x256xf32>
    %cst_32 = arith.constant dense<0.000000e+00> : vector<16x256xf32>
    %39 = tpu.matmul %37, %38, %cst_32 {dimension_numbers = #tpu.dot_dimension_numbers<[1], [0], [0], [1], [0, 0, 1, 1], [], []>} : vector<16x32xf32>, vector<32x256xf32>, vector<16x256xf32> -> vector<16x256xf32>
    %40 = arith.addf %35, %39 : vector<16x256xf32>
    %c3_33 = arith.constant 3 : index
    %c0_34 = arith.constant 0 : index
    %c0_35 = arith.constant 0 : index
    %41 = vector.load %arg5[%c3_33, %c0_34, %c0_35] : memref<4x16x32xf32, #tpu.memory_space<vmem>>, vector<1x16x32xf32>
    %42 = vector.shape_cast %41 : vector<1x16x32xf32> to vector<16x32xf32>
    %43 = vector.extract_strided_slice %26 {offsets = [0, 768], sizes = [32, 256], strides = [1, 1]} : vector<32x1024xf32> to vector<32x256xf32>
    %cst_36 = arith.constant dense<0.000000e+00> : vector<16x256xf32>
    %44 = tpu.matmul %42, %43, %cst_36 {dimension_numbers = #tpu.dot_dimension_numbers<[1], [0], [0], [1], [0, 0, 1, 1], [], []>} : vector<16x32xf32>, vector<32x256xf32>, vector<16x256xf32> -> vector<16x256xf32>
    %45 = arith.addf %40, %44 : vector<16x256xf32>
    %cst_37 = arith.constant 0.000000e+00 : f32
    %46 = vector.broadcast %cst_37 : f32 to vector<16x256xf32>
    %47 = arith.maximumf %45, %46 : vector<16x256xf32>
    %c0_38 = arith.constant 0 : index
    %c0_39 = arith.constant 0 : index
    %48 = vector.load %arg6[%c0_38, %c0_39] : memref<256x1024xf32, #tpu.memory_space<vmem>>, vector<256x1024xf32>
    %cst_40 = arith.constant dense<0.000000e+00> : vector<16x1024xf32>
    %49 = tpu.matmul %47, %48, %cst_40 {dimension_numbers = #tpu.dot_dimension_numbers<[1], [0], [0], [1], [0, 0, 1, 1], [], []>} : vector<16x256xf32>, vector<256x1024xf32>, vector<16x1024xf32> -> vector<16x1024xf32>
    %c0_41 = arith.constant 0 : index
    %c0_42 = arith.constant 0 : index
    %c0_43 = arith.constant 0 : index
    %50 = vector.load %arg7[%c0_41, %c0_42, %c0_43] : memref<4x8x16xf32, #tpu.memory_space<vmem>>, vector<1x8x16xf32>
    %51 = vector.shape_cast %50 : vector<1x8x16xf32> to vector<8x16xf32>
    %52 = vector.extract_strided_slice %49 {offsets = [0, 0], sizes = [16, 256], strides = [1, 1]} : vector<16x1024xf32> to vector<16x256xf32>
    %cst_44 = arith.constant dense<0.000000e+00> : vector<8x256xf32>
    %53 = tpu.matmul %51, %52, %cst_44 {dimension_numbers = #tpu.dot_dimension_numbers<[1], [0], [0], [1], [0, 0, 1, 1], [], []>} : vector<8x16xf32>, vector<16x256xf32>, vector<8x256xf32> -> vector<8x256xf32>
    %c1_45 = arith.constant 1 : index
    %c0_46 = arith.constant 0 : index
    %c0_47 = arith.constant 0 : index
    %54 = vector.load %arg7[%c1_45, %c0_46, %c0_47] : memref<4x8x16xf32, #tpu.memory_space<vmem>>, vector<1x8x16xf32>
    %55 = vector.shape_cast %54 : vector<1x8x16xf32> to vector<8x16xf32>
    %56 = vector.extract_strided_slice %49 {offsets = [0, 256], sizes = [16, 256], strides = [1, 1]} : vector<16x1024xf32> to vector<16x256xf32>
    %cst_48 = arith.constant dense<0.000000e+00> : vector<8x256xf32>
    %57 = tpu.matmul %55, %56, %cst_48 {dimension_numbers = #tpu.dot_dimension_numbers<[1], [0], [0], [1], [0, 0, 1, 1], [], []>} : vector<8x16xf32>, vector<16x256xf32>, vector<8x256xf32> -> vector<8x256xf32>
    %58 = arith.addf %53, %57 : vector<8x256xf32>
    %c2_49 = arith.constant 2 : index
    %c0_50 = arith.constant 0 : index
    %c0_51 = arith.constant 0 : index
    %59 = vector.load %arg7[%c2_49, %c0_50, %c0_51] : memref<4x8x16xf32, #tpu.memory_space<vmem>>, vector<1x8x16xf32>
    %60 = vector.shape_cast %59 : vector<1x8x16xf32> to vector<8x16xf32>
    %61 = vector.extract_strided_slice %49 {offsets = [0, 512], sizes = [16, 256], strides = [1, 1]} : vector<16x1024xf32> to vector<16x256xf32>
    %cst_52 = arith.constant dense<0.000000e+00> : vector<8x256xf32>
    %62 = tpu.matmul %60, %61, %cst_52 {dimension_numbers = #tpu.dot_dimension_numbers<[1], [0], [0], [1], [0, 0, 1, 1], [], []>} : vector<8x16xf32>, vector<16x256xf32>, vector<8x256xf32> -> vector<8x256xf32>
    %63 = arith.addf %58, %62 : vector<8x256xf32>
    %c3_53 = arith.constant 3 : index
    %c0_54 = arith.constant 0 : index
    %c0_55 = arith.constant 0 : index
    %64 = vector.load %arg7[%c3_53, %c0_54, %c0_55] : memref<4x8x16xf32, #tpu.memory_space<vmem>>, vector<1x8x16xf32>
    %65 = vector.shape_cast %64 : vector<1x8x16xf32> to vector<8x16xf32>
    %66 = vector.extract_strided_slice %49 {offsets = [0, 768], sizes = [16, 256], strides = [1, 1]} : vector<16x1024xf32> to vector<16x256xf32>
    %cst_56 = arith.constant dense<0.000000e+00> : vector<8x256xf32>
    %67 = tpu.matmul %65, %66, %cst_56 {dimension_numbers = #tpu.dot_dimension_numbers<[1], [0], [0], [1], [0, 0, 1, 1], [], []>} : vector<8x16xf32>, vector<16x256xf32>, vector<8x256xf32> -> vector<8x256xf32>
    %68 = arith.addf %63, %67 : vector<8x256xf32>
    %cst_57 = arith.constant 0.000000e+00 : f32
    %69 = vector.broadcast %cst_57 : f32 to vector<8x256xf32>
    %70 = arith.maximumf %68, %69 : vector<8x256xf32>
    %c0_58 = arith.constant 0 : index
    %c0_59 = arith.constant 0 : index
    %71 = vector.load %arg8[%c0_58, %c0_59] : memref<256x1024xf32, #tpu.memory_space<vmem>>, vector<256x1024xf32>
    %cst_60 = arith.constant dense<0.000000e+00> : vector<8x1024xf32>
    %72 = tpu.matmul %70, %71, %cst_60 {dimension_numbers = #tpu.dot_dimension_numbers<[1], [0], [0], [1], [0, 0, 1, 1], [], []>} : vector<8x256xf32>, vector<256x1024xf32>, vector<8x1024xf32> -> vector<8x1024xf32>
    %c0_61 = arith.constant 0 : index
    %c0_62 = arith.constant 0 : index
    %c0_63 = arith.constant 0 : index
    %73 = vector.load %arg9[%c0_61, %c0_62, %c0_63] : memref<4x4x8xf32, #tpu.memory_space<vmem>>, vector<1x4x8xf32>
    %74 = vector.shape_cast %73 : vector<1x4x8xf32> to vector<4x8xf32>
    %75 = vector.extract_strided_slice %72 {offsets = [0, 0], sizes = [8, 256], strides = [1, 1]} : vector<8x1024xf32> to vector<8x256xf32>
    %cst_64 = arith.constant dense<0.000000e+00> : vector<4x256xf32>
    %76 = tpu.matmul %74, %75, %cst_64 {dimension_numbers = #tpu.dot_dimension_numbers<[1], [0], [0], [1], [0, 0, 1, 1], [], []>} : vector<4x8xf32>, vector<8x256xf32>, vector<4x256xf32> -> vector<4x256xf32>
    %c1_65 = arith.constant 1 : index
    %c0_66 = arith.constant 0 : index
    %c0_67 = arith.constant 0 : index
    %77 = vector.load %arg9[%c1_65, %c0_66, %c0_67] : memref<4x4x8xf32, #tpu.memory_space<vmem>>, vector<1x4x8xf32>
    %78 = vector.shape_cast %77 : vector<1x4x8xf32> to vector<4x8xf32>
    %79 = vector.extract_strided_slice %72 {offsets = [0, 256], sizes = [8, 256], strides = [1, 1]} : vector<8x1024xf32> to vector<8x256xf32>
    %cst_68 = arith.constant dense<0.000000e+00> : vector<4x256xf32>
    %80 = tpu.matmul %78, %79, %cst_68 {dimension_numbers = #tpu.dot_dimension_numbers<[1], [0], [0], [1], [0, 0, 1, 1], [], []>} : vector<4x8xf32>, vector<8x256xf32>, vector<4x256xf32> -> vector<4x256xf32>
    %81 = arith.addf %76, %80 : vector<4x256xf32>
    %c2_69 = arith.constant 2 : index
    %c0_70 = arith.constant 0 : index
    %c0_71 = arith.constant 0 : index
    %82 = vector.load %arg9[%c2_69, %c0_70, %c0_71] : memref<4x4x8xf32, #tpu.memory_space<vmem>>, vector<1x4x8xf32>
    %83 = vector.shape_cast %82 : vector<1x4x8xf32> to vector<4x8xf32>
    %84 = vector.extract_strided_slice %72 {offsets = [0, 512], sizes = [8, 256], strides = [1, 1]} : vector<8x1024xf32> to vector<8x256xf32>
    %cst_72 = arith.constant dense<0.000000e+00> : vector<4x256xf32>
    %85 = tpu.matmul %83, %84, %cst_72 {dimension_numbers = #tpu.dot_dimension_numbers<[1], [0], [0], [1], [0, 0, 1, 1], [], []>} : vector<4x8xf32>, vector<8x256xf32>, vector<4x256xf32> -> vector<4x256xf32>
    %86 = arith.addf %81, %85 : vector<4x256xf32>
    %c3_73 = arith.constant 3 : index
    %c0_74 = arith.constant 0 : index
    %c0_75 = arith.constant 0 : index
    %87 = vector.load %arg9[%c3_73, %c0_74, %c0_75] : memref<4x4x8xf32, #tpu.memory_space<vmem>>, vector<1x4x8xf32>
    %88 = vector.shape_cast %87 : vector<1x4x8xf32> to vector<4x8xf32>
    %89 = vector.extract_strided_slice %72 {offsets = [0, 768], sizes = [8, 256], strides = [1, 1]} : vector<8x1024xf32> to vector<8x256xf32>
    %cst_76 = arith.constant dense<0.000000e+00> : vector<4x256xf32>
    %90 = tpu.matmul %88, %89, %cst_76 {dimension_numbers = #tpu.dot_dimension_numbers<[1], [0], [0], [1], [0, 0, 1, 1], [], []>} : vector<4x8xf32>, vector<8x256xf32>, vector<4x256xf32> -> vector<4x256xf32>
    %91 = arith.addf %86, %90 : vector<4x256xf32>
    %cst_77 = arith.constant 0.000000e+00 : f32
    %92 = vector.broadcast %cst_77 : f32 to vector<4x256xf32>
    %93 = arith.maximumf %91, %92 : vector<4x256xf32>
    %c0_78 = arith.constant 0 : index
    %c0_79 = arith.constant 0 : index
    %94 = vector.load %arg10[%c0_78, %c0_79] : memref<256x256xf32, #tpu.memory_space<vmem>>, vector<256x256xf32>
    %cst_80 = arith.constant dense<0.000000e+00> : vector<4x256xf32>
    %95 = tpu.matmul %93, %94, %cst_80 {dimension_numbers = #tpu.dot_dimension_numbers<[1], [0], [0], [1], [0, 0, 1, 1], [], []>} : vector<4x256xf32>, vector<256x256xf32>, vector<4x256xf32> -> vector<4x256xf32>
    %c0_81 = arith.constant 0 : index
    %c0_82 = arith.constant 0 : index
    %c0_83 = arith.constant 0 : index
    %96 = vector.load %arg11[%c0_81, %c0_82, %c0_83] : memref<4x1x4xf32, #tpu.memory_space<vmem>>, vector<1x1x4xf32>
    %97 = vector.shape_cast %96 : vector<1x1x4xf32> to vector<1x4xf32>
    %98 = vector.extract_strided_slice %95 {offsets = [0, 0], sizes = [4, 64], strides = [1, 1]} : vector<4x256xf32> to vector<4x64xf32>
    %cst_84 = arith.constant dense<0.000000e+00> : vector<1x64xf32>
    %99 = tpu.matmul %97, %98, %cst_84 {dimension_numbers = #tpu.dot_dimension_numbers<[1], [0], [0], [1], [0, 0, 1, 1], [], []>} : vector<1x4xf32>, vector<4x64xf32>, vector<1x64xf32> -> vector<1x64xf32>
    %c1_85 = arith.constant 1 : index
    %c0_86 = arith.constant 0 : index
    %c0_87 = arith.constant 0 : index
    %100 = vector.load %arg11[%c1_85, %c0_86, %c0_87] : memref<4x1x4xf32, #tpu.memory_space<vmem>>, vector<1x1x4xf32>
    %101 = vector.shape_cast %100 : vector<1x1x4xf32> to vector<1x4xf32>
    %102 = vector.extract_strided_slice %95 {offsets = [0, 64], sizes = [4, 64], strides = [1, 1]} : vector<4x256xf32> to vector<4x64xf32>
    %cst_88 = arith.constant dense<0.000000e+00> : vector<1x64xf32>
    %103 = tpu.matmul %101, %102, %cst_88 {dimension_numbers = #tpu.dot_dimension_numbers<[1], [0], [0], [1], [0, 0, 1, 1], [], []>} : vector<1x4xf32>, vector<4x64xf32>, vector<1x64xf32> -> vector<1x64xf32>
    %104 = arith.addf %99, %103 : vector<1x64xf32>
    %c2_89 = arith.constant 2 : index
    %c0_90 = arith.constant 0 : index
    %c0_91 = arith.constant 0 : index
    %105 = vector.load %arg11[%c2_89, %c0_90, %c0_91] : memref<4x1x4xf32, #tpu.memory_space<vmem>>, vector<1x1x4xf32>
    %106 = vector.shape_cast %105 : vector<1x1x4xf32> to vector<1x4xf32>
    %107 = vector.extract_strided_slice %95 {offsets = [0, 128], sizes = [4, 64], strides = [1, 1]} : vector<4x256xf32> to vector<4x64xf32>
    %cst_92 = arith.constant dense<0.000000e+00> : vector<1x64xf32>
    %108 = tpu.matmul %106, %107, %cst_92 {dimension_numbers = #tpu.dot_dimension_numbers<[1], [0], [0], [1], [0, 0, 1, 1], [], []>} : vector<1x4xf32>, vector<4x64xf32>, vector<1x64xf32> -> vector<1x64xf32>
    %109 = arith.addf %104, %108 : vector<1x64xf32>
    %c3_93 = arith.constant 3 : index
    %c0_94 = arith.constant 0 : index
    %c0_95 = arith.constant 0 : index
    %110 = vector.load %arg11[%c3_93, %c0_94, %c0_95] : memref<4x1x4xf32, #tpu.memory_space<vmem>>, vector<1x1x4xf32>
    %111 = vector.shape_cast %110 : vector<1x1x4xf32> to vector<1x4xf32>
    %112 = vector.extract_strided_slice %95 {offsets = [0, 192], sizes = [4, 64], strides = [1, 1]} : vector<4x256xf32> to vector<4x64xf32>
    %cst_96 = arith.constant dense<0.000000e+00> : vector<1x64xf32>
    %113 = tpu.matmul %111, %112, %cst_96 {dimension_numbers = #tpu.dot_dimension_numbers<[1], [0], [0], [1], [0, 0, 1, 1], [], []>} : vector<1x4xf32>, vector<4x64xf32>, vector<1x64xf32> -> vector<1x64xf32>
    %114 = arith.addf %109, %113 : vector<1x64xf32>
    %cst_97 = arith.constant 0.000000e+00 : f32
    %115 = vector.broadcast %cst_97 : f32 to vector<1x64xf32>
    %116 = arith.maximumf %114, %115 : vector<1x64xf32>
    %c0_98 = arith.constant 0 : index
    %c0_99 = arith.constant 0 : index
    %117 = vector.load %arg12[%c0_98, %c0_99] : memref<64x16xf32, #tpu.memory_space<vmem>>, vector<64x16xf32>
    %cst_100 = arith.constant dense<0.000000e+00> : vector<1x16xf32>
    %118 = tpu.matmul %116, %117, %cst_100 {dimension_numbers = #tpu.dot_dimension_numbers<[1], [0], [0], [1], [0, 0, 1, 1], [], []>} : vector<1x64xf32>, vector<64x16xf32>, vector<1x16xf32> -> vector<1x16xf32>
    %119 = math.tanh %118 : vector<1x16xf32>
    %c0_101 = arith.constant 0 : index
    %c0_102 = arith.constant 0 : index
    %c0_103 = arith.constant 0 : index
    %120 = vector.load %arg13[%c0_101, %c0_102, %c0_103] : memref<1x1x16xf32, #tpu.memory_space<vmem>>, vector<1x1x16xf32>
    %121 = vector.shape_cast %120 : vector<1x1x16xf32> to vector<1x16xf32>
    %122 = vector.shape_cast %119 : vector<1x16xf32> to vector<1x1x16xf32>
    tpu.vector_store %arg13[%c0_101, %c0_102, %c0_103], %122 {strides = array<i32>} : memref<1x1x16xf32, #tpu.memory_space<vmem>>, vector<1x1x16xf32>,
    return
  }
  func.func @transform_0(%arg0: i32) -> (i32, i32, i32) {
    %c0_i32 = arith.constant 0 : i32
    %c0_i32_0 = arith.constant 0 : i32
    %c0_i32_1 = arith.constant 0 : i32
    return %arg0, %c0_i32, %c0_i32_0 : i32, i32, i32
  }
  func.func @transform_1(%arg0: i32) -> (i32, i32) {
    %c0_i32 = arith.constant 0 : i32
    %c0_i32_0 = arith.constant 0 : i32
    %c0_i32_1 = arith.constant 0 : i32
    return %c0_i32, %c0_i32_0 : i32, i32
  }
  func.func @transform_2(%arg0: i32) -> (i32, i32, i32) {
    %c0_i32 = arith.constant 0 : i32
    %c0_i32_0 = arith.constant 0 : i32
    %c0_i32_1 = arith.constant 0 : i32
    %c0_i32_2 = arith.constant 0 : i32
    return %c0_i32, %c0_i32_0, %c0_i32_1 : i32, i32, i32
  }
  func.func @transform_3(%arg0: i32) -> (i32, i32) {
    %c0_i32 = arith.constant 0 : i32
    %c0_i32_0 = arith.constant 0 : i32
    %c0_i32_1 = arith.constant 0 : i32
    return %c0_i32, %c0_i32_0 : i32, i32
  }
  func.func @transform_4(%arg0: i32) -> (i32, i32, i32) {
    %c0_i32 = arith.constant 0 : i32
    %c0_i32_0 = arith.constant 0 : i32
    %c0_i32_1 = arith.constant 0 : i32
    %c0_i32_2 = arith.constant 0 : i32
    return %c0_i32, %c0_i32_0, %c0_i32_1 : i32, i32, i32
  }
  func.func @transform_5(%arg0: i32) -> (i32, i32) {
    %c0_i32 = arith.constant 0 : i32
    %c0_i32_0 = arith.constant 0 : i32
    %c0_i32_1 = arith.constant 0 : i32
    return %c0_i32, %c0_i32_0 : i32, i32
  }
  func.func @transform_6(%arg0: i32) -> (i32, i32, i32) {
    %c0_i32 = arith.constant 0 : i32
    %c0_i32_0 = arith.constant 0 : i32
    %c0_i32_1 = arith.constant 0 : i32
    %c0_i32_2 = arith.constant 0 : i32
    return %c0_i32, %c0_i32_0, %c0_i32_1 : i32, i32, i32
  }
  func.func @transform_7(%arg0: i32) -> (i32, i32) {
    %c0_i32 = arith.constant 0 : i32
    %c0_i32_0 = arith.constant 0 : i32
    %c0_i32_1 = arith.constant 0 : i32
    return %c0_i32, %c0_i32_0 : i32, i32
  }
  func.func @transform_8(%arg0: i32) -> (i32, i32, i32) {
    %c0_i32 = arith.constant 0 : i32
    %c0_i32_0 = arith.constant 0 : i32
    %c0_i32_1 = arith.constant 0 : i32
    %c0_i32_2 = arith.constant 0 : i32
    return %c0_i32, %c0_i32_0, %c0_i32_1 : i32, i32, i32
  }
  func.func @transform_9(%arg0: i32) -> (i32, i32) {
    %c0_i32 = arith.constant 0 : i32
    %c0_i32_0 = arith.constant 0 : i32
    %c0_i32_1 = arith.constant 0 : i32
    return %c0_i32, %c0_i32_0 : i32, i32
  }
  func.func @transform_10(%arg0: i32) -> (i32, i32, i32) {
    %c0_i32 = arith.constant 0 : i32
    %c0_i32_0 = arith.constant 0 : i32
    %c0_i32_1 = arith.constant 0 : i32
    %c0_i32_2 = arith.constant 0 : i32
    return %c0_i32, %c0_i32_0, %c0_i32_1 : i32, i32, i32
  }
  func.func @transform_11(%arg0: i32) -> (i32, i32) {
    %c0_i32 = arith.constant 0 : i32
    %c0_i32_0 = arith.constant 0 : i32
    %c0_i32_1 = arith.constant 0 : i32
    return %c0_i32, %c0_i32_0 : i32, i32
  }
  func.func @transform_12(%arg0: i32) -> (i32, i32, i32) {
    %c0_i32 = arith.constant 0 : i32
    %c0_i32_0 = arith.constant 0 : i32
    %c0_i32_1 = arith.constant 0 : i32
    return %arg0, %c0_i32, %c0_i32_0 : i32, i32, i32
  }
}

</mosaic_0001>

<llo_original>
// kernel: encoder_forward.1
$region0: #{encoder_forward.1}
  #allocation0 [shape = 'u32[]', space=smem, size = 0x4, offset = 0x4, fixed_abs, tag = 'smem constant byte address 0x4 - core index']
  #allocation1 [shape = 'u32[144,128]{1,0:T(1,128)}', space=vmem, size = 0x12000, scoped, tag = 'internal scratch']
  %s0 = inlined_call_operand.vmem [shape: f32[2,64,192], index: 0, kind: input, shape index: {}]
  %s1 = inlined_call_operand.hbm [shape: f32[192,1024], index: 1, kind: input, shape index: {}]
  %s2 = inlined_call_operand.vmem [shape: f32[4,32,64], index: 2, kind: input, shape index: {}]
  %s3 = inlined_call_operand.hbm [shape: f32[256,1024], index: 3, kind: input, shape index: {}]
  %s4 = inlined_call_operand.vmem [shape: f32[4,16,32], index: 4, kind: input, shape index: {}]
  %s5 = inlined_call_operand.hbm [shape: f32[256,1024], index: 5, kind: input, shape index: {}]
  %s6 = inlined_call_operand.vmem [shape: f32[4,8,16], index: 6, kind: input, shape index: {}]
  %s7 = inlined_call_operand.hbm [shape: f32[256,1024], index: 7, kind: input, shape index: {}]
  %s8 = inlined_call_operand.vmem [shape: f32[4,4,8], index: 8, kind: input, shape index: {}]
  %s9 = inlined_call_operand.vmem [shape: f32[256,256], index: 9, kind: input, shape index: {}]
  %s10 = inlined_call_operand.vmem [shape: f32[4,1,4], index: 10, kind: input, shape index: {}]
  %s11 = inlined_call_operand.vmem [shape: f32[64,16], index: 11, kind: input, shape index: {}]
  %s12 = inlined_call_operand.hbm [shape: f32[2,1,16], index: 12, kind: output, shape index: {}]
  %s13 = sld [smem:[#allocation0]]
  $region97: #{encoder_forward.1} parent=0
    _
  %s15 = ssub.s32 1, %s13
  %s16 = scalar_select 0, %s15, %s13
  $region1: #{encoder_forward.1} parent=0
    #allocation2 [shape = 'u8[786432]{0}', space=vmem, size = 0xc0000, scoped, tag = 'input window, operand 1, single buffered']
    #allocation3 [shape = 's32[2]{0}', space=sflag, size = 0x8, scoped, tag = 'scoped memory for encoder_forward.1']
    #allocation4 [shape = 's32[2]{0}', space=sflag, size = 0x8, scoped, tag = 'scoped memory for encoder_forward.1']
    #allocation5 [shape = 'u8[1048576]{0}', space=vmem, size = 0x100000, scoped, tag = 'input window, operand 3, single buffered']
    #allocation6 [shape = 's32[1]{0}', space=sflag, size = 0x4, scoped, tag = 'scoped memory for encoder_forward.1']
    #allocation7 [shape = 'u8[1048576]{0}', space=vmem, size = 0x100000, scoped, tag = 'input window, operand 5, single buffered']
    #allocation8 [shape = 'u8[1048576]{0}', space=vmem, size = 0x100000, scoped, tag = 'input window, operand 7, single buffered']
    #allocation9 [shape = 's32[1]{0}', space=sflag, size = 0x4, scoped, tag = 'scoped memory for encoder_forward.1']
    #allocation10 [shape = 'u8[1024]{0}', space=vmem, size = 0x400, scoped, tag = 'output window, operand 0']
    %17 = vsyncpa [#allocation3], 0
    %18 = vsyncpa [#allocation6], 0
    %19 = vsyncpa [#allocation9], 0
    %20 = vsyncpa [#allocation4], 0
    %s21 = scalar_lea.sflag [#allocation4], 1
    %22 = vsyncpa %s21, 0
    loop: start=0, step=1, limit=4
    $region2: #{encoder_forward.1} parent=1 // loop_pre_header
      _
    $region3: #{encoder_forward.1} parent=1 // loop_header
      %s24 = sphi 0, %s28
      %p25 = scmp.ge.s32.totalorder %s24, 4
      %s34 = sphi 0, %s36
      %s37 = sphi 0, %s34
      %s38 = sphi 0, %s37
      %s54 = sphi 0, %s38
      %s58 = sphi 0, %s58
      %s60 = sphi 0, %s58
      %s61 = sphi 0, %s60
      %s75 = sphi 0, %s61
      %s79 = sphi 0, %s79
      %s81 = sphi 0, %s79
      %s82 = sphi 0, %s81
      %s96 = sphi 0, %s82
      %s100 = sphi 0, %s100
      %s102 = sphi 0, %s100
      %s103 = sphi 0, %s102
      %s117 = sphi 0, %s103
      %s121 = sphi 0, %s121
      %s123 = sphi 0, %s121
      %s124 = sphi 0, %s123
      %s138 = sphi 0, %s124
      %s142 = sphi 0, %s142
      %s144 = sphi 0, %s142
      %s145 = sphi 0, %s144
      %s159 = sphi 0, %s145
      %s163 = sphi 0, %s163
      %s165 = sphi 0, %s163
      %s166 = sphi 0, %s165
      %s180 = sphi 0, %s166
      %s184 = sphi 0, %s184
      %s186 = sphi 0, %s184
      %s187 = sphi 0, %s186
      %s201 = sphi 0, %s187
      %s205 = sphi 0, %s205
      %s207 = sphi 0, %s205
      %s208 = sphi 0, %s207
      %s222 = sphi 0, %s208
      %s226 = sphi 0, %s226
      %s228 = sphi 0, %s226
      %s229 = sphi 0, %s228
      %s243 = sphi 0, %s229
      %s247 = sphi 0, %s247
      %s249 = sphi 0, %s247
      %s250 = sphi 0, %s249
      %s264 = sphi 0, %s250
      %s268 = sphi 0, %s268
      %s270 = sphi 0, %s268
      %s271 = sphi 0, %s270
      %s285 = sphi 0, %s271
      %s291 = sphi 0, %s293
      %s294 = sphi 0, %s291
      %s295 = sphi 0, %s294
      %s311 = sphi 0, %s295
    $region4: #{encoder_forward.1} parent=1 // loop_header_branch
      %27 = sbr.rel (%p25) target = $region8
    $region5: #{encoder_forward.1} parent=1 // loop_body
      %s29 = ssub.s32 %s24, 1
      %s30 = ssub.s32 %s24, 2
      %s31 = sadd.s32 %s24, 1
      %s32 = ssub.s32 %s24, %s31
      %p33 = scmp.eq.s32.totalorder %s32, 0
      %s35 = sadd.s32 %s34, 1
      %s36 = scalar_select %p33, %s34, %s35
      %p39 = pneg %p33
      %p40 = scmp.eq.s32.totalorder %s24, 1
      %p41 = por %p39, %p40
      %p42 = scmp.ne.s32.totalorder %s34, %s37
      %p43 = scmp.eq.s32.totalorder %s24, 0
      %p44 = por %p42, %p43
      %p45 = scmp.ne.s32.totalorder %s34, %s37
      %p46 = scmp.eq.s32.totalorder %s29, 1
      %p47 = por %p45, %p46
      %p48 = scmp.ne.s32.totalorder %s37, %s38
      %p49 = scmp.eq.s32.totalorder %s29, 0
      %p50 = por %p48, %p49
      %p51 = scmp.ne.s32.totalorder %s37, %s38
      %p52 = scmp.eq.s32.totalorder %s30, 1
      %p53 = por %p51, %p52
      %p55 = scmp.ne.s32.totalorder %s38, %s54
      %p56 = scmp.eq.s32.totalorder %s30, 0
      %p57 = por %p55, %p56
      %s59 = sadd.s32 %s58, 1
      %p62 = scmp.eq.s32.totalorder %s24, 1
      %p63 = scmp.ne.s32.totalorder %s58, %s60
      %p64 = scmp.eq.s32.totalorder %s24, 0
      %p65 = por %p63, %p64
      %p66 = scmp.ne.s32.totalorder %s58, %s60
      %p67 = scmp.eq.s32.totalorder %s29, 1
      %p68 = por %p66, %p67
      %p69 = scmp.ne.s32.totalorder %s60, %s61
      %p70 = scmp.eq.s32.totalorder %s29, 0
      %p71 = por %p69, %p70
      %p72 = scmp.ne.s32.totalorder %s60, %s61
      %p73 = scmp.eq.s32.totalorder %s30, 1
      %p74 = por %p72, %p73
      %p76 = scmp.ne.s32.totalorder %s61, %s75
      %p77 = scmp.eq.s32.totalorder %s30, 0
      %p78 = por %p76, %p77
      %s80 = sadd.s32 %s79, 1
      %p83 = scmp.eq.s32.totalorder %s24, 1
      %p84 = scmp.ne.s32.totalorder %s79, %s81
      %p85 = scmp.eq.s32.totalorder %s24, 0
      %p86 = por %p84, %p85
      %p87 = scmp.ne.s32.totalorder %s79, %s81
      %p88 = scmp.eq.s32.totalorder %s29, 1
      %p89 = por %p87, %p88
      %p90 = scmp.ne.s32.totalorder %s81, %s82
      %p91 = scmp.eq.s32.totalorder %s29, 0
      %p92 = por %p90, %p91
      %p93 = scmp.ne.s32.totalorder %s81, %s82
      %p94 = scmp.eq.s32.totalorder %s30, 1
      %p95 = por %p93, %p94
      %p97 = scmp.ne.s32.totalorder %s82, %s96
      %p98 = scmp.eq.s32.totalorder %s30, 0
      %p99 = por %p97, %p98
      %s101 = sadd.s32 %s100, 1
      %p104 = scmp.eq.s32.totalorder %s24, 1
      %p105 = scmp.ne.s32.totalorder %s100, %s102
      %p106 = scmp.eq.s32.totalorder %s24, 0
      %p107 = por %p105, %p106
      %p108 = scmp.ne.s32.totalorder %s100, %s102
      %p109 = scmp.eq.s32.totalorder %s29, 1
      %p110 = por %p108, %p109
      %p111 = scmp.ne.s32.totalorder %s102, %s103
      %p112 = scmp.eq.s32.totalorder %s29, 0
      %p113 = por %p111, %p112
      %p114 = scmp.ne.s32.totalorder %s102, %s103
      %p115 = scmp.eq.s32.totalorder %s30, 1
      %p116 = por %p114, %p115
      %p118 = scmp.ne.s32.totalorder %s103, %s117
      %p119 = scmp.eq.s32.totalorder %s30, 0
      %p120 = por %p118, %p119
      %s122 = sadd.s32 %s121, 1
      %p125 = scmp.eq.s32.totalorder %s24, 1
      %p126 = scmp.ne.s32.totalorder %s121, %s123
      %p127 = scmp.eq.s32.totalorder %s24, 0
      %p128 = por %p126, %p127
      %p129 = scmp.ne.s32.totalorder %s121, %s123
      %p130 = scmp.eq.s32.totalorder %s29, 1
      %p131 = por %p129, %p130
      %p132 = scmp.ne.s32.totalorder %s123, %s124
      %p133 = scmp.eq.s32.totalorder %s29, 0
      %p134 = por %p132, %p133
      %p135 = scmp.ne.s32.totalorder %s123, %s124
      %p136 = scmp.eq.s32.totalorder %s30, 1
      %p137 = por %p135, %p136
      %p139 = scmp.ne.s32.totalorder %s124, %s138
      %p140 = scmp.eq.s32.totalorder %s30, 0
      %p141 = por %p139, %p140
      %s143 = sadd.s32 %s142, 1
      %p146 = scmp.eq.s32.totalorder %s24, 1
      %p147 = scmp.ne.s32.totalorder %s142, %s144
      %p148 = scmp.eq.s32.totalorder %s24, 0
      %p149 = por %p147, %p148
      %p150 = scmp.ne.s32.totalorder %s142, %s144
      %p151 = scmp.eq.s32.totalorder %s29, 1
      %p152 = por %p150, %p151
      %p153 = scmp.ne.s32.totalorder %s144, %s145
      %p154 = scmp.eq.s32.totalorder %s29, 0
      %p155 = por %p153, %p154
      %p156 = scmp.ne.s32.totalorder %s144, %s145
      %p157 = scmp.eq.s32.totalorder %s30, 1
      %p158 = por %p156, %p157
      %p160 = scmp.ne.s32.totalorder %s145, %s159
      %p161 = scmp.eq.s32.totalorder %s30, 0
      %p162 = por %p160, %p161
      %s164 = sadd.s32 %s163, 1
      %p167 = scmp.eq.s32.totalorder %s24, 1
      %p168 = scmp.ne.s32.totalorder %s163, %s165
      %p169 = scmp.eq.s32.totalorder %s24, 0
      %p170 = por %p168, %p169
      %p171 = scmp.ne.s32.totalorder %s163, %s165
      %p172 = scmp.eq.s32.totalorder %s29, 1
      %p173 = por %p171, %p172
      %p174 = scmp.ne.s32.totalorder %s165, %s166
      %p175 = scmp.eq.s32.totalorder %s29, 0
      %p176 = por %p174, %p175
      %p177 = scmp.ne.s32.totalorder %s165, %s166
      %p178 = scmp.eq.s32.totalorder %s30, 1
      %p179 = por %p177, %p178
      %p181 = scmp.ne.s32.totalorder %s166, %s180
      %p182 = scmp.eq.s32.totalorder %s30, 0
      %p183 = por %p181, %p182
      %s185 = sadd.s32 %s184, 1
      %p188 = scmp.eq.s32.totalorder %s24, 1
      %p189 = scmp.ne.s32.totalorder %s184, %s186
      %p190 = scmp.eq.s32.totalorder %s24, 0
      %p191 = por %p189, %p190
      %p192 = scmp.ne.s32.totalorder %s184, %s186
      %p193 = scmp.eq.s32.totalorder %s29, 1
      %p194 = por %p192, %p193
      %p195 = scmp.ne.s32.totalorder %s186, %s187
      %p196 = scmp.eq.s32.totalorder %s29, 0
      %p197 = por %p195, %p196
      %p198 = scmp.ne.s32.totalorder %s186, %s187
      %p199 = scmp.eq.s32.totalorder %s30, 1
      %p200 = por %p198, %p199
      %p202 = scmp.ne.s32.totalorder %s187, %s201
      %p203 = scmp.eq.s32.totalorder %s30, 0
      %p204 = por %p202, %p203
      %s206 = sadd.s32 %s205, 1
      %p209 = scmp.eq.s32.totalorder %s24, 1
      %p210 = scmp.ne.s32.totalorder %s205, %s207
      %p211 = scmp.eq.s32.totalorder %s24, 0
      %p212 = por %p210, %p211
      %p213 = scmp.ne.s32.totalorder %s205, %s207
      %p214 = scmp.eq.s32.totalorder %s29, 1
      %p215 = por %p213, %p214
      %p216 = scmp.ne.s32.totalorder %s207, %s208
      %p217 = scmp.eq.s32.totalorder %s29, 0
      %p218 = por %p216, %p217
      %p219 = scmp.ne.s32.totalorder %s207, %s208
      %p220 = scmp.eq.s32.totalorder %s30, 1
      %p221 = por %p219, %p220
      %p223 = scmp.ne.s32.totalorder %s208, %s222
      %p224 = scmp.eq.s32.totalorder %s30, 0
      %p225 = por %p223, %p224
      %s227 = sadd.s32 %s226, 1
      %p230 = scmp.eq.s32.totalorder %s24, 1
      %p231 = scmp.ne.s32.totalorder %s226, %s228
      %p232 = scmp.eq.s32.totalorder %s24, 0
      %p233 = por %p231, %p232
      %p234 = scmp.ne.s32.totalorder %s226, %s228
      %p235 = scmp.eq.s32.totalorder %s29, 1
      %p236 = por %p234, %p235
      %p237 = scmp.ne.s32.totalorder %s228, %s229
      %p238 = scmp.eq.s32.totalorder %s29, 0
      %p239 = por %p237, %p238
      %p240 = scmp.ne.s32.totalorder %s228, %s229
      %p241 = scmp.eq.s32.totalorder %s30, 1
      %p242 = por %p240, %p241
      %p244 = scmp.ne.s32.totalorder %s229, %s243
      %p245 = scmp.eq.s32.totalorder %s30, 0
      %p246 = por %p244, %p245
      %s248 = sadd.s32 %s247, 1
      %p251 = scmp.eq.s32.totalorder %s24, 1
      %p252 = scmp.ne.s32.totalorder %s247, %s249
      %p253 = scmp.eq.s32.totalorder %s24, 0
      %p254 = por %p252, %p253
      %p255 = scmp.ne.s32.totalorder %s247, %s249
      %p256 = scmp.eq.s32.totalorder %s29, 1
      %p257 = por %p255, %p256
      %p258 = scmp.ne.s32.totalorder %s249, %s250
      %p259 = scmp.eq.s32.totalorder %s29, 0
      %p260 = por %p258, %p259
      %p261 = scmp.ne.s32.totalorder %s249, %s250
      %p262 = scmp.eq.s32.totalorder %s30, 1
      %p263 = por %p261, %p262
      %p265 = scmp.ne.s32.totalorder %s250, %s264
      %p266 = scmp.eq.s32.totalorder %s30, 0
      %p267 = por %p265, %p266
      %s269 = sadd.s32 %s268, 1
      %p272 = scmp.eq.s32.totalorder %s24, 1
      %p273 = scmp.ne.s32.totalorder %s268, %s270
      %p274 = scmp.eq.s32.totalorder %s24, 0
      %p275 = por %p273, %p274
      %p276 = scmp.ne.s32.totalorder %s268, %s270
      %p277 = scmp.eq.s32.totalorder %s29, 1
      %p278 = por %p276, %p277
      %p279 = scmp.ne.s32.totalorder %s270, %s271
      %p280 = scmp.eq.s32.totalorder %s29, 0
      %p281 = por %p279, %p280
      %p282 = scmp.ne.s32.totalorder %s270, %s271
      %p283 = scmp.eq.s32.totalorder %s30, 1
      %p284 = por %p282, %p283
      %p286 = scmp.ne.s32.totalorder %s271, %s285
      %p287 = scmp.eq.s32.totalorder %s30, 0
      %p288 = por %p286, %p287
      %s289 = ssub.s32 %s24, %s31
      %p290 = scmp.eq.s32.totalorder %s289, 0
      %s292 = sadd.s32 %s291, 1
      %s293 = scalar_select %p290, %s291, %s292
      %p296 = pneg %p290
      %p297 = scmp.eq.s32.totalorder %s24, 1
      %p298 = por %p296, %p297
      %p299 = scmp.ne.s32.totalorder %s291, %s294
      %p300 = scmp.eq.s32.totalorder %s24, 0
      %p301 = por %p299, %p300
      %p302 = scmp.ne.s32.totalorder %s291, %s294
      %p303 = scmp.eq.s32.totalorder %s29, 1
      %p304 = por %p302, %p303
      %p305 = scmp.ne.s32.totalorder %s294, %s295
      %p306 = scmp.eq.s32.totalorder %s29, 0
      %p307 = por %p305, %p306
      %p308 = scmp.ne.s32.totalorder %s294, %s295
      %p309 = scmp.eq.s32.totalorder %s30, 1
      %p310 = por %p308, %p309
      %p312 = scmp.ne.s32.totalorder %s295, %s311
      %p313 = scmp.eq.s32.totalorder %s30, 0
      %p314 = por %p312, %p313
      %p315 = scmp.le.s32.totalorder 1, %s24
      %p316 = scmp.lt.s32.totalorder %s24, 3
      %p317 = pnand %p315, %p316
      %p318 = pneg %p317
      // Predicated region
      $region9: #{encoder_forward.1} parent=5 // pred_check
        _
      $region10: #{encoder_forward.1} parent=5 // pred_check_branch
        %320 = sbr.rel (%p317) target = $region12
      $region11: #{encoder_forward.1} parent=5 // pred_region
        %s321 = ssub.s32 %s24, 1
        // Predicated region
        $region13: #{encoder_forward.1} parent=11 // pred_check
          %p322 = pneg %p71
        $region14: #{encoder_forward.1} parent=11 // pred_check_branch
          %324 = sbr.rel (%p322) target = $region16
        $region15: #{encoder_forward.1} parent=11 // pred_region
          %s326 = ssub.s32 24576, 24576
          %327 = vsyncadd [#allocation3], %s326
          %s328 = sshll.u32 [#allocation2], 4
          %s329 = int_to_ptr.vmem [resolvable:$true] %s328
          %334 = dma.hbm_to_vmem [thread:$0]  %s1, 24576, %s329, [#allocation3], 1024, 1024, 64
        $region16: #{encoder_forward.1} parent=11 // pred_fallthru
          _
        // Predicated region
        $region17: #{encoder_forward.1} parent=11 // pred_check
          %p335 = pneg %p92
        $region18: #{encoder_forward.1} parent=11 // pred_check_branch
          %337 = sbr.rel (%p335) target = $region20
        $region19: #{encoder_forward.1} parent=11 // pred_region
          _
        $region20: #{encoder_forward.1} parent=11 // pred_fallthru
          _
        // Predicated region
        $region21: #{encoder_forward.1} parent=11 // pred_check
          %p338 = pneg %p113
        $region22: #{encoder_forward.1} parent=11 // pred_check_branch
          %340 = sbr.rel (%p338) target = $region24
        $region23: #{encoder_forward.1} parent=11 // pred_region
          %s342 = ssub.s32 32768, 32768
          %343 = vsyncadd [#allocation6], %s342
          %s344 = sshll.u32 [#allocation5], 4
          %s345 = int_to_ptr.vmem [resolvable:$true] %s344
          %350 = dma.hbm_to_vmem [thread:$0]  %s3, 32768, %s345, [#allocation6], 1024, 1024, 64
        $region24: #{encoder_forward.1} parent=11 // pred_fallthru
          _
        // Predicated region
        $region25: #{encoder_forward.1} parent=11 // pred_check
          %p351 = pneg %p134
        $region26: #{encoder_forward.1} parent=11 // pred_check_branch
          %353 = sbr.rel (%p351) target = $region28
        $region27: #{encoder_forward.1} parent=11 // pred_region
          _
        $region28: #{encoder_forward.1} parent=11 // pred_fallthru
          _
        // Predicated region
        $region29: #{encoder_forward.1} parent=11 // pred_check
          %p354 = pneg %p155
        $region30: #{encoder_forward.1} parent=11 // pred_check_branch
          %356 = sbr.rel (%p354) target = $region32
        $region31: #{encoder_forward.1} parent=11 // pred_region
          %s358 = ssub.s32 32768, 32768
          %359 = vsyncadd [#allocation6], %s358
          %s360 = sshll.u32 [#allocation7], 4
          %s361 = int_to_ptr.vmem [resolvable:$true] %s360
          %366 = dma.hbm_to_vmem [thread:$0]  %s5, 32768, %s361, [#allocation6], 1024, 1024, 64
        $region32: #{encoder_forward.1} parent=11 // pred_fallthru
          _
        // Predicated region
        $region33: #{encoder_forward.1} parent=11 // pred_check
          %p367 = pneg %p176
        $region34: #{encoder_forward.1} parent=11 // pred_check_branch
          %369 = sbr.rel (%p367) target = $region36
        $region35: #{encoder_forward.1} parent=11 // pred_region
          _
        $region36: #{encoder_forward.1} parent=11 // pred_fallthru
          _
        // Predicated region
        $region37: #{encoder_forward.1} parent=11 // pred_check
          %p370 = pneg %p197
        $region38: #{encoder_forward.1} parent=11 // pred_check_branch
          %372 = sbr.rel (%p370) target = $region40
        $region39: #{encoder_forward.1} parent=11 // pred_region
          %s374 = ssub.s32 32768, 32768
          %375 = vsyncadd [#allocation9], %s374
          %s376 = sshll.u32 [#allocation8], 4
          %s377 = int_to_ptr.vmem [resolvable:$true] %s376
          %382 = dma.hbm_to_vmem [thread:$0]  %s7, 32768, %s377, [#allocation9], 1024, 1024, 64
        $region40: #{encoder_forward.1} parent=11 // pred_fallthru
          _
        // Predicated region
        $region41: #{encoder_forward.1} parent=11 // pred_check
          %p383 = pneg %p218
        $region42: #{encoder_forward.1} parent=11 // pred_check_branch
          %385 = sbr.rel (%p383) target = $region44
        $region43: #{encoder_forward.1} parent=11 // pred_region
          _
        $region44: #{encoder_forward.1} parent=11 // pred_fallthru
          _
        // Predicated region
        $region45: #{encoder_forward.1} parent=11 // pred_check
          %p386 = pneg %p239
        $region46: #{encoder_forward.1} parent=11 // pred_check_branch
          %388 = sbr.rel (%p386) target = $region48
        $region47: #{encoder_forward.1} parent=11 // pred_region
          _
        $region48: #{encoder_forward.1} parent=11 // pred_fallthru
          _
        // Predicated region
        $region49: #{encoder_forward.1} parent=11 // pred_check
          %p389 = pneg %p260
        $region50: #{encoder_forward.1} parent=11 // pred_check_branch
          %391 = sbr.rel (%p389) target = $region52
        $region51: #{encoder_forward.1} parent=11 // pred_region
          _
        $region52: #{encoder_forward.1} parent=11 // pred_fallthru
          _
        // Predicated region
        $region53: #{encoder_forward.1} parent=11 // pred_check
          %p392 = pneg %p281
        $region54: #{encoder_forward.1} parent=11 // pred_check_branch
          %394 = sbr.rel (%p392) target = $region56
        $region55: #{encoder_forward.1} parent=11 // pred_region
          _
        $region56: #{encoder_forward.1} parent=11 // pred_fallthru
          _
      $region12: #{encoder_forward.1} parent=5 // pred_fallthru
        _
      %p395 = scmp.lt.s32.totalorder %s24, 2
      // Predicated region
      $region57: #{encoder_forward.1} parent=5 // pred_check
        %p396 = pneg %p395
      $region58: #{encoder_forward.1} parent=5 // pred_check_branch
        %398 = sbr.rel (%p396) target = $region60
      $region59: #{encoder_forward.1} parent=5 // pred_region
        // Predicated region
        $region61: #{encoder_forward.1} parent=59 // pred_check
          %p399 = pneg %p44
        $region62: #{encoder_forward.1} parent=59 // pred_check_branch
          %401 = sbr.rel (%p399) target = $region64
        $region63: #{encoder_forward.1} parent=59 // pred_region
          %p402 = scmp.lt.s32.totalorder %s24, 1
          %s403 = scalar_select %p402, %s24, 1
          %s404 = smul.addr %s403, 16
          %s405 = smul.addr %s404, 8
          %s406 = scalar_lea.vmem %s0, %s405
        $region64: #{encoder_forward.1} parent=59 // pred_fallthru
          _
      $region60: #{encoder_forward.1} parent=5 // pred_fallthru
        _
      %p407 = scmp.le.s32.totalorder 1, %s24
      %p408 = scmp.lt.s32.totalorder %s24, 3
      %p409 = pnand %p407, %p408
      %p410 = pneg %p409
      // Predicated region
      $region65: #{encoder_forward.1} parent=5 // pred_check
        _
      $region66: #{encoder_forward.1} parent=5 // pred_check_branch
        %412 = sbr.rel (%p409) target = $region68
      $region67: #{encoder_forward.1} parent=5 // pred_region
        %s413 = ssub.s32 %s24, 1
        // Predicated region
        $region69: #{encoder_forward.1} parent=67 // pred_check
          %p414 = pneg %p71
        $region70: #{encoder_forward.1} parent=67 // pred_check_branch
          %416 = sbr.rel (%p414) target = $region72
        $region71: #{encoder_forward.1} parent=67 // pred_region
          %417 = dma.done [#allocation3], 24576
        $region72: #{encoder_forward.1} parent=67 // pred_fallthru
          _
        // Predicated region
        $region73: #{encoder_forward.1} parent=67 // pred_check
          %p418 = pneg %p113
        $region74: #{encoder_forward.1} parent=67 // pred_check_branch
          %420 = sbr.rel (%p418) target = $region76
        $region75: #{encoder_forward.1} parent=67 // pred_region
          %421 = dma.done [#allocation6], 32768
        $region76: #{encoder_forward.1} parent=67 // pred_fallthru
          _
        // Predicated region
        $region77: #{encoder_forward.1} parent=67 // pred_check
          %p422 = pneg %p155
        $region78: #{encoder_forward.1} parent=67 // pred_check_branch
          %424 = sbr.rel (%p422) target = $region80
        $region79: #{encoder_forward.1} parent=67 // pred_region
          %425 = dma.done [#allocation6], 32768
        $region80: #{encoder_forward.1} parent=67 // pred_fallthru
          _
        // Predicated region
        $region81: #{encoder_forward.1} parent=67 // pred_check
          %p426 = pneg %p197
        $region82: #{encoder_forward.1} parent=67 // pred_check_branch
          %428 = sbr.rel (%p426) target = $region84
        $region83: #{encoder_forward.1} parent=67 // pred_region
          %429 = dma.done [#allocation9], 32768
        $region84: #{encoder_forward.1} parent=67 // pred_fallthru
          _
        %p430 = scmp.lt.s32.totalorder %s29, 1
        %s431 = scalar_select %p430, %s29, 1
        %s432 = smul.addr %s431, 16
        %s433 = smul.addr %s432, 8
        %s434 = scalar_lea.vmem %s0, %s433
        %p435 = pneg %p50
        %p436 = pneg %p47
        %p437 = pneg %p71
        %p438 = pneg %p68
        %p439 = pneg %p92
        %p440 = pneg %p89
        %p441 = pneg %p113
        %p442 = pneg %p110
        %p443 = pneg %p134
        %p444 = pneg %p131
        %p445 = pneg %p155
        %p446 = pneg %p152
        %p447 = pneg %p176
        %p448 = pneg %p173
        %p449 = pneg %p197
        %p450 = pneg %p194
        %p451 = pneg %p218
        %p452 = pneg %p215
        %p453 = pneg %p239
        %p454 = pneg %p236
        %p455 = pneg %p260
        %p456 = pneg %p257
        %p457 = pneg %p281
        %p458 = pneg %p278
        %p459 = pneg %p307
        %p460 = pneg %p304
        %s461 = sand.u32 %s294, 1
        %s462 = scalar_lea.sflag [#allocation4], %s461
        %s463 = sand.u32 %s294, 1
        %s464 = scalar_lea.vmem [#allocation10], %s463
        %p465 = scmp.lt.s32.totalorder %s29, 1
        %s466 = scalar_select %p465, %s29, 1
        %s467 = smul.addr %s466, 16
        %s468 = smul.addr %s467, 8
        %s469 = scalar_lea.vmem %s0, %s468
        %v470 = vld [vmem:[%s469] sm:$0xff]
        %v471 = vld [vmem:[%s469 + $0x8] sm:$0xff]
        %v472 = vld [vmem:[%s469 + $0x10] sm:$0xff]
        %v473 = vld [vmem:[%s469 + $0x18] sm:$0xff]
        %v474 = vld [vmem:[%s469 + $0x20] sm:$0xff]
        %v475 = vld [vmem:[%s469 + $0x28] sm:$0xff]
        %v476 = vld [vmem:[%s469 + $0x30] sm:$0xff]
        %v477 = vld [vmem:[%s469 + $0x38] sm:$0xff]
        %v478 = vld [vmem:[%s469 + $0x40] sm:$0xff]
        %v479 = vld [vmem:[%s469 + $0x48] sm:$0xff]
        %v480 = vld [vmem:[%s469 + $0x50] sm:$0xff]
        %v481 = vld [vmem:[%s469 + $0x58] sm:$0xff]
        %v482 = vld [vmem:[%s469 + $0x60] sm:$0xff]
        %v483 = vld [vmem:[%s469 + $0x68] sm:$0xff]
        %v484 = vld [vmem:[%s469 + $0x70] sm:$0xff]
        %v485 = vld [vmem:[%s469 + $0x78] sm:$0xff]
        %v486 = vld [vmem:[#allocation2] sm:$0xff]
        %v487 = vld [vmem:[#allocation2 + $0x8] sm:$0xff]
        %v488 = vld [vmem:[#allocation2 + $0x10] sm:$0xff]
        %v489 = vld [vmem:[#allocation2 + $0x18] sm:$0xff]
        %v490 = vld [vmem:[#allocation2 + $0x20] sm:$0xff]
        %v491 = vld [vmem:[#allocation2 + $0x28] sm:$0xff]
        %v492 = vld [vmem:[#allocation2 + $0x30] sm:$0xff]
        %v493 = vld [vmem:[#allocation2 + $0x38] sm:$0xff]
        %v494 = vld [vmem:[#allocation2 + $0x40] sm:$0xff]
        %v495 = vld [vmem:[#allocation2 + $0x48] sm:$0xff]
        %v496 = vld [vmem:[#allocation2 + $0x50] sm:$0xff]
        %v497 = vld [vmem:[#allocation2 + $0x58] sm:$0xff]
        %v498 = vld [vmem:[#allocation2 + $0x60] sm:$0xff]
        %v499 = vld [vmem:[#allocation2 + $0x68] sm:$0xff]
        %v500 = vld [vmem:[#allocation2 + $0x70] sm:$0xff]
        %v501 = vld [vmem:[#allocation2 + $0x78] sm:$0xff]
        %v502 = vld [vmem:[#allocation2 + $0x80] sm:$0xff]
        %v503 = vld [vmem:[#allocation2 + $0x88] sm:$0xff]
        %v504 = vld [vmem:[#allocation2 + $0x90] sm:$0xff]
        %v505 = vld [vmem:[#allocation2 + $0x98] sm:$0xff]
        %v506 = vld [vmem:[#allocation2 + $0xa0] sm:$0xff]
        %v507 = vld [vmem:[#allocation2 + $0xa8] sm:$0xff]
        %v508 = vld [vmem:[#allocation2 + $0xb0] sm:$0xff]
        %v509 = vld [vmem:[#allocation2 + $0xb8] sm:$0xff]
        %v510 = vld [vmem:[#allocation2 + $0xc0] sm:$0xff]
        %v511 = vld [vmem:[#allocation2 + $0xc8] sm:$0xff]
        %v512 = vld [vmem:[#allocation2 + $0xd0] sm:$0xff]
        %v513 = vld [vmem:[#allocation2 + $0xd8] sm:$0xff]
        %v514 = vld [vmem:[#allocation2 + $0xe0] sm:$0xff]
        %v515 = vld [vmem:[#allocation2 + $0xe8] sm:$0xff]
        %v516 = vld [vmem:[#allocation2 + $0xf0] sm:$0xff]
        %v517 = vld [vmem:[#allocation2 + $0xf8] sm:$0xff]
        %v518 = vld [vmem:[#allocation2 + $0x100] sm:$0xff]
        %v519 = vld [vmem:[#allocation2 + $0x108] sm:$0xff]
        %v520 = vld [vmem:[#allocation2 + $0x110] sm:$0xff]
        %v521 = vld [vmem:[#allocation2 + $0x118] sm:$0xff]
        %v522 = vld [vmem:[#allocation2 + $0x120] sm:$0xff]
        %v523 = vld [vmem:[#allocation2 + $0x128] sm:$0xff]
        %v524 = vld [vmem:[#allocation2 + $0x130] sm:$0xff]
        %v525 = vld [vmem:[#allocation2 + $0x138] sm:$0xff]
        %v526 = vld [vmem:[#allocation2 + $0x140] sm:$0xff]
        %v527 = vld [vmem:[#allocation2 + $0x148] sm:$0xff]
        %v528 = vld [vmem:[#allocation2 + $0x150] sm:$0xff]
        %v529 = vld [vmem:[#allocation2 + $0x158] sm:$0xff]
        %v530 = vld [vmem:[#allocation2 + $0x160] sm:$0xff]
        %v531 = vld [vmem:[#allocation2 + $0x168] sm:$0xff]
        %v532 = vld [vmem:[#allocation2 + $0x170] sm:$0xff]
        %v533 = vld [vmem:[#allocation2 + $0x178] sm:$0xff]
        %v534 = vld [vmem:[#allocation2 + $0x180] sm:$0xff]
        %v535 = vld [vmem:[#allocation2 + $0x188] sm:$0xff]
        %v536 = vld [vmem:[#allocation2 + $0x190] sm:$0xff]
        %v537 = vld [vmem:[#allocation2 + $0x198] sm:$0xff]
        %v538 = vld [vmem:[#allocation2 + $0x1a0] sm:$0xff]
        %v539 = vld [vmem:[#allocation2 + $0x1a8] sm:$0xff]
        %v540 = vld [vmem:[#allocation2 + $0x1b0] sm:$0xff]
        %v541 = vld [vmem:[#allocation2 + $0x1b8] sm:$0xff]
        %v542 = vld [vmem:[#allocation2 + $0x1c0] sm:$0xff]
        %v543 = vld [vmem:[#allocation2 + $0x1c8] sm:$0xff]
        %v544 = vld [vmem:[#allocation2 + $0x1d0] sm:$0xff]
        %v545 = vld [vmem:[#allocation2 + $0x1d8] sm:$0xff]
        %v546 = vld [vmem:[#allocation2 + $0x1e0] sm:$0xff]
        %v547 = vld [vmem:[#allocation2 + $0x1e8] sm:$0xff]
        %v548 = vld [vmem:[#allocation2 + $0x1f0] sm:$0xff]
        %v549 = vld [vmem:[#allocation2 + $0x1f8] sm:$0xff]
        %v550 = vld [vmem:[#allocation2 + $0x200] sm:$0xff]
        %v551 = vld [vmem:[#allocation2 + $0x208] sm:$0xff]
        %v552 = vld [vmem:[#allocation2 + $0x210] sm:$0xff]
        %v553 = vld [vmem:[#allocation2 + $0x218] sm:$0xff]
        %v554 = vld [vmem:[#allocation2 + $0x220] sm:$0xff]
        %v555 = vld [vmem:[#allocation2 + $0x228] sm:$0xff]
        %v556 = vld [vmem:[#allocation2 + $0x230] sm:$0xff]
        %v557 = vld [vmem:[#allocation2 + $0x238] sm:$0xff]
        %v558 = vld [vmem:[#allocation2 + $0x240] sm:$0xff]
        %v559 = vld [vmem:[#allocation2 + $0x248] sm:$0xff]
        %v560 = vld [vmem:[#allocation2 + $0x250] sm:$0xff]
        %v561 = vld [vmem:[#allocation2 + $0x258] sm:$0xff]
        %v562 = vld [vmem:[#allocation2 + $0x260] sm:$0xff]
        %v563 = vld [vmem:[#allocation2 + $0x268] sm:$0xff]
        %v564 = vld [vmem:[#allocation2 + $0x270] sm:$0xff]
        %v565 = vld [vmem:[#allocation2 + $0x278] sm:$0xff]
        %v566 = vld [vmem:[#allocation2 + $0x280] sm:$0xff]
        %v567 = vld [vmem:[#allocation2 + $0x288] sm:$0xff]
        %v568 = vld [vmem:[#allocation2 + $0x290] sm:$0xff]
        %v569 = vld [vmem:[#allocation2 + $0x298] sm:$0xff]
        %v570 = vld [vmem:[#allocation2 + $0x2a0] sm:$0xff]
        %v571 = vld [vmem:[#allocation2 + $0x2a8] sm:$0xff]
        %v572 = vld [vmem:[#allocation2 + $0x2b0] sm:$0xff]
        %v573 = vld [vmem:[#allocation2 + $0x2b8] sm:$0xff]
        %v574 = vld [vmem:[#allocation2 + $0x2c0] sm:$0xff]
        %v575 = vld [vmem:[#allocation2 + $0x2c8] sm:$0xff]
        %v576 = vld [vmem:[#allocation2 + $0x2d0] sm:$0xff]
        %v577 = vld [vmem:[#allocation2 + $0x2d8] sm:$0xff]
        %v578 = vld [vmem:[#allocation2 + $0x2e0] sm:$0xff]
        %v579 = vld [vmem:[#allocation2 + $0x2e8] sm:$0xff]
        %v580 = vld [vmem:[#allocation2 + $0x2f0] sm:$0xff]
        %v581 = vld [vmem:[#allocation2 + $0x2f8] sm:$0xff]
        %v582 = vld [vmem:[#allocation2 + $0x300] sm:$0xff]
        %v583 = vld [vmem:[#allocation2 + $0x308] sm:$0xff]
        %v584 = vld [vmem:[#allocation2 + $0x310] sm:$0xff]
        %v585 = vld [vmem:[#allocation2 + $0x318] sm:$0xff]
        %v586 = vld [vmem:[#allocation2 + $0x320] sm:$0xff]
        %v587 = vld [vmem:[#allocation2 + $0x328] sm:$0xff]
        %v588 = vld [vmem:[#allocation2 + $0x330] sm:$0xff]
        %v589 = vld [vmem:[#allocation2 + $0x338] sm:$0xff]
        %v590 = vld [vmem:[#allocation2 + $0x340] sm:$0xff]
        %v591 = vld [vmem:[#allocation2 + $0x348] sm:$0xff]
        %v592 = vld [vmem:[#allocation2 + $0x350] sm:$0xff]
        %v593 = vld [vmem:[#allocation2 + $0x358] sm:$0xff]
        %v594 = vld [vmem:[#allocation2 + $0x360] sm:$0xff]
        %v595 = vld [vmem:[#allocation2 + $0x368] sm:$0xff]
        %v596 = vld [vmem:[#allocation2 + $0x370] sm:$0xff]
        %v597 = vld [vmem:[#allocation2 + $0x378] sm:$0xff]
        %v598 = vld [vmem:[#allocation2 + $0x380] sm:$0xff]
        %v599 = vld [vmem:[#allocation2 + $0x388] sm:$0xff]
        %v600 = vld [vmem:[#allocation2 + $0x390] sm:$0xff]
        %v601 = vld [vmem:[#allocation2 + $0x398] sm:$0xff]
        %v602 = vld [vmem:[#allocation2 + $0x3a0] sm:$0xff]
        %v603 = vld [vmem:[#allocation2 + $0x3a8] sm:$0xff]
        %v604 = vld [vmem:[#allocation2 + $0x3b0] sm:$0xff]
        %v605 = vld [vmem:[#allocation2 + $0x3b8] sm:$0xff]
        %v606 = vld [vmem:[#allocation2 + $0x3c0] sm:$0xff]
        %v607 = vld [vmem:[#allocation2 + $0x3c8] sm:$0xff]
        %v608 = vld [vmem:[#allocation2 + $0x3d0] sm:$0xff]
        %v609 = vld [vmem:[#allocation2 + $0x3d8] sm:$0xff]
        %v610 = vld [vmem:[#allocation2 + $0x3e0] sm:$0xff]
        %v611 = vld [vmem:[#allocation2 + $0x3e8] sm:$0xff]
        %v612 = vld [vmem:[#allocation2 + $0x3f0] sm:$0xff]
        %v613 = vld [vmem:[#allocation2 + $0x3f8] sm:$0xff]
        %v614 = vld [vmem:[#allocation2 + $0x400] sm:$0xff]
        %v615 = vld [vmem:[#allocation2 + $0x408] sm:$0xff]
        %v616 = vld [vmem:[#allocation2 + $0x410] sm:$0xff]
        %v617 = vld [vmem:[#allocation2 + $0x418] sm:$0xff]
        %v618 = vld [vmem:[#allocation2 + $0x420] sm:$0xff]
        %v619 = vld [vmem:[#allocation2 + $0x428] sm:$0xff]
        %v620 = vld [vmem:[#allocation2 + $0x430] sm:$0xff]
        %v621 = vld [vmem:[#allocation2 + $0x438] sm:$0xff]
        %v622 = vld [vmem:[#allocation2 + $0x440] sm:$0xff]
        %v623 = vld [vmem:[#allocation2 + $0x448] sm:$0xff]
        %v624 = vld [vmem:[#allocation2 + $0x450] sm:$0xff]
        %v625 = vld [vmem:[#allocation2 + $0x458] sm:$0xff]
        %v626 = vld [vmem:[#allocation2 + $0x460] sm:$0xff]
        %v627 = vld [vmem:[#allocation2 + $0x468] sm:$0xff]
        %v628 = vld [vmem:[#allocation2 + $0x470] sm:$0xff]
        %v629 = vld [vmem:[#allocation2 + $0x478] sm:$0xff]
        %v630 = vld [vmem:[#allocation2 + $0x480] sm:$0xff]
        %v631 = vld [vmem:[#allocation2 + $0x488] sm:$0xff]
        %v632 = vld [vmem:[#allocation2 + $0x490] sm:$0xff]
        %v633 = vld [vmem:[#allocation2 + $0x498] sm:$0xff]
        %v634 = vld [vmem:[#allocation2 + $0x4a0] sm:$0xff]
        %v635 = vld [vmem:[#allocation2 + $0x4a8] sm:$0xff]
        %v636 = vld [vmem:[#allocation2 + $0x4b0] sm:$0xff]
        %v637 = vld [vmem:[#allocation2 + $0x4b8] sm:$0xff]
        %v638 = vld [vmem:[#allocation2 + $0x4c0] sm:$0xff]
        %v639 = vld [vmem:[#allocation2 + $0x4c8] sm:$0xff]
        %v640 = vld [vmem:[#allocation2 + $0x4d0] sm:$0xff]
        %v641 = vld [vmem:[#allocation2 + $0x4d8] sm:$0xff]
        %v642 = vld [vmem:[#allocation2 + $0x4e0] sm:$0xff]
        %v643 = vld [vmem:[#allocation2 + $0x4e8] sm:$0xff]
        %v644 = vld [vmem:[#allocation2 + $0x4f0] sm:$0xff]
        %v645 = vld [vmem:[#allocation2 + $0x4f8] sm:$0xff]
        %v646 = vld [vmem:[#allocation2 + $0x500] sm:$0xff]
        %v647 = vld [vmem:[#allocation2 + $0x508] sm:$0xff]
        %v648 = vld [vmem:[#allocation2 + $0x510] sm:$0xff]
        %v649 = vld [vmem:[#allocation2 + $0x518] sm:$0xff]
        %v650 = vld [vmem:[#allocation2 + $0x520] sm:$0xff]
        %v651 = vld [vmem:[#allocation2 + $0x528] sm:$0xff]
        %v652 = vld [vmem:[#allocation2 + $0x530] sm:$0xff]
        %v653 = vld [vmem:[#allocation2 + $0x538] sm:$0xff]
        %v654 = vld [vmem:[#allocation2 + $0x540] sm:$0xff]
        %v655 = vld [vmem:[#allocation2 + $0x548] sm:$0xff]
        %v656 = vld [vmem:[#allocation2 + $0x550] sm:$0xff]
        %v657 = vld [vmem:[#allocation2 + $0x558] sm:$0xff]
        %v658 = vld [vmem:[#allocation2 + $0x560] sm:$0xff]
        %v659 = vld [vmem:[#allocation2 + $0x568] sm:$0xff]
        %v660 = vld [vmem:[#allocation2 + $0x570] sm:$0xff]
        %v661 = vld [vmem:[#allocation2 + $0x578] sm:$0xff]
        %v662 = vld [vmem:[#allocation2 + $0x580] sm:$0xff]
        %v663 = vld [vmem:[#allocation2 + $0x588] sm:$0xff]
        %v664 = vld [vmem:[#allocation2 + $0x590] sm:$0xff]
        %v665 = vld [vmem:[#allocation2 + $0x598] sm:$0xff]
        %v666 = vld [vmem:[#allocation2 + $0x5a0] sm:$0xff]
        %v667 = vld [vmem:[#allocation2 + $0x5a8] sm:$0xff]
        %v668 = vld [vmem:[#allocation2 + $0x5b0] sm:$0xff]
        %v669 = vld [vmem:[#allocation2 + $0x5b8] sm:$0xff]
        %v670 = vld [vmem:[#allocation2 + $0x5c0] sm:$0xff]
        %v671 = vld [vmem:[#allocation2 + $0x5c8] sm:$0xff]
        %v672 = vld [vmem:[#allocation2 + $0x5d0] sm:$0xff]
        %v673 = vld [vmem:[#allocation2 + $0x5d8] sm:$0xff]
        %v674 = vld [vmem:[#allocation2 + $0x5e0] sm:$0xff]
        %v675 = vld [vmem:[#allocation2 + $0x5e8] sm:$0xff]
        %v676 = vld [vmem:[#allocation2 + $0x5f0] sm:$0xff]
        %v677 = vld [vmem:[#allocation2 + $0x5f8] sm:$0xff]
        %vm678 = vcmask 523264
        %v680 = vsel %vm678, %v471, 0
        %v683 = vsel %vm678, %v473, 0
        %v686 = vsel %vm678, %v475, 0
        %v689 = vsel %vm678, %v477, 0
        %v692 = vsel %vm678, %v479, 0
        %v695 = vsel %vm678, %v481, 0
        %v698 = vsel %vm678, %v483, 0
        %v701 = vsel %vm678, %v485, 0
        %703 = vmatprep.subr.mxu0 %v487
        %704 = vmatpush1.msra.mxu0 %v486
        %705 = vmatprep.subr.mxu0 %v495
        %706 = vmatpush1.msra.mxu0 %v494
        %707 = vmatprep.subr.mxu0 %v503
        %708 = vmatpush1.msra.mxu0 %v502
        %709 = vmatprep.subr.mxu0 %v511
        %710 = vmatpush1.msra.mxu0 %v510
        %711 = vmatprep.subr.mxu0 %v519
        %712 = vmatpush1.msra.mxu0 %v518
        %713 = vmatprep.subr.mxu0 %v527
        %714 = vmatpush1.msra.mxu0 %v526
        %715 = vmatprep.subr.mxu0 %v535
        %716 = vmatpush1.msra.mxu0 %v534
        %717 = vmatprep.subr.mxu0 %v543
        %718 = vmatpush1.msra.mxu0 %v542
        %719 = vmatprep.subr.mxu0 %v551
        %720 = vmatpush1.msra.mxu0 %v550
        %721 = vmatprep.subr.mxu0 %v559
        %722 = vmatpush1.msra.mxu0 %v558
        %723 = vmatprep.subr.mxu0 %v567
        %724 = vmatpush1.msra.mxu0 %v566
        %725 = vmatprep.subr.mxu0 %v575
        %726 = vmatpush1.msra.mxu0 %v574
        %727 = vmatprep.subr.mxu0 %v583
        %728 = vmatpush1.msra.mxu0 %v582
        %729 = vmatprep.subr.mxu0 %v591
        %730 = vmatpush1.msra.mxu0 %v590
        %731 = vmatprep.subr.mxu0 %v599
        %732 = vmatpush1.msra.mxu0 %v598
        %733 = vmatprep.subr.mxu0 %v607
        %734 = vmatpush1.msra.mxu0 %v606
        %735 = vmatprep.subr.mxu0 %v615
        %736 = vmatpush1.msra.mxu0 %v614
        %737 = vmatprep.subr.mxu0 %v623
        %738 = vmatpush1.msra.mxu0 %v622
        %739 = vmatprep.subr.mxu0 %v631
        %740 = vmatpush1.msra.mxu0 %v630
        %741 = vmatprep.subr.mxu0 %v639
        %742 = vmatpush1.msra.mxu0 %v638
        %743 = vmatprep.subr.mxu0 %v647
        %744 = vmatpush1.msra.mxu0 %v646
        %745 = vmatprep.subr.mxu0 %v655
        %746 = vmatpush1.msra.mxu0 %v654
        %747 = vmatprep.subr.mxu0 %v663
        %748 = vmatpush1.msra.mxu0 %v662
        %749 = vmatprep.subr.mxu0 %v671
        %750 = vmatpush1.msra.mxu0 %v670
        %751 = vmatprep.subr.mxu0 0.0
        %752 = vmatpush1.msra.mxu0 0.0
        %753 = vmatprep.subr.mxu0 0.0
        %754 = vmatpush1.msra.mxu0 0.0
        %755 = vmatprep.subr.mxu0 0.0
        %756 = vmatpush1.msra.mxu0 0.0
        %757 = vmatprep.subr.mxu0 0.0
        %758 = vmatpush1.msra.mxu0 0.0
        %759 = vmatprep.subr.mxu0 0.0
        %760 = vmatpush1.msra.mxu0 0.0
        %761 = vmatprep.subr.mxu0 0.0
        %762 = vmatpush1.msra.mxu0 0.0
        %763 = vmatprep.subr.mxu0 0.0
        %764 = vmatpush1.msra.mxu0 0.0
        %765 = vmatprep.subr.mxu0 0.0
        %766 = vmatpush1.msra.mxu0 0.0
        %767 = vmatprep.mubr.f32.mxu0 %v680
        %768 = vmatmul.mubr.f32.gmra.mrb[0].mxu0 %v470
        %v769 = vpop.f32.mrb[0].mxu0
        %v770 = vadd.f32 0.0, %v769
        %v771 = vpop.f32.mrb[0].mxu0
        %v772 = vadd.f32 0.0, %v771
        %773 = vmatprep.mubr.f32.mxu0 %v683
        %774 = vmatmul.mubr.f32.gmra.mrb[0].mxu0 %v472
        %v775 = vpop.f32.mrb[0].mxu0
        %v776 = vadd.f32 0.0, %v775
        %v777 = vpop.f32.mrb[0].mxu0
        %v778 = vadd.f32 0.0, %v777
        %779 = vmatprep.mubr.f32.mxu0 %v686
        %780 = vmatmul.mubr.f32.gmra.mrb[0].mxu0 %v474
        %v781 = vpop.f32.mrb[0].mxu0
        %v782 = vadd.f32 0.0, %v781
        %v783 = vpop.f32.mrb[0].mxu0
        %v784 = vadd.f32 0.0, %v783
        %785 = vmatprep.mubr.f32.mxu0 %v689
        %786 = vmatmul.mubr.f32.gmra.mrb[0].mxu0 %v476
        %v787 = vpop.f32.mrb[0].mxu0
        %v788 = vadd.f32 0.0, %v787
        %v789 = vpop.f32.mrb[0].mxu0
        %v790 = vadd.f32 0.0, %v789
        %791 = vmatprep.mubr.f32.mxu0 %v692
        %792 = vmatmul.mubr.f32.gmra.mrb[0].mxu0 %v478
        %v793 = vpop.f32.mrb[0].mxu0
        %v794 = vadd.f32 0.0, %v793
        %v795 = vpop.f32.mrb[0].mxu0
        %v796 = vadd.f32 0.0, %v795
        %797 = vmatprep.mubr.f32.mxu0 %v695
        %798 = vmatmul.mubr.f32.gmra.mrb[0].mxu0 %v480
        %v799 = vpop.f32.mrb[0].mxu0
        %v800 = vadd.f32 0.0, %v799
        %v801 = vpop.f32.mrb[0].mxu0
        %v802 = vadd.f32 0.0, %v801
        %803 = vmatprep.mubr.f32.mxu0 %v698
        %804 = vmatmul.mubr.f32.gmra.mrb[0].mxu0 %v482
        %v805 = vpop.f32.mrb[0].mxu0
        %v806 = vadd.f32 0.0, %v805
        %v807 = vpop.f32.mrb[0].mxu0
        %v808 = vadd.f32 0.0, %v807
        %809 = vmatprep.mubr.f32.mxu0 %v701
        %810 = vmatmul.mubr.f32.gmra.mrb[0].mxu0 %v484
        %v811 = vpop.f32.mrb[0].mxu0
        %v812 = vadd.f32 0.0, %v811
        %v813 = vpop.f32.mrb[0].mxu0
        %v814 = vadd.f32 0.0, %v813
        %815 = vdwg.mxu0
        %816 = vmatprep.subr.mxu0 %v489
        %817 = vmatpush1.msra.mxu0 %v488
        %818 = vmatprep.subr.mxu0 %v497
        %819 = vmatpush1.msra.mxu0 %v496
        %820 = vmatprep.subr.mxu0 %v505
        %821 = vmatpush1.msra.mxu0 %v504
        %822 = vmatprep.subr.mxu0 %v513
        %823 = vmatpush1.msra.mxu0 %v512
        %824 = vmatprep.subr.mxu0 %v521
        %825 = vmatpush1.msra.mxu0 %v520
        %826 = vmatprep.subr.mxu0 %v529
        %827 = vmatpush1.msra.mxu0 %v528
        %828 = vmatprep.subr.mxu0 %v537
        %829 = vmatpush1.msra.mxu0 %v536
        %830 = vmatprep.subr.mxu0 %v545
        %831 = vmatpush1.msra.mxu0 %v544
        %832 = vmatprep.subr.mxu0 %v553
        %833 = vmatpush1.msra.mxu0 %v552
        %834 = vmatprep.subr.mxu0 %v561
        %835 = vmatpush1.msra.mxu0 %v560
        %836 = vmatprep.subr.mxu0 %v569
        %837 = vmatpush1.msra.mxu0 %v568
        %838 = vmatprep.subr.mxu0 %v577
        %839 = vmatpush1.msra.mxu0 %v576
        %840 = vmatprep.subr.mxu0 %v585
        %841 = vmatpush1.msra.mxu0 %v584
        %842 = vmatprep.subr.mxu0 %v593
        %843 = vmatpush1.msra.mxu0 %v592
        %844 = vmatprep.subr.mxu0 %v601
        %845 = vmatpush1.msra.mxu0 %v600
        %846 = vmatprep.subr.mxu0 %v609
        %847 = vmatpush1.msra.mxu0 %v608
        %848 = vmatprep.subr.mxu0 %v617
        %849 = vmatpush1.msra.mxu0 %v616
        %850 = vmatprep.subr.mxu0 %v625
        %851 = vmatpush1.msra.mxu0 %v624
        %852 = vmatprep.subr.mxu0 %v633
        %853 = vmatpush1.msra.mxu0 %v632
        %854 = vmatprep.subr.mxu0 %v641
        %855 = vmatpush1.msra.mxu0 %v640
        %856 = vmatprep.subr.mxu0 %v649
        %857 = vmatpush1.msra.mxu0 %v648
        %858 = vmatprep.subr.mxu0 %v657
        %859 = vmatpush1.msra.mxu0 %v656
        %860 = vmatprep.subr.mxu0 %v665
        %861 = vmatpush1.msra.mxu0 %v664
        %862 = vmatprep.subr.mxu0 %v673
        %863 = vmatpush1.msra.mxu0 %v672
        %864 = vmatprep.subr.mxu0 0.0
        %865 = vmatpush1.msra.mxu0 0.0
        %866 = vmatprep.subr.mxu0 0.0
        %867 = vmatpush1.msra.mxu0 0.0
        %868 = vmatprep.subr.mxu0 0.0
        %869 = vmatpush1.msra.mxu0 0.0
        %870 = vmatprep.subr.mxu0 0.0
        %871 = vmatpush1.msra.mxu0 0.0
        %872 = vmatprep.subr.mxu0 0.0
        %873 = vmatpush1.msra.mxu0 0.0
        %874 = vmatprep.subr.mxu0 0.0
        %875 = vmatpush1.msra.mxu0 0.0
        %876 = vmatprep.subr.mxu0 0.0
        %877 = vmatpush1.msra.mxu0 0.0
        %878 = vmatprep.subr.mxu0 0.0
        %879 = vmatpush1.msra.mxu0 0.0
        %880 = vmatprep.mubr.f32.mxu0 %v680
        %881 = vmatmul.mubr.f32.gmra.mrb[0].mxu0 %v470
        %v882 = vpop.f32.mrb[0].mxu0
        %v883 = vadd.f32 0.0, %v882
        %v884 = vpop.f32.mrb[0].mxu0
        %v885 = vadd.f32 0.0, %v884
        %886 = vmatprep.mubr.f32.mxu0 %v683
        %887 = vmatmul.mubr.f32.gmra.mrb[0].mxu0 %v472
        %v888 = vpop.f32.mrb[0].mxu0
        %v889 = vadd.f32 0.0, %v888
        %v890 = vpop.f32.mrb[0].mxu0
        %v891 = vadd.f32 0.0, %v890
        %892 = vmatprep.mubr.f32.mxu0 %v686
        %893 = vmatmul.mubr.f32.gmra.mrb[0].mxu0 %v474
        %v894 = vpop.f32.mrb[0].mxu0
        %v895 = vadd.f32 0.0, %v894
        %v896 = vpop.f32.mrb[0].mxu0
        %v897 = vadd.f32 0.0, %v896
        %898 = vmatprep.mubr.f32.mxu0 %v689
        %899 = vmatmul.mubr.f32.gmra.mrb[0].mxu0 %v476
        %v900 = vpop.f32.mrb[0].mxu0
        %v901 = vadd.f32 0.0, %v900
        %v902 = vpop.f32.mrb[0].mxu0
        %v903 = vadd.f32 0.0, %v902
        %904 = vmatprep.mubr.f32.mxu0 %v692
        %905 = vmatmul.mubr.f32.gmra.mrb[0].mxu0 %v478
        %v906 = vpop.f32.mrb[0].mxu0
        %v907 = vadd.f32 0.0, %v906
        %v908 = vpop.f32.mrb[0].mxu0
        %v909 = vadd.f32 0.0, %v908
        %910 = vmatprep.mubr.f32.mxu0 %v695
        %911 = vmatmul.mubr.f32.gmra.mrb[0].mxu0 %v480
        %v912 = vpop.f32.mrb[0].mxu0
        %v913 = vadd.f32 0.0, %v912
        %v914 = vpop.f32.mrb[0].mxu0
        %v915 = vadd.f32 0.0, %v914
        %916 = vmatprep.mubr.f32.mxu0 %v698
        %917 = vmatmul.mubr.f32.gmra.mrb[0].mxu0 %v482
        %v918 = vpop.f32.mrb[0].mxu0
        %v919 = vadd.f32 0.0, %v918
        %v920 = vpop.f32.mrb[0].mxu0
        %v921 = vadd.f32 0.0, %v920
        %922 = vmatprep.mubr.f32.mxu0 %v701
        %923 = vmatmul.mubr.f32.gmra.mrb[0].mxu0 %v484
        %v924 = vpop.f32.mrb[0].mxu0
        %v925 = vadd.f32 0.0, %v924
        %v926 = vpop.f32.mrb[0].mxu0
        %v927 = vadd.f32 0.0, %v926
        %928 = vdwg.mxu0
        %929 = vmatprep.subr.mxu0 %v491
        %930 = vmatpush1.msra.mxu0 %v490
        %931 = vmatprep.subr.mxu0 %v499
        %932 = vmatpush1.msra.mxu0 %v498
        %933 = vmatprep.subr.mxu0 %v507
        %934 = vmatpush1.msra.mxu0 %v506
        %935 = vmatprep.subr.mxu0 %v515
        %936 = vmatpush1.msra.mxu0 %v514
        %937 = vmatprep.subr.mxu0 %v523
        %938 = vmatpush1.msra.mxu0 %v522
        %939 = vmatprep.subr.mxu0 %v531
        %940 = vmatpush1.msra.mxu0 %v530
        %941 = vmatprep.subr.mxu0 %v539
        %942 = vmatpush1.msra.mxu0 %v538
        %943 = vmatprep.subr.mxu0 %v547
        %944 = vmatpush1.msra.mxu0 %v546
        %945 = vmatprep.subr.mxu0 %v555
        %946 = vmatpush1.msra.mxu0 %v554
        %947 = vmatprep.subr.mxu0 %v563
        %948 = vmatpush1.msra.mxu0 %v562
        %949 = vmatprep.subr.mxu0 %v571
        %950 = vmatpush1.msra.mxu0 %v570
        %951 = vmatprep.subr.mxu0 %v579
        %952 = vmatpush1.msra.mxu0 %v578
        %953 = vmatprep.subr.mxu0 %v587
        %954 = vmatpush1.msra.mxu0 %v586
        %955 = vmatprep.subr.mxu0 %v595
        %956 = vmatpush1.msra.mxu0 %v594
        %957 = vmatprep.subr.mxu0 %v603
        %958 = vmatpush1.msra.mxu0 %v602
        %959 = vmatprep.subr.mxu0 %v611
        %960 = vmatpush1.msra.mxu0 %v610
        %961 = vmatprep.subr.mxu0 %v619
        %962 = vmatpush1.msra.mxu0 %v618
        %963 = vmatprep.subr.mxu0 %v627
        %964 = vmatpush1.msra.mxu0 %v626
        %965 = vmatprep.subr.mxu0 %v635
        %966 = vmatpush1.msra.mxu0 %v634
        %967 = vmatprep.subr.mxu0 %v643
        %968 = vmatpush1.msra.mxu0 %v642
        %969 = vmatprep.subr.mxu0 %v651
        %970 = vmatpush1.msra.mxu0 %v650
        %971 = vmatprep.subr.mxu0 %v659
        %972 = vmatpush1.msra.mxu0 %v658
        %973 = vmatprep.subr.mxu0 %v667
        %974 = vmatpush1.msra.mxu0 %v666
        %975 = vmatprep.subr.mxu0 %v675
        %976 = vmatpush1.msra.mxu0 %v674
        %977 = vmatprep.subr.mxu0 0.0
        %978 = vmatpush1.msra.mxu0 0.0
        %979 = vmatprep.subr.mxu0 0.0
        %980 = vmatpush1.msra.mxu0 0.0
        %981 = vmatprep.subr.mxu0 0.0
        %982 = vmatpush1.msra.mxu0 0.0
        %983 = vmatprep.subr.mxu0 0.0
        %984 = vmatpush1.msra.mxu0 0.0
        %985 = vmatprep.subr.mxu0 0.0
        %986 = vmatpush1.msra.mxu0 0.0
        %987 = vmatprep.subr.mxu0 0.0
        %988 = vmatpush1.msra.mxu0 0.0
        %989 = vmatprep.subr.mxu0 0.0
        %990 = vmatpush1.msra.mxu0 0.0
        %991 = vmatprep.subr.mxu0 0.0
        %992 = vmatpush1.msra.mxu0 0.0
        %993 = vmatprep.mubr.f32.mxu0 %v680
        %994 = vmatmul.mubr.f32.gmra.mrb[0].mxu0 %v470
        %v995 = vpop.f32.mrb[0].mxu0
        %v996 = vadd.f32 0.0, %v995
        %v997 = vpop.f32.mrb[0].mxu0
        %v998 = vadd.f32 0.0, %v997
        %999 = vmatprep.mubr.f32.mxu0 %v683
        %1000 = vmatmul.mubr.f32.gmra.mrb[0].mxu0 %v472
        %v1001 = vpop.f32.mrb[0].mxu0
        %v1002 = vadd.f32 0.0, %v1001
        %v1003 = vpop.f32.mrb[0].mxu0
        %v1004 = vadd.f32 0.0, %v1003
        %1005 = vmatprep.mubr.f32.mxu0 %v686
        %1006 = vmatmul.mubr.f32.gmra.mrb[0].mxu0 %v474
        %v1007 = vpop.f32.mrb[0].mxu0
        %v1008 = vadd.f32 0.0, %v1007
        %v1009 = vpop.f32.mrb[0].mxu0
        %v1010 = vadd.f32 0.0, %v1009
        %1011 = vmatprep.mubr.f32.mxu0 %v689
        %1012 = vmatmul.mubr.f32.gmra.mrb[0].mxu0 %v476
        %v1013 = vpop.f32.mrb[0].mxu0
        %v1014 = vadd.f32 0.0, %v1013
        %v1015 = vpop.f32.mrb[0].mxu0
        %v1016 = vadd.f32 0.0, %v1015
        %1017 = vmatprep.mubr.f32.mxu0 %v692
        %1018 = vmatmul.mubr.f32.gmra.mrb[0].mxu0 %v478
        %v1019 = vpop.f32.mrb[0].mxu0
        %v1020 = vadd.f32 0.0, %v1019
        %v1021 = vpop.f32.mrb[0].mxu0
        %v1022 = vadd.f32 0.0, %v1021
        %1023 = vmatprep.mubr.f32.mxu0 %v695
        %1024 = vmatmul.mubr.f32.gmra.mrb[0].mxu0 %v480
        %v1025 = vpop.f32.mrb[0].mxu0
        %v1026 = vadd.f32 0.0, %v1025
        %v1027 = vpop.f32.mrb[0].mxu0
        %v1028 = vadd.f32 0.0, %v1027
        %1029 = vmatprep.mubr.f32.mxu0 %v698
        %1030 = vmatmul.mubr.f32.gmra.mrb[0].mxu0 %v482
        %v1031 = vpop.f32.mrb[0].mxu0
        %v1032 = vadd.f32 0.0, %v1031
        %v1033 = vpop.f32.mrb[0].mxu0
        %v1034 = vadd.f32 0.0, %v1033
        %1035 = vmatprep.mubr.f32.mxu0 %v701
        %1036 = vmatmul.mubr.f32.gmra.mrb[0].mxu0 %v484
        %v1037 = vpop.f32.mrb[0].mxu0
        %v1038 = vadd.f32 0.0, %v1037
        %v1039 = vpop.f32.mrb[0].mxu0
        %v1040 = vadd.f32 0.0, %v1039
        %1041 = vdwg.mxu0
        %1042 = vmatprep.subr.mxu0 %v493
        %1043 = vmatpush1.msra.mxu0 %v492
        %1044 = vmatprep.subr.mxu0 %v501
        %1045 = vmatpush1.msra.mxu0 %v500
        %1046 = vmatprep.subr.mxu0 %v509
        %1047 = vmatpush1.msra.mxu0 %v508
        %1048 = vmatprep.subr.mxu0 %v517
        %1049 = vmatpush1.msra.mxu0 %v516
        %1050 = vmatprep.subr.mxu0 %v525
        %1051 = vmatpush1.msra.mxu0 %v524
        %1052 = vmatprep.subr.mxu0 %v533
        %1053 = vmatpush1.msra.mxu0 %v532
        %1054 = vmatprep.subr.mxu0 %v541
        %1055 = vmatpush1.msra.mxu0 %v540
        %1056 = vmatprep.subr.mxu0 %v549
        %1057 = vmatpush1.msra.mxu0 %v548
        %1058 = vmatprep.subr.mxu0 %v557
        %1059 = vmatpush1.msra.mxu0 %v556
        %1060 = vmatprep.subr.mxu0 %v565
        %1061 = vmatpush1.msra.mxu0 %v564
        %1062 = vmatprep.subr.mxu0 %v573
        %1063 = vmatpush1.msra.mxu0 %v572
        %1064 = vmatprep.subr.mxu0 %v581
        %1065 = vmatpush1.msra.mxu0 %v580
        %1066 = vmatprep.subr.mxu0 %v589
        %1067 = vmatpush1.msra.mxu0 %v588
        %1068 = vmatprep.subr.mxu0 %v597
        %1069 = vmatpush1.msra.mxu0 %v596
        %1070 = vmatprep.subr.mxu0 %v605
        %1071 = vmatpush1.msra.mxu0 %v604
        %1072 = vmatprep.subr.mxu0 %v613
        %1073 = vmatpush1.msra.mxu0 %v612
        %1074 = vmatprep.subr.mxu0 %v621
        %1075 = vmatpush1.msra.mxu0 %v620
        %1076 = vmatprep.subr.mxu0 %v629
        %1077 = vmatpush1.msra.mxu0 %v628
        %1078 = vmatprep.subr.mxu0 %v637
        %1079 = vmatpush1.msra.mxu0 %v636
        %1080 = vmatprep.subr.mxu0 %v645
        %1081 = vmatpush1.msra.mxu0 %v644
        %1082 = vmatprep.subr.mxu0 %v653
        %1083 = vmatpush1.msra.mxu0 %v652
        %1084 = vmatprep.subr.mxu0 %v661
        %1085 = vmatpush1.msra.mxu0 %v660
        %1086 = vmatprep.subr.mxu0 %v669
        %1087 = vmatpush1.msra.mxu0 %v668
        %1088 = vmatprep.subr.mxu0 %v677
        %1089 = vmatpush1.msra.mxu0 %v676
        %1090 = vmatprep.subr.mxu0 0.0
        %1091 = vmatpush1.msra.mxu0 0.0
        %1092 = vmatprep.subr.mxu0 0.0
        %1093 = vmatpush1.msra.mxu0 0.0
        %1094 = vmatprep.subr.mxu0 0.0
        %1095 = vmatpush1.msra.mxu0 0.0
        %1096 = vmatprep.subr.mxu0 0.0
        %1097 = vmatpush1.msra.mxu0 0.0
        %1098 = vmatprep.subr.mxu0 0.0
        %1099 = vmatpush1.msra.mxu0 0.0
        %1100 = vmatprep.subr.mxu0 0.0
        %1101 = vmatpush1.msra.mxu0 0.0
        %1102 = vmatprep.subr.mxu0 0.0
        %1103 = vmatpush1.msra.mxu0 0.0
        %1104 = vmatprep.subr.mxu0 0.0
        %1105 = vmatpush1.msra.mxu0 0.0
        %1106 = vmatprep.mubr.f32.mxu0 %v680
        %1107 = vmatmul.mubr.f32.gmra.mrb[0].mxu0 %v470
        %v1108 = vpop.f32.mrb[0].mxu0
        %v1109 = vadd.f32 0.0, %v1108
        %v1110 = vpop.f32.mrb[0].mxu0
        %v1111 = vadd.f32 0.0, %v1110
        %1112 = vmatprep.mubr.f32.mxu0 %v683
        %1113 = vmatmul.mubr.f32.gmra.mrb[0].mxu0 %v472
        %v1114 = vpop.f32.mrb[0].mxu0
        %v1115 = vadd.f32 0.0, %v1114
        %v1116 = vpop.f32.mrb[0].mxu0
        %v1117 = vadd.f32 0.0, %v1116
        %1118 = vmatprep.mubr.f32.mxu0 %v686
        %1119 = vmatmul.mubr.f32.gmra.mrb[0].mxu0 %v474
        %v1120 = vpop.f32.mrb[0].mxu0
        %v1121 = vadd.f32 0.0, %v1120
        %v1122 = vpop.f32.mrb[0].mxu0
        %v1123 = vadd.f32 0.0, %v1122
        %1124 = vmatprep.mubr.f32.mxu0 %v689
        %1125 = vmatmul.mubr.f32.gmra.mrb[0].mxu0 %v476
        %v1126 = vpop.f32.mrb[0].mxu0
        %v1127 = vadd.f32 0.0, %v1126
        %v1128 = vpop.f32.mrb[0].mxu0
        %v1129 = vadd.f32 0.0, %v1128
        %1130 = vmatprep.mubr.f32.mxu0 %v692
        %1131 = vmatmul.mubr.f32.gmra.mrb[0].mxu0 %v478
        %v1132 = vpop.f32.mrb[0].mxu0
        %v1133 = vadd.f32 0.0, %v1132
        %v1134 = vpop.f32.mrb[0].mxu0
        %v1135 = vadd.f32 0.0, %v1134
        %1136 = vmatprep.mubr.f32.mxu0 %v695
        %1137 = vmatmul.mubr.f32.gmra.mrb[0].mxu0 %v480
        %v1138 = vpop.f32.mrb[0].mxu0
        %v1139 = vadd.f32 0.0, %v1138
        %v1140 = vpop.f32.mrb[0].mxu0
        %v1141 = vadd.f32 0.0, %v1140
        %1142 = vmatprep.mubr.f32.mxu0 %v698
        %1143 = vmatmul.mubr.f32.gmra.mrb[0].mxu0 %v482
        %v1144 = vpop.f32.mrb[0].mxu0
        %v1145 = vadd.f32 0.0, %v1144
        %v1146 = vpop.f32.mrb[0].mxu0
        %v1147 = vadd.f32 0.0, %v1146
        %1148 = vmatprep.mubr.f32.mxu0 %v701
        %1149 = vmatmul.mubr.f32.gmra.mrb[0].mxu0 %v484
        %v1150 = vpop.f32.mrb[0].mxu0
        %v1151 = vadd.f32 0.0, %v1150
        %v1152 = vpop.f32.mrb[0].mxu0
        %v1153 = vadd.f32 0.0, %v1152
        %1154 = vdwg.mxu0
        %v1155 = vld [vmem:[%s2] sm:$0xff]
        %v1156 = vld [vmem:[%s2 + $0x8] sm:$0xff]
        %v1157 = vld [vmem:[%s2 + $0x10] sm:$0xff]
        %v1158 = vld [vmem:[%s2 + $0x18] sm:$0xff]
        %s1159 = scalar_lea.vmem %s2, 32
        %v1160 = vld [vmem:[%s1159] sm:$0xff]
        %v1161 = vld [vmem:[%s1159 + $0x8] sm:$0xff]
        %v1162 = vld [vmem:[%s1159 + $0x10] sm:$0xff]
        %v1163 = vld [vmem:[%s1159 + $0x18] sm:$0xff]
        %v1165 = vsel %vm678, %v1160, 0
        %v1168 = vsel %vm678, %v1161, 0
        %v1171 = vsel %vm678, %v1162, 0
        %v1174 = vsel %vm678, %v1163, 0
        %1176 = vmatprep.subr.mxu0 %v885
        %1177 = vmatpush1.msra.mxu0 %v883
        %1178 = vmatprep.subr.mxu0 %v891
        %1179 = vmatpush1.msra.mxu0 %v889
        %1180 = vmatprep.subr.mxu0 %v897
        %1181 = vmatpush1.msra.mxu0 %v895
        %1182 = vmatprep.subr.mxu0 %v903
        %1183 = vmatpush1.msra.mxu0 %v901
        %1184 = vmatprep.subr.mxu0 %v909
        %1185 = vmatpush1.msra.mxu0 %v907
        %1186 = vmatprep.subr.mxu0 %v915
        %1187 = vmatpush1.msra.mxu0 %v913
        %1188 = vmatprep.subr.mxu0 %v921
        %1189 = vmatpush1.msra.mxu0 %v919
        %1190 = vmatprep.subr.mxu0 %v927
        %1191 = vmatpush1.msra.mxu0 %v925
        %1192 = vmatprep.subr.mxu0 0.0
        %1193 = vmatpush1.msra.mxu0 0.0
        %1194 = vmatprep.subr.mxu0 0.0
        %1195 = vmatpush1.msra.mxu0 0.0
        %1196 = vmatprep.subr.mxu0 0.0
        %1197 = vmatpush1.msra.mxu0 0.0
        %1198 = vmatprep.subr.mxu0 0.0
        %1199 = vmatpush1.msra.mxu0 0.0
        %1200 = vmatprep.subr.mxu0 0.0
        %1201 = vmatpush1.msra.mxu0 0.0
        %1202 = vmatprep.subr.mxu0 0.0
        %1203 = vmatpush1.msra.mxu0 0.0
        %1204 = vmatprep.subr.mxu0 0.0
        %1205 = vmatpush1.msra.mxu0 0.0
        %1206 = vmatprep.subr.mxu0 0.0
        %1207 = vmatpush1.msra.mxu0 0.0
        %1208 = vmatprep.subr.mxu0 0.0
        %1209 = vmatpush1.msra.mxu0 0.0
        %1210 = vmatprep.subr.mxu0 0.0
        %1211 = vmatpush1.msra.mxu0 0.0
        %1212 = vmatprep.subr.mxu0 0.0
        %1213 = vmatpush1.msra.mxu0 0.0
        %1214 = vmatprep.subr.mxu0 0.0
        %1215 = vmatpush1.msra.mxu0 0.0
        %1216 = vmatprep.subr.mxu0 0.0
        %1217 = vmatpush1.msra.mxu0 0.0
        %1218 = vmatprep.subr.mxu0 0.0
        %1219 = vmatpush1.msra.mxu0 0.0
        %1220 = vmatprep.subr.mxu0 0.0
        %1221 = vmatpush1.msra.mxu0 0.0
        %1222 = vmatprep.subr.mxu0 0.0
        %1223 = vmatpush1.msra.mxu0 0.0
        %1224 = vmatprep.subr.mxu0 0.0
        %1225 = vmatpush1.msra.mxu0 0.0
        %1226 = vmatprep.subr.mxu0 0.0
        %1227 = vmatpush1.msra.mxu0 0.0
        %1228 = vmatprep.subr.mxu0 0.0
        %1229 = vmatpush1.msra.mxu0 0.0
        %1230 = vmatprep.subr.mxu0 0.0
        %1231 = vmatpush1.msra.mxu0 0.0
        %1232 = vmatprep.subr.mxu0 0.0
        %1233 = vmatpush1.msra.mxu0 0.0
        %1234 = vmatprep.subr.mxu0 0.0
        %1235 = vmatpush1.msra.mxu0 0.0
        %1236 = vmatprep.subr.mxu0 0.0
        %1237 = vmatpush1.msra.mxu0 0.0
        %1238 = vmatprep.subr.mxu0 0.0
        %1239 = vmatpush1.msra.mxu0 0.0
        %1240 = vmatprep.mubr.f32.mxu0 0.0
        %1241 = vmatmul.mubr.f32.gmra.mrb[0].mxu0 %v1165
        %v1242 = vpop.f32.mrb[0].mxu0
        %v1243 = vadd.f32 0.0, %v1242
        %v1244 = vpop.f32.mrb[0].mxu0
        %v1245 = vadd.f32 0.0, %v1244
        %1246 = vmatprep.mubr.f32.mxu0 0.0
        %1247 = vmatmul.mubr.f32.gmra.mrb[0].mxu0 %v1168
        %v1248 = vpop.f32.mrb[0].mxu0
        %v1249 = vadd.f32 0.0, %v1248
        %v1250 = vpop.f32.mrb[0].mxu0
        %v1251 = vadd.f32 0.0, %v1250
        %1252 = vmatprep.mubr.f32.mxu0 0.0
        %1253 = vmatmul.mubr.f32.gmra.mrb[0].mxu0 %v1171
        %v1254 = vpop.f32.mrb[0].mxu0
        %v1255 = vadd.f32 0.0, %v1254
        %v1256 = vpop.f32.mrb[0].mxu0
        %v1257 = vadd.f32 0.0, %v1256
        %1258 = vmatprep.mubr.f32.mxu0 0.0
        %1259 = vmatmul.mubr.f32.gmra.mrb[0].mxu0 %v1174
        %v1260 = vpop.f32.mrb[0].mxu0
        %v1261 = vadd.f32 0.0, %v1260
        %v1262 = vpop.f32.mrb[0].mxu0
        %v1263 = vadd.f32 0.0, %v1262
        %1264 = vdwg.mxu0
        %v1266 = vsel %vm678, %v1155, 0
        %v1269 = vsel %vm678, %v1156, 0
        %v1272 = vsel %vm678, %v1157, 0
        %v1275 = vsel %vm678, %v1158, 0
        %1277 = vmatprep.subr.mxu0 %v772
        %1278 = vmatpush1.msra.mxu0 %v770
        %1279 = vmatprep.subr.mxu0 %v778
        %1280 = vmatpush1.msra.mxu0 %v776
        %1281 = vmatprep.subr.mxu0 %v784
        %1282 = vmatpush1.msra.mxu0 %v782
        %1283 = vmatprep.subr.mxu0 %v790
        %1284 = vmatpush1.msra.mxu0 %v788
        %1285 = vmatprep.subr.mxu0 %v796
        %1286 = vmatpush1.msra.mxu0 %v794
        %1287 = vmatprep.subr.mxu0 %v802
        %1288 = vmatpush1.msra.mxu0 %v800
        %1289 = vmatprep.subr.mxu0 %v808
        %1290 = vmatpush1.msra.mxu0 %v806
        %1291 = vmatprep.subr.mxu0 %v814
        %1292 = vmatpush1.msra.mxu0 %v812
        %1293 = vmatprep.subr.mxu0 0.0
        %1294 = vmatpush1.msra.mxu0 0.0
        %1295 = vmatprep.subr.mxu0 0.0
        %1296 = vmatpush1.msra.mxu0 0.0
        %1297 = vmatprep.subr.mxu0 0.0
        %1298 = vmatpush1.msra.mxu0 0.0
        %1299 = vmatprep.subr.mxu0 0.0
        %1300 = vmatpush1.msra.mxu0 0.0
        %1301 = vmatprep.subr.mxu0 0.0
        %1302 = vmatpush1.msra.mxu0 0.0
        %1303 = vmatprep.subr.mxu0 0.0
        %1304 = vmatpush1.msra.mxu0 0.0
        %1305 = vmatprep.subr.mxu0 0.0
        %1306 = vmatpush1.msra.mxu0 0.0
        %1307 = vmatprep.subr.mxu0 0.0
        %1308 = vmatpush1.msra.mxu0 0.0
        %1309 = vmatprep.subr.mxu0 0.0
        %1310 = vmatpush1.msra.mxu0 0.0
        %1311 = vmatprep.subr.mxu0 0.0
        %1312 = vmatpush1.msra.mxu0 0.0
        %1313 = vmatprep.subr.mxu0 0.0
        %1314 = vmatpush1.msra.mxu0 0.0
        %1315 = vmatprep.subr.mxu0 0.0
        %1316 = vmatpush1.msra.mxu0 0.0
        %1317 = vmatprep.subr.mxu0 0.0
        %1318 = vmatpush1.msra.mxu0 0.0
        %1319 = vmatprep.subr.mxu0 0.0
        %1320 = vmatpush1.msra.mxu0 0.0
        %1321 = vmatprep.subr.mxu0 0.0
        %1322 = vmatpush1.msra.mxu0 0.0
        %1323 = vmatprep.subr.mxu0 0.0
        %1324 = vmatpush1.msra.mxu0 0.0
        %1325 = vmatprep.subr.mxu0 0.0
        %1326 = vmatpush1.msra.mxu0 0.0
        %1327 = vmatprep.subr.mxu0 0.0
        %1328 = vmatpush1.msra.mxu0 0.0
        %1329 = vmatprep.subr.mxu0 0.0
        %1330 = vmatpush1.msra.mxu0 0.0
        %1331 = vmatprep.subr.mxu0 0.0
        %1332 = vmatpush1.msra.mxu0 0.0
        %1333 = vmatprep.subr.mxu0 0.0
        %1334 = vmatpush1.msra.mxu0 0.0
        %1335 = vmatprep.subr.mxu0 0.0
        %1336 = vmatpush1.msra.mxu0 0.0
        %1337 = vmatprep.subr.mxu0 0.0
        %1338 = vmatpush1.msra.mxu0 0.0
        %1339 = vmatprep.subr.mxu0 0.0
        %1340 = vmatpush1.msra.mxu0 0.0
        %1341 = vmatprep.mubr.f32.mxu0 0.0
        %1342 = vmatmul.mubr.f32.gmra.mrb[0].mxu0 %v1266
        %v1343 = vpop.f32.mrb[0].mxu0
        %v1344 = vadd.f32 %v1243, %v1343
        %v1345 = vpop.f32.mrb[0].mxu0
        %v1346 = vadd.f32 %v1245, %v1345
        %1347 = vmatprep.mubr.f32.mxu0 0.0
        %1348 = vmatmul.mubr.f32.gmra.mrb[0].mxu0 %v1269
        %v1349 = vpop.f32.mrb[0].mxu0
        %v1350 = vadd.f32 %v1249, %v1349
        %v1351 = vpop.f32.mrb[0].mxu0
        %v1352 = vadd.f32 %v1251, %v1351
        %1353 = vmatprep.mubr.f32.mxu0 0.0
        %1354 = vmatmul.mubr.f32.gmra.mrb[0].mxu0 %v1272
        %v1355 = vpop.f32.mrb[0].mxu0
        %v1356 = vadd.f32 %v1255, %v1355
        %v1357 = vpop.f32.mrb[0].mxu0
        %v1358 = vadd.f32 %v1257, %v1357
        %1359 = vmatprep.mubr.f32.mxu0 0.0
        %1360 = vmatmul.mubr.f32.gmra.mrb[0].mxu0 %v1275
        %v1361 = vpop.f32.mrb[0].mxu0
        %v1362 = vadd.f32 %v1261, %v1361
        %v1363 = vpop.f32.mrb[0].mxu0
        %v1364 = vadd.f32 %v1263, %v1363
        %1365 = vdwg.mxu0
        %s1366 = scalar_lea.vmem %s2, 64
        %v1367 = vld [vmem:[%s1366] sm:$0xff]
        %v1368 = vld [vmem:[%s1366 + $0x8] sm:$0xff]
        %v1369 = vld [vmem:[%s1366 + $0x10] sm:$0xff]
        %v1370 = vld [vmem:[%s1366 + $0x18] sm:$0xff]
        %v1372 = vsel %vm678, %v1367, 0
        %v1375 = vsel %vm678, %v1368, 0
        %v1378 = vsel %vm678, %v1369, 0
        %v1381 = vsel %vm678, %v1370, 0
        %1383 = vmatprep.subr.mxu0 %v998
        %1384 = vmatpush1.msra.mxu0 %v996
        %1385 = vmatprep.subr.mxu0 %v1004
        %1386 = vmatpush1.msra.mxu0 %v1002
        %1387 = vmatprep.subr.mxu0 %v1010
        %1388 = vmatpush1.msra.mxu0 %v1008
        %1389 = vmatprep.subr.mxu0 %v1016
        %1390 = vmatpush1.msra.mxu0 %v1014
        %1391 = vmatprep.subr.mxu0 %v1022
        %1392 = vmatpush1.msra.mxu0 %v1020
        %1393 = vmatprep.subr.mxu0 %v1028
        %1394 = vmatpush1.msra.mxu0 %v1026
        %1395 = vmatprep.subr.mxu0 %v1034
        %1396 = vmatpush1.msra.mxu0 %v1032
        %1397 = vmatprep.subr.mxu0 %v1040
        %1398 = vmatpush1.msra.mxu0 %v1038
        %1399 = vmatprep.subr.mxu0 0.0
        %1400 = vmatpush1.msra.mxu0 0.0
        %1401 = vmatprep.subr.mxu0 0.0
        %1402 = vmatpush1.msra.mxu0 0.0
        %1403 = vmatprep.subr.mxu0 0.0
        %1404 = vmatpush1.msra.mxu0 0.0
        %1405 = vmatprep.subr.mxu0 0.0
        %1406 = vmatpush1.msra.mxu0 0.0
        %1407 = vmatprep.subr.mxu0 0.0
        %1408 = vmatpush1.msra.mxu0 0.0
        %1409 = vmatprep.subr.mxu0 0.0
        %1410 = vmatpush1.msra.mxu0 0.0
        %1411 = vmatprep.subr.mxu0 0.0
        %1412 = vmatpush1.msra.mxu0 0.0
        %1413 = vmatprep.subr.mxu0 0.0
        %1414 = vmatpush1.msra.mxu0 0.0
        %1415 = vmatprep.subr.mxu0 0.0
        %1416 = vmatpush1.msra.mxu0 0.0
        %1417 = vmatprep.subr.mxu0 0.0
        %1418 = vmatpush1.msra.mxu0 0.0
        %1419 = vmatprep.subr.mxu0 0.0
        %1420 = vmatpush1.msra.mxu0 0.0
        %1421 = vmatprep.subr.mxu0 0.0
        %1422 = vmatpush1.msra.mxu0 0.0
        %1423 = vmatprep.subr.mxu0 0.0
        %1424 = vmatpush1.msra.mxu0 0.0
        %1425 = vmatprep.subr.mxu0 0.0
        %1426 = vmatpush1.msra.mxu0 0.0
        %1427 = vmatprep.subr.mxu0 0.0
        %1428 = vmatpush1.msra.mxu0 0.0
        %1429 = vmatprep.subr.mxu0 0.0
        %1430 = vmatpush1.msra.mxu0 0.0
        %1431 = vmatprep.subr.mxu0 0.0
        %1432 = vmatpush1.msra.mxu0 0.0
        %1433 = vmatprep.subr.mxu0 0.0
        %1434 = vmatpush1.msra.mxu0 0.0
        %1435 = vmatprep.subr.mxu0 0.0
        %1436 = vmatpush1.msra.mxu0 0.0
        %1437 = vmatprep.subr.mxu0 0.0
        %1438 = vmatpush1.msra.mxu0 0.0
        %1439 = vmatprep.subr.mxu0 0.0
        %1440 = vmatpush1.msra.mxu0 0.0
        %1441 = vmatprep.subr.mxu0 0.0
        %1442 = vmatpush1.msra.mxu0 0.0
        %1443 = vmatprep.subr.mxu0 0.0
        %1444 = vmatpush1.msra.mxu0 0.0
        %1445 = vmatprep.subr.mxu0 0.0
        %1446 = vmatpush1.msra.mxu0 0.0
        %1447 = vmatprep.mubr.f32.mxu0 0.0
        %1448 = vmatmul.mubr.f32.gmra.mrb[0].mxu0 %v1372
        %v1449 = vpop.f32.mrb[0].mxu0
        %v1450 = vadd.f32 0.0, %v1449
        %v1451 = vpop.f32.mrb[0].mxu0
        %v1452 = vadd.f32 0.0, %v1451
        %1453 = vmatprep.mubr.f32.mxu0 0.0
        %1454 = vmatmul.mubr.f32.gmra.mrb[0].mxu0 %v1375
        %v1455 = vpop.f32.mrb[0].mxu0
        %v1456 = vadd.f32 0.0, %v1455
        %v1457 = vpop.f32.mrb[0].mxu0
        %v1458 = vadd.f32 0.0, %v1457
        %1459 = vmatprep.mubr.f32.mxu0 0.0
        %1460 = vmatmul.mubr.f32.gmra.mrb[0].mxu0 %v1378
        %v1461 = vpop.f32.mrb[0].mxu0
        %v1462 = vadd.f32 0.0, %v1461
        %v1463 = vpop.f32.mrb[0].mxu0
        %v1464 = vadd.f32 0.0, %v1463
        %1465 = vmatprep.mubr.f32.mxu0 0.0
        %1466 = vmatmul.mubr.f32.gmra.mrb[0].mxu0 %v1381
        %v1467 = vpop.f32.mrb[0].mxu0
        %v1468 = vadd.f32 0.0, %v1467
        %v1469 = vpop.f32.mrb[0].mxu0
        %v1470 = vadd.f32 0.0, %v1469
        %1471 = vdwg.mxu0
        %v1472 = vadd.f32 %v1344, %v1450
        %v1473 = vadd.f32 %v1346, %v1452
        %v1474 = vadd.f32 %v1350, %v1456
        %v1475 = vadd.f32 %v1352, %v1458
        %v1476 = vadd.f32 %v1356, %v1462
        %v1477 = vadd.f32 %v1358, %v1464
        %v1478 = vadd.f32 %v1362, %v1468
        %v1479 = vadd.f32 %v1364, %v1470
        %s1480 = scalar_lea.vmem %s2, 96
        %v1481 = vld [vmem:[%s1480] sm:$0xff]
        %v1482 = vld [vmem:[%s1480 + $0x8] sm:$0xff]
        %v1483 = vld [vmem:[%s1480 + $0x10] sm:$0xff]
        %v1484 = vld [vmem:[%s1480 + $0x18] sm:$0xff]
        %v1486 = vsel %vm678, %v1481, 0
        %v1489 = vsel %vm678, %v1482, 0
        %v1492 = vsel %vm678, %v1483, 0
        %v1495 = vsel %vm678, %v1484, 0
        %1497 = vmatprep.subr.mxu0 %v1111
        %1498 = vmatpush1.msra.mxu0 %v1109
        %1499 = vmatprep.subr.mxu0 %v1117
        %1500 = vmatpush1.msra.mxu0 %v1115
        %1501 = vmatprep.subr.mxu0 %v1123
        %1502 = vmatpush1.msra.mxu0 %v1121
        %1503 = vmatprep.subr.mxu0 %v1129
        %1504 = vmatpush1.msra.mxu0 %v1127
        %1505 = vmatprep.subr.mxu0 %v1135
        %1506 = vmatpush1.msra.mxu0 %v1133
        %1507 = vmatprep.subr.mxu0 %v1141
        %1508 = vmatpush1.msra.mxu0 %v1139
        %1509 = vmatprep.subr.mxu0 %v1147
        %1510 = vmatpush1.msra.mxu0 %v1145
        %1511 = vmatprep.subr.mxu0 %v1153
        %1512 = vmatpush1.msra.mxu0 %v1151
        %1513 = vmatprep.subr.mxu0 0.0
        %1514 = vmatpush1.msra.mxu0 0.0
        %1515 = vmatprep.subr.mxu0 0.0
        %1516 = vmatpush1.msra.mxu0 0.0
        %1517 = vmatprep.subr.mxu0 0.0
        %1518 = vmatpush1.msra.mxu0 0.0
        %1519 = vmatprep.subr.mxu0 0.0
        %1520 = vmatpush1.msra.mxu0 0.0
        %1521 = vmatprep.subr.mxu0 0.0
        %1522 = vmatpush1.msra.mxu0 0.0
        %1523 = vmatprep.subr.mxu0 0.0
        %1524 = vmatpush1.msra.mxu0 0.0
        %1525 = vmatprep.subr.mxu0 0.0
        %1526 = vmatpush1.msra.mxu0 0.0
        %1527 = vmatprep.subr.mxu0 0.0
        %1528 = vmatpush1.msra.mxu0 0.0
        %1529 = vmatprep.subr.mxu0 0.0
        %1530 = vmatpush1.msra.mxu0 0.0
        %1531 = vmatprep.subr.mxu0 0.0
        %1532 = vmatpush1.msra.mxu0 0.0
        %1533 = vmatprep.subr.mxu0 0.0
        %1534 = vmatpush1.msra.mxu0 0.0
        %1535 = vmatprep.subr.mxu0 0.0
        %1536 = vmatpush1.msra.mxu0 0.0
        %1537 = vmatprep.subr.mxu0 0.0
        %1538 = vmatpush1.msra.mxu0 0.0
        %1539 = vmatprep.subr.mxu0 0.0
        %1540 = vmatpush1.msra.mxu0 0.0
        %1541 = vmatprep.subr.mxu0 0.0
        %1542 = vmatpush1.msra.mxu0 0.0
        %1543 = vmatprep.subr.mxu0 0.0
        %1544 = vmatpush1.msra.mxu0 0.0
        %1545 = vmatprep.subr.mxu0 0.0
        %1546 = vmatpush1.msra.mxu0 0.0
        %1547 = vmatprep.subr.mxu0 0.0
        %1548 = vmatpush1.msra.mxu0 0.0
        %1549 = vmatprep.subr.mxu0 0.0
        %1550 = vmatpush1.msra.mxu0 0.0
        %1551 = vmatprep.subr.mxu0 0.0
        %1552 = vmatpush1.msra.mxu0 0.0
        %1553 = vmatprep.subr.mxu0 0.0
        %1554 = vmatpush1.msra.mxu0 0.0
        %1555 = vmatprep.subr.mxu0 0.0
        %1556 = vmatpush1.msra.mxu0 0.0
        %1557 = vmatprep.subr.mxu0 0.0
        %1558 = vmatpush1.msra.mxu0 0.0
        %1559 = vmatprep.subr.mxu0 0.0
        %1560 = vmatpush1.msra.mxu0 0.0
        %1561 = vmatprep.mubr.f32.mxu0 0.0
        %1562 = vmatmul.mubr.f32.gmra.mrb[0].mxu0 %v1486
        %v1563 = vpop.f32.mrb[0].mxu0
        %v1564 = vadd.f32 0.0, %v1563
        %v1565 = vpop.f32.mrb[0].mxu0
        %v1566 = vadd.f32 0.0, %v1565
        %1567 = vmatprep.mubr.f32.mxu0 0.0
        %1568 = vmatmul.mubr.f32.gmra.mrb[0].mxu0 %v1489
        %v1569 = vpop.f32.mrb[0].mxu0
        %v1570 = vadd.f32 0.0, %v1569
        %v1571 = vpop.f32.mrb[0].mxu0
        %v1572 = vadd.f32 0.0, %v1571
        %1573 = vmatprep.mubr.f32.mxu0 0.0
        %1574 = vmatmul.mubr.f32.gmra.mrb[0].mxu0 %v1492
        %v1575 = vpop.f32.mrb[0].mxu0
        %v1576 = vadd.f32 0.0, %v1575
        %v1577 = vpop.f32.mrb[0].mxu0
        %v1578 = vadd.f32 0.0, %v1577
        %1579 = vmatprep.mubr.f32.mxu0 0.0
        %1580 = vmatmul.mubr.f32.gmra.mrb[0].mxu0 %v1495
        %v1581 = vpop.f32.mrb[0].mxu0
        %v1582 = vadd.f32 0.0, %v1581
        %v1583 = vpop.f32.mrb[0].mxu0
        %v1584 = vadd.f32 0.0, %v1583
        %1585 = vdwg.mxu0
        %v1586 = vadd.f32 %v1472, %v1564
        %v1587 = vadd.f32 %v1473, %v1566
        %v1588 = vadd.f32 %v1474, %v1570
        %v1589 = vadd.f32 %v1475, %v1572
        %v1590 = vadd.f32 %v1476, %v1576
        %v1591 = vadd.f32 %v1477, %v1578
        %v1592 = vadd.f32 %v1478, %v1582
        %v1593 = vadd.f32 %v1479, %v1584
        %v1594 = vmax.f32 %v1586, 0.0
        %v1595 = vmax.f32 %v1587, 0.0
        %v1596 = vmax.f32 %v1588, 0.0
        %v1597 = vmax.f32 %v1589, 0.0
        %v1598 = vmax.f32 %v1590, 0.0
        %v1599 = vmax.f32 %v1591, 0.0
        %v1600 = vmax.f32 %v1592, 0.0
        %v1601 = vmax.f32 %v1593, 0.0
        %v1602 = vld [vmem:[#allocation5] sm:$0xff]
        %v1603 = vld [vmem:[#allocation5 + $0x8] sm:$0xff]
        %v1604 = vld [vmem:[#allocation5 + $0x10] sm:$0xff]
        %v1605 = vld [vmem:[#allocation5 + $0x18] sm:$0xff]
        %v1606 = vld [vmem:[#allocation5 + $0x20] sm:$0xff]
        %v1607 = vld [vmem:[#allocation5 + $0x28] sm:$0xff]
        %v1608 = vld [vmem:[#allocation5 + $0x30] sm:$0xff]
        %v1609 = vld [vmem:[#allocation5 + $0x38] sm:$0xff]
        %v1610 = vld [vmem:[#allocation5 + $0x40] sm:$0xff]
        %v1611 = vld [vmem:[#allocation5 + $0x48] sm:$0xff]
        %v1612 = vld [vmem:[#allocation5 + $0x50] sm:$0xff]
        %v1613 = vld [vmem:[#allocation5 + $0x58] sm:$0xff]
        %v1614 = vld [vmem:[#allocation5 + $0x60] sm:$0xff]
        %v1615 = vld [vmem:[#allocation5 + $0x68] sm:$0xff]
        %v1616 = vld [vmem:[#allocation5 + $0x70] sm:$0xff]
        %v1617 = vld [vmem:[#allocation5 + $0x78] sm:$0xff]
        %v1618 = vld [vmem:[#allocation5 + $0x80] sm:$0xff]
        %v1619 = vld [vmem:[#allocation5 + $0x88] sm:$0xff]
        %v1620 = vld [vmem:[#allocation5 + $0x90] sm:$0xff]
        %v1621 = vld [vmem:[#allocation5 + $0x98] sm:$0xff]
        %v1622 = vld [vmem:[#allocation5 + $0xa0] sm:$0xff]
        %v1623 = vld [vmem:[#allocation5 + $0xa8] sm:$0xff]
        %v1624 = vld [vmem:[#allocation5 + $0xb0] sm:$0xff]
        %v1625 = vld [vmem:[#allocation5 + $0xb8] sm:$0xff]
        %v1626 = vld [vmem:[#allocation5 + $0xc0] sm:$0xff]
        %v1627 = vld [vmem:[#allocation5 + $0xc8] sm:$0xff]
        %v1628 = vld [vmem:[#allocation5 + $0xd0] sm:$0xff]
        %v1629 = vld [vmem:[#allocation5 + $0xd8] sm:$0xff]
        %v1630 = vld [vmem:[#allocation5 + $0xe0] sm:$0xff]
        %v1631 = vld [vmem:[#allocation5 + $0xe8] sm:$0xff]
        %v1632 = vld [vmem:[#allocation5 + $0xf0] sm:$0xff]
        %v1633 = vld [vmem:[#allocation5 + $0xf8] sm:$0xff]
        %v1634 = vld [vmem:[#allocation5 + $0x100] sm:$0xff]
        %v1635 = vld [vmem:[#allocation5 + $0x108] sm:$0xff]
        %v1636 = vld [vmem:[#allocation5 + $0x110] sm:$0xff]
        %v1637 = vld [vmem:[#allocation5 + $0x118] sm:$0xff]
        %v1638 = vld [vmem:[#allocation5 + $0x120] sm:$0xff]
        %v1639 = vld [vmem:[#allocation5 + $0x128] sm:$0xff]
        %v1640 = vld [vmem:[#allocation5 + $0x130] sm:$0xff]
        %v1641 = vld [vmem:[#allocation5 + $0x138] sm:$0xff]
        %v1642 = vld [vmem:[#allocation5 + $0x140] sm:$0xff]
        %v1643 = vld [vmem:[#allocation5 + $0x148] sm:$0xff]
        %v1644 = vld [vmem:[#allocation5 + $0x150] sm:$0xff]
        %v1645 = vld [vmem:[#allocation5 + $0x158] sm:$0xff]
        %v1646 = vld [vmem:[#allocation5 + $0x160] sm:$0xff]
        %v1647 = vld [vmem:[#allocation5 + $0x168] sm:$0xff]
        %v1648 = vld [vmem:[#allocation5 + $0x170] sm:$0xff]
        %v1649 = vld [vmem:[#allocation5 + $0x178] sm:$0xff]
        %v1650 = vld [vmem:[#allocation5 + $0x180] sm:$0xff]
        %v1651 = vld [vmem:[#allocation5 + $0x188] sm:$0xff]
        %v1652 = vld [vmem:[#allocation5 + $0x190] sm:$0xff]
        %v1653 = vld [vmem:[#allocation5 + $0x198] sm:$0xff]
        %v1654 = vld [vmem:[#allocation5 + $0x1a0] sm:$0xff]
        %v1655 = vld [vmem:[#allocation5 + $0x1a8] sm:$0xff]
        %v1656 = vld [vmem:[#allocation5 + $0x1b0] sm:$0xff]
        %v1657 = vld [vmem:[#allocation5 + $0x1b8] sm:$0xff]
        %v1658 = vld [vmem:[#allocation5 + $0x1c0] sm:$0xff]
        %v1659 = vld [vmem:[#allocation5 + $0x1c8] sm:$0xff]
        %v1660 = vld [vmem:[#allocation5 + $0x1d0] sm:$0xff]
        %v1661 = vld [vmem:[#allocation5 + $0x1d8] sm:$0xff]
        %v1662 = vld [vmem:[#allocation5 + $0x1e0] sm:$0xff]
        %v1663 = vld [vmem:[#allocation5 + $0x1e8] sm:$0xff]
        %v1664 = vld [vmem:[#allocation5 + $0x1f0] sm:$0xff]
        %v1665 = vld [vmem:[#allocation5 + $0x1f8] sm:$0xff]
        %v1666 = vld [vmem:[#allocation5 + $0x200] sm:$0xff]
        %v1667 = vld [vmem:[#allocation5 + $0x208] sm:$0xff]
        %v1668 = vld [vmem:[#allocation5 + $0x210] sm:$0xff]
        %v1669 = vld [vmem:[#allocation5 + $0x218] sm:$0xff]
        %v1670 = vld [vmem:[#allocation5 + $0x220] sm:$0xff]
        %v1671 = vld [vmem:[#allocation5 + $0x228] sm:$0xff]
        %v1672 = vld [vmem:[#allocation5 + $0x230] sm:$0xff]
        %v1673 = vld [vmem:[#allocation5 + $0x238] sm:$0xff]
        %v1674 = vld [vmem:[#allocation5 + $0x240] sm:$0xff]
        %v1675 = vld [vmem:[#allocation5 + $0x248] sm:$0xff]
        %v1676 = vld [vmem:[#allocation5 + $0x250] sm:$0xff]
        %v1677 = vld [vmem:[#allocation5 + $0x258] sm:$0xff]
        %v1678 = vld [vmem:[#allocation5 + $0x260] sm:$0xff]
        %v1679 = vld [vmem:[#allocation5 + $0x268] sm:$0xff]
        %v1680 = vld [vmem:[#allocation5 + $0x270] sm:$0xff]
        %v1681 = vld [vmem:[#allocation5 + $0x278] sm:$0xff]
        %v1682 = vld [vmem:[#allocation5 + $0x280] sm:$0xff]
        %v1683 = vld [vmem:[#allocation5 + $0x288] sm:$0xff]
        %v1684 = vld [vmem:[#allocation5 + $0x290] sm:$0xff]
        %v1685 = vld [vmem:[#allocation5 + $0x298] sm:$0xff]
        %v1686 = vld [vmem:[#allocation5 + $0x2a0] sm:$0xff]
        %v1687 = vld [vmem:[#allocation5 + $0x2a8] sm:$0xff]
        %v1688 = vld [vmem:[#allocation5 + $0x2b0] sm:$0xff]
        %v1689 = vld [vmem:[#allocation5 + $0x2b8] sm:$0xff]
        %v1690 = vld [vmem:[#allocation5 + $0x2c0] sm:$0xff]
        %v1691 = vld [vmem:[#allocation5 + $0x2c8] sm:$0xff]
        %v1692 = vld [vmem:[#allocation5 + $0x2d0] sm:$0xff]
        %v1693 = vld [vmem:[#allocation5 + $0x2d8] sm:$0xff]
        %v1694 = vld [vmem:[#allocation5 + $0x2e0] sm:$0xff]
        %v1695 = vld [vmem:[#allocation5 + $0x2e8] sm:$0xff]
        %v1696 = vld [vmem:[#allocation5 + $0x2f0] sm:$0xff]
        %v1697 = vld [vmem:[#allocation5 + $0x2f8] sm:$0xff]
        %v1698 = vld [vmem:[#allocation5 + $0x300] sm:$0xff]
        %v1699 = vld [vmem:[#allocation5 + $0x308] sm:$0xff]
        %v1700 = vld [vmem:[#allocation5 + $0x310] sm:$0xff]
        %v1701 = vld [vmem:[#allocation5 + $0x318] sm:$0xff]
        %v1702 = vld [vmem:[#allocation5 + $0x320] sm:$0xff]
        %v1703 = vld [vmem:[#allocation5 + $0x328] sm:$0xff]
        %v1704 = vld [vmem:[#allocation5 + $0x330] sm:$0xff]
        %v1705 = vld [vmem:[#allocation5 + $0x338] sm:$0xff]
        %v1706 = vld [vmem:[#allocation5 + $0x340] sm:$0xff]
        %v1707 = vld [vmem:[#allocation5 + $0x348] sm:$0xff]
        %v1708 = vld [vmem:[#allocation5 + $0x350] sm:$0xff]
        %v1709 = vld [vmem:[#allocation5 + $0x358] sm:$0xff]
        %v1710 = vld [vmem:[#allocation5 + $0x360] sm:$0xff]
        %v1711 = vld [vmem:[#allocation5 + $0x368] sm:$0xff]
        %v1712 = vld [vmem:[#allocation5 + $0x370] sm:$0xff]
        %v1713 = vld [vmem:[#allocation5 + $0x378] sm:$0xff]
        %v1714 = vld [vmem:[#allocation5 + $0x380] sm:$0xff]
        %v1715 = vld [vmem:[#allocation5 + $0x388] sm:$0xff]
        %v1716 = vld [vmem:[#allocation5 + $0x390] sm:$0xff]
        %v1717 = vld [vmem:[#allocation5 + $0x398] sm:$0xff]
        %v1718 = vld [vmem:[#allocation5 + $0x3a0] sm:$0xff]
        %v1719 = vld [vmem:[#allocation5 + $0x3a8] sm:$0xff]
        %v1720 = vld [vmem:[#allocation5 + $0x3b0] sm:$0xff]
        %v1721 = vld [vmem:[#allocation5 + $0x3b8] sm:$0xff]
        %v1722 = vld [vmem:[#allocation5 + $0x3c0] sm:$0xff]
        %v1723 = vld [vmem:[#allocation5 + $0x3c8] sm:$0xff]
        %v1724 = vld [vmem:[#allocation5 + $0x3d0] sm:$0xff]
        %v1725 = vld [vmem:[#allocation5 + $0x3d8] sm:$0xff]
        %v1726 = vld [vmem:[#allocation5 + $0x3e0] sm:$0xff]
        %v1727 = vld [vmem:[#allocation5 + $0x3e8] sm:$0xff]
        %v1728 = vld [vmem:[#allocation5 + $0x3f0] sm:$0xff]
        %v1729 = vld [vmem:[#allocation5 + $0x3f8] sm:$0xff]
        %v1730 = vld [vmem:[#allocation5 + $0x400] sm:$0xff]
        %v1731 = vld [vmem:[#allocation5 + $0x408] sm:$0xff]
        %v1732 = vld [vmem:[#allocation5 + $0x410] sm:$0xff]
        %v1733 = vld [vmem:[#allocation5 + $0x418] sm:$0xff]
        %v1734 = vld [vmem:[#allocation5 + $0x420] sm:$0xff]
        %v1735 = vld [vmem:[#allocation5 + $0x428] sm:$0xff]
        %v1736 = vld [vmem:[#allocation5 + $0x430] sm:$0xff]
        %v1737 = vld [vmem:[#allocation5 + $0x438] sm:$0xff]
        %v1738 = vld [vmem:[#allocation5 + $0x440] sm:$0xff]
        %v1739 = vld [vmem:[#allocation5 + $0x448] sm:$0xff]
        %v1740 = vld [vmem:[#allocation5 + $0x450] sm:$0xff]
        %v1741 = vld [vmem:[#allocation5 + $0x458] sm:$0xff]
        %v1742 = vld [vmem:[#allocation5 + $0x460] sm:$0xff]
        %v1743 = vld [vmem:[#allocation5 + $0x468] sm:$0xff]
        %v1744 = vld [vmem:[#allocation5 + $0x470] sm:$0xff]
        %v1745 = vld [vmem:[#allocation5 + $0x478] sm:$0xff]
        %v1746 = vld [vmem:[#allocation5 + $0x480] sm:$0xff]
        %v1747 = vld [vmem:[#allocation5 + $0x488] sm:$0xff]
        %v1748 = vld [vmem:[#allocation5 + $0x490] sm:$0xff]
        %v1749 = vld [vmem:[#allocation5 + $0x498] sm:$0xff]
        %v1750 = vld [vmem:[#allocation5 + $0x4a0] sm:$0xff]
        %v1751 = vld [vmem:[#allocation5 + $0x4a8] sm:$0xff]
        %v1752 = vld [vmem:[#allocation5 + $0x4b0] sm:$0xff]
        %v1753 = vld [vmem:[#allocation5 + $0x4b8] sm:$0xff]
        %v1754 = vld [vmem:[#allocation5 + $0x4c0] sm:$0xff]
        %v1755 = vld [vmem:[#allocation5 + $0x4c8] sm:$0xff]
        %v1756 = vld [vmem:[#allocation5 + $0x4d0] sm:$0xff]
        %v1757 = vld [vmem:[#allocation5 + $0x4d8] sm:$0xff]
        %v1758 = vld [vmem:[#allocation5 + $0x4e0] sm:$0xff]
        %v1759 = vld [vmem:[#allocation5 + $0x4e8] sm:$0xff]
        %v1760 = vld [vmem:[#allocation5 + $0x4f0] sm:$0xff]
        %v1761 = vld [vmem:[#allocation5 + $0x4f8] sm:$0xff]
        %v1762 = vld [vmem:[#allocation5 + $0x500] sm:$0xff]
        %v1763 = vld [vmem:[#allocation5 + $0x508] sm:$0xff]
        %v1764 = vld [vmem:[#allocation5 + $0x510] sm:$0xff]
        %v1765 = vld [vmem:[#allocation5 + $0x518] sm:$0xff]
        %v1766 = vld [vmem:[#allocation5 + $0x520] sm:$0xff]
        %v1767 = vld [vmem:[#allocation5 + $0x528] sm:$0xff]
        %v1768 = vld [vmem:[#allocation5 + $0x530] sm:$0xff]
        %v1769 = vld [vmem:[#allocation5 + $0x538] sm:$0xff]
        %v1770 = vld [vmem:[#allocation5 + $0x540] sm:$0xff]
        %v1771 = vld [vmem:[#allocation5 + $0x548] sm:$0xff]
        %v1772 = vld [vmem:[#allocation5 + $0x550] sm:$0xff]
        %v1773 = vld [vmem:[#allocation5 + $0x558] sm:$0xff]
        %v1774 = vld [vmem:[#allocation5 + $0x560] sm:$0xff]
        %v1775 = vld [vmem:[#allocation5 + $0x568] sm:$0xff]
        %v1776 = vld [vmem:[#allocation5 + $0x570] sm:$0xff]
        %v1777 = vld [vmem:[#allocation5 + $0x578] sm:$0xff]
        %v1778 = vld [vmem:[#allocation5 + $0x580] sm:$0xff]
        %v1779 = vld [vmem:[#allocation5 + $0x588] sm:$0xff]
        %v1780 = vld [vmem:[#allocation5 + $0x590] sm:$0xff]
        %v1781 = vld [vmem:[#allocation5 + $0x598] sm:$0xff]
        %v1782 = vld [vmem:[#allocation5 + $0x5a0] sm:$0xff]
        %v1783 = vld [vmem:[#allocation5 + $0x5a8] sm:$0xff]
        %v1784 = vld [vmem:[#allocation5 + $0x5b0] sm:$0xff]
        %v1785 = vld [vmem:[#allocation5 + $0x5b8] sm:$0xff]
        %v1786 = vld [vmem:[#allocation5 + $0x5c0] sm:$0xff]
        %v1787 = vld [vmem:[#allocation5 + $0x5c8] sm:$0xff]
        %v1788 = vld [vmem:[#allocation5 + $0x5d0] sm:$0xff]
        %v1789 = vld [vmem:[#allocation5 + $0x5d8] sm:$0xff]
        %v1790 = vld [vmem:[#allocation5 + $0x5e0] sm:$0xff]
        %v1791 = vld [vmem:[#allocation5 + $0x5e8] sm:$0xff]
        %v1792 = vld [vmem:[#allocation5 + $0x5f0] sm:$0xff]
        %v1793 = vld [vmem:[#allocation5 + $0x5f8] sm:$0xff]
        %v1794 = vld [vmem:[#allocation5 + $0x600] sm:$0xff]
        %v1795 = vld [vmem:[#allocation5 + $0x608] sm:$0xff]
        %v1796 = vld [vmem:[#allocation5 + $0x610] sm:$0xff]
        %v1797 = vld [vmem:[#allocation5 + $0x618] sm:$0xff]
        %v1798 = vld [vmem:[#allocation5 + $0x620] sm:$0xff]
        %v1799 = vld [vmem:[#allocation5 + $0x628] sm:$0xff]
        %v1800 = vld [vmem:[#allocation5 + $0x630] sm:$0xff]
        %v1801 = vld [vmem:[#allocation5 + $0x638] sm:$0xff]
        %v1802 = vld [vmem:[#allocation5 + $0x640] sm:$0xff]
        %v1803 = vld [vmem:[#allocation5 + $0x648] sm:$0xff]
        %v1804 = vld [vmem:[#allocation5 + $0x650] sm:$0xff]
        %v1805 = vld [vmem:[#allocation5 + $0x658] sm:$0xff]
        %v1806 = vld [vmem:[#allocation5 + $0x660] sm:$0xff]
        %v1807 = vld [vmem:[#allocation5 + $0x668] sm:$0xff]
        %v1808 = vld [vmem:[#allocation5 + $0x670] sm:$0xff]
        %v1809 = vld [vmem:[#allocation5 + $0x678] sm:$0xff]
        %v1810 = vld [vmem:[#allocation5 + $0x680] sm:$0xff]
        %v1811 = vld [vmem:[#allocation5 + $0x688] sm:$0xff]
        %v1812 = vld [vmem:[#allocation5 + $0x690] sm:$0xff]
        %v1813 = vld [vmem:[#allocation5 + $0x698] sm:$0xff]
        %v1814 = vld [vmem:[#allocation5 + $0x6a0] sm:$0xff]
        %v1815 = vld [vmem:[#allocation5 + $0x6a8] sm:$0xff]
        %v1816 = vld [vmem:[#allocation5 + $0x6b0] sm:$0xff]
        %v1817 = vld [vmem:[#allocation5 + $0x6b8] sm:$0xff]
        %v1818 = vld [vmem:[#allocation5 + $0x6c0] sm:$0xff]
        %v1819 = vld [vmem:[#allocation5 + $0x6c8] sm:$0xff]
        %v1820 = vld [vmem:[#allocation5 + $0x6d0] sm:$0xff]
        %v1821 = vld [vmem:[#allocation5 + $0x6d8] sm:$0xff]
        %v1822 = vld [vmem:[#allocation5 + $0x6e0] sm:$0xff]
        %v1823 = vld [vmem:[#allocation5 + $0x6e8] sm:$0xff]
        %v1824 = vld [vmem:[#allocation5 + $0x6f0] sm:$0xff]
        %v1825 = vld [vmem:[#allocation5 + $0x6f8] sm:$0xff]
        %v1826 = vld [vmem:[#allocation5 + $0x700] sm:$0xff]
        %v1827 = vld [vmem:[#allocation5 + $0x708] sm:$0xff]
        %v1828 = vld [vmem:[#allocation5 + $0x710] sm:$0xff]
        %v1829 = vld [vmem:[#allocation5 + $0x718] sm:$0xff]
        %v1830 = vld [vmem:[#allocation5 + $0x720] sm:$0xff]
        %v1831 = vld [vmem:[#allocation5 + $0x728] sm:$0xff]
        %v1832 = vld [vmem:[#allocation5 + $0x730] sm:$0xff]
        %v1833 = vld [vmem:[#allocation5 + $0x738] sm:$0xff]
        %v1834 = vld [vmem:[#allocation5 + $0x740] sm:$0xff]
        %v1835 = vld [vmem:[#allocation5 + $0x748] sm:$0xff]
        %v1836 = vld [vmem:[#allocation5 + $0x750] sm:$0xff]
        %v1837 = vld [vmem:[#allocation5 + $0x758] sm:$0xff]
        %v1838 = vld [vmem:[#allocation5 + $0x760] sm:$0xff]
        %v1839 = vld [vmem:[#allocation5 + $0x768] sm:$0xff]
        %v1840 = vld [vmem:[#allocation5 + $0x770] sm:$0xff]
        %v1841 = vld [vmem:[#allocation5 + $0x778] sm:$0xff]
        %v1842 = vld [vmem:[#allocation5 + $0x780] sm:$0xff]
        %v1843 = vld [vmem:[#allocation5 + $0x788] sm:$0xff]
        %v1844 = vld [vmem:[#allocation5 + $0x790] sm:$0xff]
        %v1845 = vld [vmem:[#allocation5 + $0x798] sm:$0xff]
        %v1846 = vld [vmem:[#allocation5 + $0x7a0] sm:$0xff]
        %v1847 = vld [vmem:[#allocation5 + $0x7a8] sm:$0xff]
        %v1848 = vld [vmem:[#allocation5 + $0x7b0] sm:$0xff]
        %v1849 = vld [vmem:[#allocation5 + $0x7b8] sm:$0xff]
        %v1850 = vld [vmem:[#allocation5 + $0x7c0] sm:$0xff]
        %v1851 = vld [vmem:[#allocation5 + $0x7c8] sm:$0xff]
        %v1852 = vld [vmem:[#allocation5 + $0x7d0] sm:$0xff]
        %v1853 = vld [vmem:[#allocation5 + $0x7d8] sm:$0xff]
        %v1854 = vld [vmem:[#allocation5 + $0x7e0] sm:$0xff]
        %v1855 = vld [vmem:[#allocation5 + $0x7e8] sm:$0xff]
        %v1856 = vld [vmem:[#allocation5 + $0x7f0] sm:$0xff]
        %v1857 = vld [vmem:[#allocation5 + $0x7f8] sm:$0xff]
        %1858 = vmatprep.subr.mxu0 %v1603
        %1859 = vmatpush1.msra.mxu0 %v1602
        %1860 = vmatprep.subr.mxu0 %v1611
        %1861 = vmatpush1.msra.mxu0 %v1610
        %1862 = vmatprep.subr.mxu0 %v1619
        %1863 = vmatpush1.msra.mxu0 %v1618
        %1864 = vmatprep.subr.mxu0 %v1627
        %1865 = vmatpush1.msra.mxu0 %v1626
        %1866 = vmatprep.subr.mxu0 %v1635
        %1867 = vmatpush1.msra.mxu0 %v1634
        %1868 = vmatprep.subr.mxu0 %v1643
        %1869 = vmatpush1.msra.mxu0 %v1642
        %1870 = vmatprep.subr.mxu0 %v1651
        %1871 = vmatpush1.msra.mxu0 %v1650
        %1872 = vmatprep.subr.mxu0 %v1659
        %1873 = vmatpush1.msra.mxu0 %v1658
        %1874 = vmatprep.subr.mxu0 %v1667
        %1875 = vmatpush1.msra.mxu0 %v1666
        %1876 = vmatprep.subr.mxu0 %v1675
        %1877 = vmatpush1.msra.mxu0 %v1674
        %1878 = vmatprep.subr.mxu0 %v1683
        %1879 = vmatpush1.msra.mxu0 %v1682
        %1880 = vmatprep.subr.mxu0 %v1691
        %1881 = vmatpush1.msra.mxu0 %v1690
        %1882 = vmatprep.subr.mxu0 %v1699
        %1883 = vmatpush1.msra.mxu0 %v1698
        %1884 = vmatprep.subr.mxu0 %v1707
        %1885 = vmatpush1.msra.mxu0 %v1706
        %1886 = vmatprep.subr.mxu0 %v1715
        %1887 = vmatpush1.msra.mxu0 %v1714
        %1888 = vmatprep.subr.mxu0 %v1723
        %1889 = vmatpush1.msra.mxu0 %v1722
        %1890 = vmatprep.subr.mxu0 %v1731
        %1891 = vmatpush1.msra.mxu0 %v1730
        %1892 = vmatprep.subr.mxu0 %v1739
        %1893 = vmatpush1.msra.mxu0 %v1738
        %1894 = vmatprep.subr.mxu0 %v1747
        %1895 = vmatpush1.msra.mxu0 %v1746
        %1896 = vmatprep.subr.mxu0 %v1755
        %1897 = vmatpush1.msra.mxu0 %v1754
        %1898 = vmatprep.subr.mxu0 %v1763
        %1899 = vmatpush1.msra.mxu0 %v1762
        %1900 = vmatprep.subr.mxu0 %v1771
        %1901 = vmatpush1.msra.mxu0 %v1770
        %1902 = vmatprep.subr.mxu0 %v1779
        %1903 = vmatpush1.msra.mxu0 %v1778
        %1904 = vmatprep.subr.mxu0 %v1787
        %1905 = vmatpush1.msra.mxu0 %v1786
        %1906 = vmatprep.subr.mxu0 %v1795
        %1907 = vmatpush1.msra.mxu0 %v1794
        %1908 = vmatprep.subr.mxu0 %v1803
        %1909 = vmatpush1.msra.mxu0 %v1802
        %1910 = vmatprep.subr.mxu0 %v1811
        %1911 = vmatpush1.msra.mxu0 %v1810
        %1912 = vmatprep.subr.mxu0 %v1819
        %1913 = vmatpush1.msra.mxu0 %v1818
        %1914 = vmatprep.subr.mxu0 %v1827
        %1915 = vmatpush1.msra.mxu0 %v1826
        %1916 = vmatprep.subr.mxu0 %v1835
        %1917 = vmatpush1.msra.mxu0 %v1834
        %1918 = vmatprep.subr.mxu0 %v1843
        %1919 = vmatpush1.msra.mxu0 %v1842
        %1920 = vmatprep.subr.mxu0 %v1851
        %1921 = vmatpush1.msra.mxu0 %v1850
        %1922 = vmatprep.mubr.f32.mxu0 %v1595
        %1923 = vmatmul.mubr.f32.gmra.mrb[0].mxu0 %v1594
        %v1924 = vpop.f32.mrb[0].mxu0
        %v1925 = vadd.f32 0.0, %v1924
        %v1926 = vpop.f32.mrb[0].mxu0
        %v1927 = vadd.f32 0.0, %v1926
        %1928 = vmatprep.mubr.f32.mxu0 %v1597
        %1929 = vmatmul.mubr.f32.gmra.mrb[0].mxu0 %v1596
        %v1930 = vpop.f32.mrb[0].mxu0
        %v1931 = vadd.f32 0.0, %v1930
        %v1932 = vpop.f32.mrb[0].mxu0
        %v1933 = vadd.f32 0.0, %v1932
        %1934 = vmatprep.mubr.f32.mxu0 %v1599
        %1935 = vmatmul.mubr.f32.gmra.mrb[0].mxu0 %v1598
        %v1936 = vpop.f32.mrb[0].mxu0
        %v1937 = vadd.f32 0.0, %v1936
        %v1938 = vpop.f32.mrb[0].mxu0
        %v1939 = vadd.f32 0.0, %v1938
        %1940 = vmatprep.mubr.f32.mxu0 %v1601
        %1941 = vmatmul.mubr.f32.gmra.mrb[0].mxu0 %v1600
        %v1942 = vpop.f32.mrb[0].mxu0
        %v1943 = vadd.f32 0.0, %v1942
        %v1944 = vpop.f32.mrb[0].mxu0
        %v1945 = vadd.f32 0.0, %v1944
        %1946 = vdwg.mxu0
        %1947 = vmatprep.subr.mxu0 %v1605
        %1948 = vmatpush1.msra.mxu0 %v1604
        %1949 = vmatprep.subr.mxu0 %v1613
        %1950 = vmatpush1.msra.mxu0 %v1612
        %1951 = vmatprep.subr.mxu0 %v1621
        %1952 = vmatpush1.msra.mxu0 %v1620
        %1953 = vmatprep.subr.mxu0 %v1629
        %1954 = vmatpush1.msra.mxu0 %v1628
        %1955 = vmatprep.subr.mxu0 %v1637
        %1956 = vmatpush1.msra.mxu0 %v1636
        %1957 = vmatprep.subr.mxu0 %v1645
        %1958 = vmatpush1.msra.mxu0 %v1644
        %1959 = vmatprep.subr.mxu0 %v1653
        %1960 = vmatpush1.msra.mxu0 %v1652
        %1961 = vmatprep.subr.mxu0 %v1661
        %1962 = vmatpush1.msra.mxu0 %v1660
        %1963 = vmatprep.subr.mxu0 %v1669
        %1964 = vmatpush1.msra.mxu0 %v1668
        %1965 = vmatprep.subr.mxu0 %v1677
        %1966 = vmatpush1.msra.mxu0 %v1676
        %1967 = vmatprep.subr.mxu0 %v1685
        %1968 = vmatpush1.msra.mxu0 %v1684
        %1969 = vmatprep.subr.mxu0 %v1693
        %1970 = vmatpush1.msra.mxu0 %v1692
        %1971 = vmatprep.subr.mxu0 %v1701
        %1972 = vmatpush1.msra.mxu0 %v1700
        %1973 = vmatprep.subr.mxu0 %v1709
        %1974 = vmatpush1.msra.mxu0 %v1708
        %1975 = vmatprep.subr.mxu0 %v1717
        %1976 = vmatpush1.msra.mxu0 %v1716
        %1977 = vmatprep.subr.mxu0 %v1725
        %1978 = vmatpush1.msra.mxu0 %v1724
        %1979 = vmatprep.subr.mxu0 %v1733
        %1980 = vmatpush1.msra.mxu0 %v1732
        %1981 = vmatprep.subr.mxu0 %v1741
        %1982 = vmatpush1.msra.mxu0 %v1740
        %1983 = vmatprep.subr.mxu0 %v1749
        %1984 = vmatpush1.msra.mxu0 %v1748
        %1985 = vmatprep.subr.mxu0 %v1757
        %1986 = vmatpush1.msra.mxu0 %v1756
        %1987 = vmatprep.subr.mxu0 %v1765
        %1988 = vmatpush1.msra.mxu0 %v1764
        %1989 = vmatprep.subr.mxu0 %v1773
        %1990 = vmatpush1.msra.mxu0 %v1772
        %1991 = vmatprep.subr.mxu0 %v1781
        %1992 = vmatpush1.msra.mxu0 %v1780
        %1993 = vmatprep.subr.mxu0 %v1789
        %1994 = vmatpush1.msra.mxu0 %v1788
        %1995 = vmatprep.subr.mxu0 %v1797
        %1996 = vmatpush1.msra.mxu0 %v1796
        %1997 = vmatprep.subr.mxu0 %v1805
        %1998 = vmatpush1.msra.mxu0 %v1804
        %1999 = vmatprep.subr.mxu0 %v1813
        %2000 = vmatpush1.msra.mxu0 %v1812
        %2001 = vmatprep.subr.mxu0 %v1821
        %2002 = vmatpush1.msra.mxu0 %v1820
        %2003 = vmatprep.subr.mxu0 %v1829
        %2004 = vmatpush1.msra.mxu0 %v1828
        %2005 = vmatprep.subr.mxu0 %v1837
        %2006 = vmatpush1.msra.mxu0 %v1836
        %2007 = vmatprep.subr.mxu0 %v1845
        %2008 = vmatpush1.msra.mxu0 %v1844
        %2009 = vmatprep.subr.mxu0 %v1853
        %2010 = vmatpush1.msra.mxu0 %v1852
        %2011 = vmatprep.mubr.f32.mxu0 %v1595
        %2012 = vmatmul.mubr.f32.gmra.mrb[0].mxu0 %v1594
        %v2013 = vpop.f32.mrb[0].mxu0
        %v2014 = vadd.f32 0.0, %v2013
        %v2015 = vpop.f32.mrb[0].mxu0
        %v2016 = vadd.f32 0.0, %v2015
        %2017 = vmatprep.mubr.f32.mxu0 %v1597
        %2018 = vmatmul.mubr.f32.gmra.mrb[0].mxu0 %v1596
        %v2019 = vpop.f32.mrb[0].mxu0
        %v2020 = vadd.f32 0.0, %v2019
        %v2021 = vpop.f32.mrb[0].mxu0
        %v2022 = vadd.f32 0.0, %v2021
        %2023 = vmatprep.mubr.f32.mxu0 %v1599
        %2024 = vmatmul.mubr.f32.gmra.mrb[0].mxu0 %v1598
        %v2025 = vpop.f32.mrb[0].mxu0
        %v2026 = vadd.f32 0.0, %v2025
        %v2027 = vpop.f32.mrb[0].mxu0
        %v2028 = vadd.f32 0.0, %v2027
        %2029 = vmatprep.mubr.f32.mxu0 %v1601
        %2030 = vmatmul.mubr.f32.gmra.mrb[0].mxu0 %v1600
        %v2031 = vpop.f32.mrb[0].mxu0
        %v2032 = vadd.f32 0.0, %v2031
        %v2033 = vpop.f32.mrb[0].mxu0
        %v2034 = vadd.f32 0.0, %v2033
        %2035 = vdwg.mxu0
        %2036 = vmatprep.subr.mxu0 %v1607
        %2037 = vmatpush1.msra.mxu0 %v1606
        %2038 = vmatprep.subr.mxu0 %v1615
        %2039 = vmatpush1.msra.mxu0 %v1614
        %2040 = vmatprep.subr.mxu0 %v1623
        %2041 = vmatpush1.msra.mxu0 %v1622
        %2042 = vmatprep.subr.mxu0 %v1631
        %2043 = vmatpush1.msra.mxu0 %v1630
        %2044 = vmatprep.subr.mxu0 %v1639
        %2045 = vmatpush1.msra.mxu0 %v1638
        %2046 = vmatprep.subr.mxu0 %v1647
        %2047 = vmatpush1.msra.mxu0 %v1646
        %2048 = vmatprep.subr.mxu0 %v1655
        %2049 = vmatpush1.msra.mxu0 %v1654
        %2050 = vmatprep.subr.mxu0 %v1663
        %2051 = vmatpush1.msra.mxu0 %v1662
        %2052 = vmatprep.subr.mxu0 %v1671
        %2053 = vmatpush1.msra.mxu0 %v1670
        %2054 = vmatprep.subr.mxu0 %v1679
        %2055 = vmatpush1.msra.mxu0 %v1678
        %2056 = vmatprep.subr.mxu0 %v1687
        %2057 = vmatpush1.msra.mxu0 %v1686
        %2058 = vmatprep.subr.mxu0 %v1695
        %2059 = vmatpush1.msra.mxu0 %v1694
        %2060 = vmatprep.subr.mxu0 %v1703
        %2061 = vmatpush1.msra.mxu0 %v1702
        %2062 = vmatprep.subr.mxu0 %v1711
        %2063 = vmatpush1.msra.mxu0 %v1710
        %2064 = vmatprep.subr.mxu0 %v1719
        %2065 = vmatpush1.msra.mxu0 %v1718
        %2066 = vmatprep.subr.mxu0 %v1727
        %2067 = vmatpush1.msra.mxu0 %v1726
        %2068 = vmatprep.subr.mxu0 %v1735
        %2069 = vmatpush1.msra.mxu0 %v1734
        %2070 = vmatprep.subr.mxu0 %v1743
        %2071 = vmatpush1.msra.mxu0 %v1742
        %2072 = vmatprep.subr.mxu0 %v1751
        %2073 = vmatpush1.msra.mxu0 %v1750
        %2074 = vmatprep.subr.mxu0 %v1759
        %2075 = vmatpush1.msra.mxu0 %v1758
        %2076 = vmatprep.subr.mxu0 %v1767
        %2077 = vmatpush1.msra.mxu0 %v1766
        %2078 = vmatprep.subr.mxu0 %v1775
        %2079 = vmatpush1.msra.mxu0 %v1774
        %2080 = vmatprep.subr.mxu0 %v1783
        %2081 = vmatpush1.msra.mxu0 %v1782
        %2082 = vmatprep.subr.mxu0 %v1791
        %2083 = vmatpush1.msra.mxu0 %v1790
        %2084 = vmatprep.subr.mxu0 %v1799
        %2085 = vmatpush1.msra.mxu0 %v1798
        %2086 = vmatprep.subr.mxu0 %v1807
        %2087 = vmatpush1.msra.mxu0 %v1806
        %2088 = vmatprep.subr.mxu0 %v1815
        %2089 = vmatpush1.msra.mxu0 %v1814
        %2090 = vmatprep.subr.mxu0 %v1823
        %2091 = vmatpush1.msra.mxu0 %v1822
        %2092 = vmatprep.subr.mxu0 %v1831
        %2093 = vmatpush1.msra.mxu0 %v1830
        %2094 = vmatprep.subr.mxu0 %v1839
        %2095 = vmatpush1.msra.mxu0 %v1838
        %2096 = vmatprep.subr.mxu0 %v1847
        %2097 = vmatpush1.msra.mxu0 %v1846
        %2098 = vmatprep.subr.mxu0 %v1855
        %2099 = vmatpush1.msra.mxu0 %v1854
        %2100 = vmatprep.mubr.f32.mxu0 %v1595
        %2101 = vmatmul.mubr.f32.gmra.mrb[0].mxu0 %v1594
        %v2102 = vpop.f32.mrb[0].mxu0
        %v2103 = vadd.f32 0.0, %v2102
        %v2104 = vpop.f32.mrb[0].mxu0
        %v2105 = vadd.f32 0.0, %v2104
        %2106 = vmatprep.mubr.f32.mxu0 %v1597
        %2107 = vmatmul.mubr.f32.gmra.mrb[0].mxu0 %v1596
        %v2108 = vpop.f32.mrb[0].mxu0
        %v2109 = vadd.f32 0.0, %v2108
        %v2110 = vpop.f32.mrb[0].mxu0
        %v2111 = vadd.f32 0.0, %v2110
        %2112 = vmatprep.mubr.f32.mxu0 %v1599
        %2113 = vmatmul.mubr.f32.gmra.mrb[0].mxu0 %v1598
        %v2114 = vpop.f32.mrb[0].mxu0
        %v2115 = vadd.f32 0.0, %v2114
        %v2116 = vpop.f32.mrb[0].mxu0
        %v2117 = vadd.f32 0.0, %v2116
        %2118 = vmatprep.mubr.f32.mxu0 %v1601
        %2119 = vmatmul.mubr.f32.gmra.mrb[0].mxu0 %v1600
        %v2120 = vpop.f32.mrb[0].mxu0
        %v2121 = vadd.f32 0.0, %v2120
        %v2122 = vpop.f32.mrb[0].mxu0
        %v2123 = vadd.f32 0.0, %v2122
        %2124 = vdwg.mxu0
        %2125 = vmatprep.subr.mxu0 %v1609
        %2126 = vmatpush1.msra.mxu0 %v1608
        %2127 = vmatprep.subr.mxu0 %v1617
        %2128 = vmatpush1.msra.mxu0 %v1616
        %2129 = vmatprep.subr.mxu0 %v1625
        %2130 = vmatpush1.msra.mxu0 %v1624
        %2131 = vmatprep.subr.mxu0 %v1633
        %2132 = vmatpush1.msra.mxu0 %v1632
        %2133 = vmatprep.subr.mxu0 %v1641
        %2134 = vmatpush1.msra.mxu0 %v1640
        %2135 = vmatprep.subr.mxu0 %v1649
        %2136 = vmatpush1.msra.mxu0 %v1648
        %2137 = vmatprep.subr.mxu0 %v1657
        %2138 = vmatpush1.msra.mxu0 %v1656
        %2139 = vmatprep.subr.mxu0 %v1665
        %2140 = vmatpush1.msra.mxu0 %v1664
        %2141 = vmatprep.subr.mxu0 %v1673
        %2142 = vmatpush1.msra.mxu0 %v1672
        %2143 = vmatprep.subr.mxu0 %v1681
        %2144 = vmatpush1.msra.mxu0 %v1680
        %2145 = vmatprep.subr.mxu0 %v1689
        %2146 = vmatpush1.msra.mxu0 %v1688
        %2147 = vmatprep.subr.mxu0 %v1697
        %2148 = vmatpush1.msra.mxu0 %v1696
        %2149 = vmatprep.subr.mxu0 %v1705
        %2150 = vmatpush1.msra.mxu0 %v1704
        %2151 = vmatprep.subr.mxu0 %v1713
        %2152 = vmatpush1.msra.mxu0 %v1712
        %2153 = vmatprep.subr.mxu0 %v1721
        %2154 = vmatpush1.msra.mxu0 %v1720
        %2155 = vmatprep.subr.mxu0 %v1729
        %2156 = vmatpush1.msra.mxu0 %v1728
        %2157 = vmatprep.subr.mxu0 %v1737
        %2158 = vmatpush1.msra.mxu0 %v1736
        %2159 = vmatprep.subr.mxu0 %v1745
        %2160 = vmatpush1.msra.mxu0 %v1744
        %2161 = vmatprep.subr.mxu0 %v1753
        %2162 = vmatpush1.msra.mxu0 %v1752
        %2163 = vmatprep.subr.mxu0 %v1761
        %2164 = vmatpush1.msra.mxu0 %v1760
        %2165 = vmatprep.subr.mxu0 %v1769
        %2166 = vmatpush1.msra.mxu0 %v1768
        %2167 = vmatprep.subr.mxu0 %v1777
        %2168 = vmatpush1.msra.mxu0 %v1776
        %2169 = vmatprep.subr.mxu0 %v1785
        %2170 = vmatpush1.msra.mxu0 %v1784
        %2171 = vmatprep.subr.mxu0 %v1793
        %2172 = vmatpush1.msra.mxu0 %v1792
        %2173 = vmatprep.subr.mxu0 %v1801
        %2174 = vmatpush1.msra.mxu0 %v1800
        %2175 = vmatprep.subr.mxu0 %v1809
        %2176 = vmatpush1.msra.mxu0 %v1808
        %2177 = vmatprep.subr.mxu0 %v1817
        %2178 = vmatpush1.msra.mxu0 %v1816
        %2179 = vmatprep.subr.mxu0 %v1825
        %2180 = vmatpush1.msra.mxu0 %v1824
        %2181 = vmatprep.subr.mxu0 %v1833
        %2182 = vmatpush1.msra.mxu0 %v1832
        %2183 = vmatprep.subr.mxu0 %v1841
        %2184 = vmatpush1.msra.mxu0 %v1840
        %2185 = vmatprep.subr.mxu0 %v1849
        %2186 = vmatpush1.msra.mxu0 %v1848
        %2187 = vmatprep.subr.mxu0 %v1857
        %2188 = vmatpush1.msra.mxu0 %v1856
        %2189 = vmatprep.mubr.f32.mxu0 %v1595
        %2190 = vmatmul.mubr.f32.gmra.mrb[0].mxu0 %v1594
        %v2191 = vpop.f32.mrb[0].mxu0
        %v2192 = vadd.f32 0.0, %v2191
        %v2193 = vpop.f32.mrb[0].mxu0
        %v2194 = vadd.f32 0.0, %v2193
        %2195 = vmatprep.mubr.f32.mxu0 %v1597
        %2196 = vmatmul.mubr.f32.gmra.mrb[0].mxu0 %v1596
        %v2197 = vpop.f32.mrb[0].mxu0
        %v2198 = vadd.f32 0.0, %v2197
        %v2199 = vpop.f32.mrb[0].mxu0
        %v2200 = vadd.f32 0.0, %v2199
        %2201 = vmatprep.mubr.f32.mxu0 %v1599
        %2202 = vmatmul.mubr.f32.gmra.mrb[0].mxu0 %v1598
        %v2203 = vpop.f32.mrb[0].mxu0
        %v2204 = vadd.f32 0.0, %v2203
        %v2205 = vpop.f32.mrb[0].mxu0
        %v2206 = vadd.f32 0.0, %v2205
        %2207 = vmatprep.mubr.f32.mxu0 %v1601
        %2208 = vmatmul.mubr.f32.gmra.mrb[0].mxu0 %v1600
        %v2209 = vpop.f32.mrb[0].mxu0
        %v2210 = vadd.f32 0.0, %v2209
        %v2211 = vpop.f32.mrb[0].mxu0
        %v2212 = vadd.f32 0.0, %v2211
        %2213 = vdwg.mxu0
        %v2214 = vld [vmem:[%s4] sm:$0xff]
        %v2215 = vld [vmem:[%s4 + $0x8] sm:$0xff]
        %s2216 = scalar_lea.vmem %s4, 16
        %v2217 = vld [vmem:[%s2216] sm:$0xff]
        %v2218 = vld [vmem:[%s2216 + $0x8] sm:$0xff]
        %vm2219 = vcmask 261120
        %v2221 = vsel %vm2219, %v2217, 0
        %v2224 = vsel %vm2219, %v2218, 0
        %2226 = vmatprep.subr.mxu0 %v2016
        %2227 = vmatpush1.msra.mxu0 %v2014
        %2228 = vmatprep.subr.mxu0 %v2022
        %2229 = vmatpush1.msra.mxu0 %v2020
        %2230 = vmatprep.subr.mxu0 %v2028
        %2231 = vmatpush1.msra.mxu0 %v2026
        %2232 = vmatprep.subr.mxu0 %v2034
        %2233 = vmatpush1.msra.mxu0 %v2032
        %2234 = vmatprep.subr.mxu0 0.0
        %2235 = vmatpush1.msra.mxu0 0.0
        %2236 = vmatprep.subr.mxu0 0.0
        %2237 = vmatpush1.msra.mxu0 0.0
        %2238 = vmatprep.subr.mxu0 0.0
        %2239 = vmatpush1.msra.mxu0 0.0
        %2240 = vmatprep.subr.mxu0 0.0
        %2241 = vmatpush1.msra.mxu0 0.0
        %2242 = vmatprep.subr.mxu0 0.0
        %2243 = vmatpush1.msra.mxu0 0.0
        %2244 = vmatprep.subr.mxu0 0.0
        %2245 = vmatpush1.msra.mxu0 0.0
        %2246 = vmatprep.subr.mxu0 0.0
        %2247 = vmatpush1.msra.mxu0 0.0
        %2248 = vmatprep.subr.mxu0 0.0
        %2249 = vmatpush1.msra.mxu0 0.0
        %2250 = vmatprep.subr.mxu0 0.0
        %2251 = vmatpush1.msra.mxu0 0.0
        %2252 = vmatprep.subr.mxu0 0.0
        %2253 = vmatpush1.msra.mxu0 0.0
        %2254 = vmatprep.subr.mxu0 0.0
        %2255 = vmatpush1.msra.mxu0 0.0
        %2256 = vmatprep.subr.mxu0 0.0
        %2257 = vmatpush1.msra.mxu0 0.0
        %2258 = vmatprep.subr.mxu0 0.0
        %2259 = vmatpush1.msra.mxu0 0.0
        %2260 = vmatprep.subr.mxu0 0.0
        %2261 = vmatpush1.msra.mxu0 0.0
        %2262 = vmatprep.subr.mxu0 0.0
        %2263 = vmatpush1.msra.mxu0 0.0
        %2264 = vmatprep.subr.mxu0 0.0
        %2265 = vmatpush1.msra.mxu0 0.0
        %2266 = vmatprep.subr.mxu0 0.0
        %2267 = vmatpush1.msra.mxu0 0.0
        %2268 = vmatprep.subr.mxu0 0.0
        %2269 = vmatpush1.msra.mxu0 0.0
        %2270 = vmatprep.subr.mxu0 0.0
        %2271 = vmatpush1.msra.mxu0 0.0
        %2272 = vmatprep.subr.mxu0 0.0
        %2273 = vmatpush1.msra.mxu0 0.0
        %2274 = vmatprep.subr.mxu0 0.0
        %2275 = vmatpush1.msra.mxu0 0.0
        %2276 = vmatprep.subr.mxu0 0.0
        %2277 = vmatpush1.msra.mxu0 0.0
        %2278 = vmatprep.subr.mxu0 0.0
        %2279 = vmatpush1.msra.mxu0 0.0
        %2280 = vmatprep.subr.mxu0 0.0
        %2281 = vmatpush1.msra.mxu0 0.0
        %2282 = vmatprep.subr.mxu0 0.0
        %2283 = vmatpush1.msra.mxu0 0.0
        %2284 = vmatprep.subr.mxu0 0.0
        %2285 = vmatpush1.msra.mxu0 0.0
        %2286 = vmatprep.subr.mxu0 0.0
        %2287 = vmatpush1.msra.mxu0 0.0
        %2288 = vmatprep.subr.mxu0 0.0
        %2289 = vmatpush1.msra.mxu0 0.0
        %2290 = vmatprep.mubr.f32.mxu0 0.0
        %2291 = vmatmul.mubr.f32.gmra.mrb[0].mxu0 %v2221
        %v2292 = vpop.f32.mrb[0].mxu0
        %v2293 = vadd.f32 0.0, %v2292
        %v2294 = vpop.f32.mrb[0].mxu0
        %v2295 = vadd.f32 0.0, %v2294
        %2296 = vmatprep.mubr.f32.mxu0 0.0
        %2297 = vmatmul.mubr.f32.gmra.mrb[0].mxu0 %v2224
        %v2298 = vpop.f32.mrb[0].mxu0
        %v2299 = vadd.f32 0.0, %v2298
        %v2300 = vpop.f32.mrb[0].mxu0
        %v2301 = vadd.f32 0.0, %v2300
        %2302 = vdwg.mxu0
        %v2304 = vsel %vm2219, %v2214, 0
        %v2307 = vsel %vm2219, %v2215, 0
        %2309 = vmatprep.subr.mxu0 %v1927
        %2310 = vmatpush1.msra.mxu0 %v1925
        %2311 = vmatprep.subr.mxu0 %v1933
        %2312 = vmatpush1.msra.mxu0 %v1931
        %2313 = vmatprep.subr.mxu0 %v1939
        %2314 = vmatpush1.msra.mxu0 %v1937
        %2315 = vmatprep.subr.mxu0 %v1945
        %2316 = vmatpush1.msra.mxu0 %v1943
        %2317 = vmatprep.subr.mxu0 0.0
        %2318 = vmatpush1.msra.mxu0 0.0
        %2319 = vmatprep.subr.mxu0 0.0
        %2320 = vmatpush1.msra.mxu0 0.0
        %2321 = vmatprep.subr.mxu0 0.0
        %2322 = vmatpush1.msra.mxu0 0.0
        %2323 = vmatprep.subr.mxu0 0.0
        %2324 = vmatpush1.msra.mxu0 0.0
        %2325 = vmatprep.subr.mxu0 0.0
        %2326 = vmatpush1.msra.mxu0 0.0
        %2327 = vmatprep.subr.mxu0 0.0
        %2328 = vmatpush1.msra.mxu0 0.0
        %2329 = vmatprep.subr.mxu0 0.0
        %2330 = vmatpush1.msra.mxu0 0.0
        %2331 = vmatprep.subr.mxu0 0.0
        %2332 = vmatpush1.msra.mxu0 0.0
        %2333 = vmatprep.subr.mxu0 0.0
        %2334 = vmatpush1.msra.mxu0 0.0
        %2335 = vmatprep.subr.mxu0 0.0
        %2336 = vmatpush1.msra.mxu0 0.0
        %2337 = vmatprep.subr.mxu0 0.0
        %2338 = vmatpush1.msra.mxu0 0.0
        %2339 = vmatprep.subr.mxu0 0.0
        %2340 = vmatpush1.msra.mxu0 0.0
        %2341 = vmatprep.subr.mxu0 0.0
        %2342 = vmatpush1.msra.mxu0 0.0
        %2343 = vmatprep.subr.mxu0 0.0
        %2344 = vmatpush1.msra.mxu0 0.0
        %2345 = vmatprep.subr.mxu0 0.0
        %2346 = vmatpush1.msra.mxu0 0.0
        %2347 = vmatprep.subr.mxu0 0.0
        %2348 = vmatpush1.msra.mxu0 0.0
        %2349 = vmatprep.subr.mxu0 0.0
        %2350 = vmatpush1.msra.mxu0 0.0
        %2351 = vmatprep.subr.mxu0 0.0
        %2352 = vmatpush1.msra.mxu0 0.0
        %2353 = vmatprep.subr.mxu0 0.0
        %2354 = vmatpush1.msra.mxu0 0.0
        %2355 = vmatprep.subr.mxu0 0.0
        %2356 = vmatpush1.msra.mxu0 0.0
        %2357 = vmatprep.subr.mxu0 0.0
        %2358 = vmatpush1.msra.mxu0 0.0
        %2359 = vmatprep.subr.mxu0 0.0
        %2360 = vmatpush1.msra.mxu0 0.0
        %2361 = vmatprep.subr.mxu0 0.0
        %2362 = vmatpush1.msra.mxu0 0.0
        %2363 = vmatprep.subr.mxu0 0.0
        %2364 = vmatpush1.msra.mxu0 0.0
        %2365 = vmatprep.subr.mxu0 0.0
        %2366 = vmatpush1.msra.mxu0 0.0
        %2367 = vmatprep.subr.mxu0 0.0
        %2368 = vmatpush1.msra.mxu0 0.0
        %2369 = vmatprep.subr.mxu0 0.0
        %2370 = vmatpush1.msra.mxu0 0.0
        %2371 = vmatprep.subr.mxu0 0.0
        %2372 = vmatpush1.msra.mxu0 0.0
        %2373 = vmatprep.mubr.f32.mxu0 0.0
        %2374 = vmatmul.mubr.f32.gmra.mrb[0].mxu0 %v2304
        %v2375 = vpop.f32.mrb[0].mxu0
        %v2376 = vadd.f32 %v2293, %v2375
        %v2377 = vpop.f32.mrb[0].mxu0
        %v2378 = vadd.f32 %v2295, %v2377
        %2379 = vmatprep.mubr.f32.mxu0 0.0
        %2380 = vmatmul.mubr.f32.gmra.mrb[0].mxu0 %v2307
        %v2381 = vpop.f32.mrb[0].mxu0
        %v2382 = vadd.f32 %v2299, %v2381
        %v2383 = vpop.f32.mrb[0].mxu0
        %v2384 = vadd.f32 %v2301, %v2383
        %2385 = vdwg.mxu0
        %s2386 = scalar_lea.vmem %s4, 32
        %v2387 = vld [vmem:[%s2386] sm:$0xff]
        %v2388 = vld [vmem:[%s2386 + $0x8] sm:$0xff]
        %v2390 = vsel %vm2219, %v2387, 0
        %v2393 = vsel %vm2219, %v2388, 0
        %2395 = vmatprep.subr.mxu0 %v2105
        %2396 = vmatpush1.msra.mxu0 %v2103
        %2397 = vmatprep.subr.mxu0 %v2111
        %2398 = vmatpush1.msra.mxu0 %v2109
        %2399 = vmatprep.subr.mxu0 %v2117
        %2400 = vmatpush1.msra.mxu0 %v2115
        %2401 = vmatprep.subr.mxu0 %v2123
        %2402 = vmatpush1.msra.mxu0 %v2121
        %2403 = vmatprep.subr.mxu0 0.0
        %2404 = vmatpush1.msra.mxu0 0.0
        %2405 = vmatprep.subr.mxu0 0.0
        %2406 = vmatpush1.msra.mxu0 0.0
        %2407 = vmatprep.subr.mxu0 0.0
        %2408 = vmatpush1.msra.mxu0 0.0
        %2409 = vmatprep.subr.mxu0 0.0
        %2410 = vmatpush1.msra.mxu0 0.0
        %2411 = vmatprep.subr.mxu0 0.0
        %2412 = vmatpush1.msra.mxu0 0.0
        %2413 = vmatprep.subr.mxu0 0.0
        %2414 = vmatpush1.msra.mxu0 0.0
        %2415 = vmatprep.subr.mxu0 0.0
        %2416 = vmatpush1.msra.mxu0 0.0
        %2417 = vmatprep.subr.mxu0 0.0
        %2418 = vmatpush1.msra.mxu0 0.0
        %2419 = vmatprep.subr.mxu0 0.0
        %2420 = vmatpush1.msra.mxu0 0.0
        %2421 = vmatprep.subr.mxu0 0.0
        %2422 = vmatpush1.msra.mxu0 0.0
        %2423 = vmatprep.subr.mxu0 0.0
        %2424 = vmatpush1.msra.mxu0 0.0
        %2425 = vmatprep.subr.mxu0 0.0
        %2426 = vmatpush1.msra.mxu0 0.0
        %2427 = vmatprep.subr.mxu0 0.0
        %2428 = vmatpush1.msra.mxu0 0.0
        %2429 = vmatprep.subr.mxu0 0.0
        %2430 = vmatpush1.msra.mxu0 0.0
        %2431 = vmatprep.subr.mxu0 0.0
        %2432 = vmatpush1.msra.mxu0 0.0
        %2433 = vmatprep.subr.mxu0 0.0
        %2434 = vmatpush1.msra.mxu0 0.0
        %2435 = vmatprep.subr.mxu0 0.0
        %2436 = vmatpush1.msra.mxu0 0.0
        %2437 = vmatprep.subr.mxu0 0.0
        %2438 = vmatpush1.msra.mxu0 0.0
        %2439 = vmatprep.subr.mxu0 0.0
        %2440 = vmatpush1.msra.mxu0 0.0
        %2441 = vmatprep.subr.mxu0 0.0
        %2442 = vmatpush1.msra.mxu0 0.0
        %2443 = vmatprep.subr.mxu0 0.0
        %2444 = vmatpush1.msra.mxu0 0.0
        %2445 = vmatprep.subr.mxu0 0.0
        %2446 = vmatpush1.msra.mxu0 0.0
        %2447 = vmatprep.subr.mxu0 0.0
        %2448 = vmatpush1.msra.mxu0 0.0
        %2449 = vmatprep.subr.mxu0 0.0
        %2450 = vmatpush1.msra.mxu0 0.0
        %2451 = vmatprep.subr.mxu0 0.0
        %2452 = vmatpush1.msra.mxu0 0.0
        %2453 = vmatprep.subr.mxu0 0.0
        %2454 = vmatpush1.msra.mxu0 0.0
        %2455 = vmatprep.subr.mxu0 0.0
        %2456 = vmatpush1.msra.mxu0 0.0
        %2457 = vmatprep.subr.mxu0 0.0
        %2458 = vmatpush1.msra.mxu0 0.0
        %2459 = vmatprep.mubr.f32.mxu0 0.0
        %2460 = vmatmul.mubr.f32.gmra.mrb[0].mxu0 %v2390
        %v2461 = vpop.f32.mrb[0].mxu0
        %v2462 = vadd.f32 0.0, %v2461
        %v2463 = vpop.f32.mrb[0].mxu0
        %v2464 = vadd.f32 0.0, %v2463
        %2465 = vmatprep.mubr.f32.mxu0 0.0
        %2466 = vmatmul.mubr.f32.gmra.mrb[0].mxu0 %v2393
        %v2467 = vpop.f32.mrb[0].mxu0
        %v2468 = vadd.f32 0.0, %v2467
        %v2469 = vpop.f32.mrb[0].mxu0
        %v2470 = vadd.f32 0.0, %v2469
        %2471 = vdwg.mxu0
        %v2472 = vadd.f32 %v2376, %v2462
        %v2473 = vadd.f32 %v2378, %v2464
        %v2474 = vadd.f32 %v2382, %v2468
        %v2475 = vadd.f32 %v2384, %v2470
        %s2476 = scalar_lea.vmem %s4, 48
        %v2477 = vld [vmem:[%s2476] sm:$0xff]
        %v2478 = vld [vmem:[%s2476 + $0x8] sm:$0xff]
        %v2480 = vsel %vm2219, %v2477, 0
        %v2483 = vsel %vm2219, %v2478, 0
        %2485 = vmatprep.subr.mxu0 %v2194
        %2486 = vmatpush1.msra.mxu0 %v2192
        %2487 = vmatprep.subr.mxu0 %v2200
        %2488 = vmatpush1.msra.mxu0 %v2198
        %2489 = vmatprep.subr.mxu0 %v2206
        %2490 = vmatpush1.msra.mxu0 %v2204
        %2491 = vmatprep.subr.mxu0 %v2212
        %2492 = vmatpush1.msra.mxu0 %v2210
        %2493 = vmatprep.subr.mxu0 0.0
        %2494 = vmatpush1.msra.mxu0 0.0
        %2495 = vmatprep.subr.mxu0 0.0
        %2496 = vmatpush1.msra.mxu0 0.0
        %2497 = vmatprep.subr.mxu0 0.0
        %2498 = vmatpush1.msra.mxu0 0.0
        %2499 = vmatprep.subr.mxu0 0.0
        %2500 = vmatpush1.msra.mxu0 0.0
        %2501 = vmatprep.subr.mxu0 0.0
        %2502 = vmatpush1.msra.mxu0 0.0
        %2503 = vmatprep.subr.mxu0 0.0
        %2504 = vmatpush1.msra.mxu0 0.0
        %2505 = vmatprep.subr.mxu0 0.0
        %2506 = vmatpush1.msra.mxu0 0.0
        %2507 = vmatprep.subr.mxu0 0.0
        %2508 = vmatpush1.msra.mxu0 0.0
        %2509 = vmatprep.subr.mxu0 0.0
        %2510 = vmatpush1.msra.mxu0 0.0
        %2511 = vmatprep.subr.mxu0 0.0
        %2512 = vmatpush1.msra.mxu0 0.0
        %2513 = vmatprep.subr.mxu0 0.0
        %2514 = vmatpush1.msra.mxu0 0.0
        %2515 = vmatprep.subr.mxu0 0.0
        %2516 = vmatpush1.msra.mxu0 0.0
        %2517 = vmatprep.subr.mxu0 0.0
        %2518 = vmatpush1.msra.mxu0 0.0
        %2519 = vmatprep.subr.mxu0 0.0
        %2520 = vmatpush1.msra.mxu0 0.0
        %2521 = vmatprep.subr.mxu0 0.0
        %2522 = vmatpush1.msra.mxu0 0.0
        %2523 = vmatprep.subr.mxu0 0.0
        %2524 = vmatpush1.msra.mxu0 0.0
        %2525 = vmatprep.subr.mxu0 0.0
        %2526 = vmatpush1.msra.mxu0 0.0
        %2527 = vmatprep.subr.mxu0 0.0
        %2528 = vmatpush1.msra.mxu0 0.0
        %2529 = vmatprep.subr.mxu0 0.0
        %2530 = vmatpush1.msra.mxu0 0.0
        %2531 = vmatprep.subr.mxu0 0.0
        %2532 = vmatpush1.msra.mxu0 0.0
        %2533 = vmatprep.subr.mxu0 0.0
        %2534 = vmatpush1.msra.mxu0 0.0
        %2535 = vmatprep.subr.mxu0 0.0
        %2536 = vmatpush1.msra.mxu0 0.0
        %2537 = vmatprep.subr.mxu0 0.0
        %2538 = vmatpush1.msra.mxu0 0.0
        %2539 = vmatprep.subr.mxu0 0.0
        %2540 = vmatpush1.msra.mxu0 0.0
        %2541 = vmatprep.subr.mxu0 0.0
        %2542 = vmatpush1.msra.mxu0 0.0
        %2543 = vmatprep.subr.mxu0 0.0
        %2544 = vmatpush1.msra.mxu0 0.0
        %2545 = vmatprep.subr.mxu0 0.0
        %2546 = vmatpush1.msra.mxu0 0.0
        %2547 = vmatprep.subr.mxu0 0.0
        %2548 = vmatpush1.msra.mxu0 0.0
        %2549 = vmatprep.mubr.f32.mxu0 0.0
        %2550 = vmatmul.mubr.f32.gmra.mrb[0].mxu0 %v2480
        %v2551 = vpop.f32.mrb[0].mxu0
        %v2552 = vadd.f32 0.0, %v2551
        %v2553 = vpop.f32.mrb[0].mxu0
        %v2554 = vadd.f32 0.0, %v2553
        %2555 = vmatprep.mubr.f32.mxu0 0.0
        %2556 = vmatmul.mubr.f32.gmra.mrb[0].mxu0 %v2483
        %v2557 = vpop.f32.mrb[0].mxu0
        %v2558 = vadd.f32 0.0, %v2557
        %v2559 = vpop.f32.mrb[0].mxu0
        %v2560 = vadd.f32 0.0, %v2559
        %2561 = vdwg.mxu0
        %v2562 = vadd.f32 %v2472, %v2552
        %v2563 = vadd.f32 %v2473, %v2554
        %v2564 = vadd.f32 %v2474, %v2558
        %v2565 = vadd.f32 %v2475, %v2560
        %v2566 = vmax.f32 %v2562, 0.0
        %v2567 = vmax.f32 %v2563, 0.0
        %v2568 = vmax.f32 %v2564, 0.0
        %v2569 = vmax.f32 %v2565, 0.0
        %v2570 = vld [vmem:[#allocation7] sm:$0xff]
        %v2571 = vld [vmem:[#allocation7 + $0x8] sm:$0xff]
        %v2572 = vld [vmem:[#allocation7 + $0x10] sm:$0xff]
        %v2573 = vld [vmem:[#allocation7 + $0x18] sm:$0xff]
        %v2574 = vld [vmem:[#allocation7 + $0x20] sm:$0xff]
        %v2575 = vld [vmem:[#allocation7 + $0x28] sm:$0xff]
        %v2576 = vld [vmem:[#allocation7 + $0x30] sm:$0xff]
        %v2577 = vld [vmem:[#allocation7 + $0x38] sm:$0xff]
        %v2578 = vld [vmem:[#allocation7 + $0x40] sm:$0xff]
        %v2579 = vld [vmem:[#allocation7 + $0x48] sm:$0xff]
        %v2580 = vld [vmem:[#allocation7 + $0x50] sm:$0xff]
        %v2581 = vld [vmem:[#allocation7 + $0x58] sm:$0xff]
        %v2582 = vld [vmem:[#allocation7 + $0x60] sm:$0xff]
        %v2583 = vld [vmem:[#allocation7 + $0x68] sm:$0xff]
        %v2584 = vld [vmem:[#allocation7 + $0x70] sm:$0xff]
        %v2585 = vld [vmem:[#allocation7 + $0x78] sm:$0xff]
        %v2586 = vld [vmem:[#allocation7 + $0x80] sm:$0xff]
        %v2587 = vld [vmem:[#allocation7 + $0x88] sm:$0xff]
        %v2588 = vld [vmem:[#allocation7 + $0x90] sm:$0xff]
        %v2589 = vld [vmem:[#allocation7 + $0x98] sm:$0xff]
        %v2590 = vld [vmem:[#allocation7 + $0xa0] sm:$0xff]
        %v2591 = vld [vmem:[#allocation7 + $0xa8] sm:$0xff]
        %v2592 = vld [vmem:[#allocation7 + $0xb0] sm:$0xff]
        %v2593 = vld [vmem:[#allocation7 + $0xb8] sm:$0xff]
        %v2594 = vld [vmem:[#allocation7 + $0xc0] sm:$0xff]
        %v2595 = vld [vmem:[#allocation7 + $0xc8] sm:$0xff]
        %v2596 = vld [vmem:[#allocation7 + $0xd0] sm:$0xff]
        %v2597 = vld [vmem:[#allocation7 + $0xd8] sm:$0xff]
        %v2598 = vld [vmem:[#allocation7 + $0xe0] sm:$0xff]
        %v2599 = vld [vmem:[#allocation7 + $0xe8] sm:$0xff]
        %v2600 = vld [vmem:[#allocation7 + $0xf0] sm:$0xff]
        %v2601 = vld [vmem:[#allocation7 + $0xf8] sm:$0xff]
        %v2602 = vld [vmem:[#allocation7 + $0x100] sm:$0xff]
        %v2603 = vld [vmem:[#allocation7 + $0x108] sm:$0xff]
        %v2604 = vld [vmem:[#allocation7 + $0x110] sm:$0xff]
        %v2605 = vld [vmem:[#allocation7 + $0x118] sm:$0xff]
        %v2606 = vld [vmem:[#allocation7 + $0x120] sm:$0xff]
        %v2607 = vld [vmem:[#allocation7 + $0x128] sm:$0xff]
        %v2608 = vld [vmem:[#allocation7 + $0x130] sm:$0xff]
        %v2609 = vld [vmem:[#allocation7 + $0x138] sm:$0xff]
        %v2610 = vld [vmem:[#allocation7 + $0x140] sm:$0xff]
        %v2611 = vld [vmem:[#allocation7 + $0x148] sm:$0xff]
        %v2612 = vld [vmem:[#allocation7 + $0x150] sm:$0xff]
        %v2613 = vld [vmem:[#allocation7 + $0x158] sm:$0xff]
        %v2614 = vld [vmem:[#allocation7 + $0x160] sm:$0xff]
        %v2615 = vld [vmem:[#allocation7 + $0x168] sm:$0xff]
        %v2616 = vld [vmem:[#allocation7 + $0x170] sm:$0xff]
        %v2617 = vld [vmem:[#allocation7 + $0x178] sm:$0xff]
        %v2618 = vld [vmem:[#allocation7 + $0x180] sm:$0xff]
        %v2619 = vld [vmem:[#allocation7 + $0x188] sm:$0xff]
        %v2620 = vld [vmem:[#allocation7 + $0x190] sm:$0xff]
        %v2621 = vld [vmem:[#allocation7 + $0x198] sm:$0xff]
        %v2622 = vld [vmem:[#allocation7 + $0x1a0] sm:$0xff]
        %v2623 = vld [vmem:[#allocation7 + $0x1a8] sm:$0xff]
        %v2624 = vld [vmem:[#allocation7 + $0x1b0] sm:$0xff]
        %v2625 = vld [vmem:[#allocation7 + $0x1b8] sm:$0xff]
        %v2626 = vld [vmem:[#allocation7 + $0x1c0] sm:$0xff]
        %v2627 = vld [vmem:[#allocation7 + $0x1c8] sm:$0xff]
        %v2628 = vld [vmem:[#allocation7 + $0x1d0] sm:$0xff]
        %v2629 = vld [vmem:[#allocation7 + $0x1d8] sm:$0xff]
        %v2630 = vld [vmem:[#allocation7 + $0x1e0] sm:$0xff]
        %v2631 = vld [vmem:[#allocation7 + $0x1e8] sm:$0xff]
        %v2632 = vld [vmem:[#allocation7 + $0x1f0] sm:$0xff]
        %v2633 = vld [vmem:[#allocation7 + $0x1f8] sm:$0xff]
        %v2634 = vld [vmem:[#allocation7 + $0x200] sm:$0xff]
        %v2635 = vld [vmem:[#allocation7 + $0x208] sm:$0xff]
        %v2636 = vld [vmem:[#allocation7 + $0x210] sm:$0xff]
        %v2637 = vld [vmem:[#allocation7 + $0x218] sm:$0xff]
        %v2638 = vld [vmem:[#allocation7 + $0x220] sm:$0xff]
        %v2639 = vld [vmem:[#allocation7 + $0x228] sm:$0xff]
        %v2640 = vld [vmem:[#allocation7 + $0x230] sm:$0xff]
        %v2641 = vld [vmem:[#allocation7 + $0x238] sm:$0xff]
        %v2642 = vld [vmem:[#allocation7 + $0x240] sm:$0xff]
        %v2643 = vld [vmem:[#allocation7 + $0x248] sm:$0xff]
        %v2644 = vld [vmem:[#allocation7 + $0x250] sm:$0xff]
        %v2645 = vld [vmem:[#allocation7 + $0x258] sm:$0xff]
        %v2646 = vld [vmem:[#allocation7 + $0x260] sm:$0xff]
        %v2647 = vld [vmem:[#allocation7 + $0x268] sm:$0xff]
        %v2648 = vld [vmem:[#allocation7 + $0x270] sm:$0xff]
        %v2649 = vld [vmem:[#allocation7 + $0x278] sm:$0xff]
        %v2650 = vld [vmem:[#allocation7 + $0x280] sm:$0xff]
        %v2651 = vld [vmem:[#allocation7 + $0x288] sm:$0xff]
        %v2652 = vld [vmem:[#allocation7 + $0x290] sm:$0xff]
        %v2653 = vld [vmem:[#allocation7 + $0x298] sm:$0xff]
        %v2654 = vld [vmem:[#allocation7 + $0x2a0] sm:$0xff]
        %v2655 = vld [vmem:[#allocation7 + $0x2a8] sm:$0xff]
        %v2656 = vld [vmem:[#allocation7 + $0x2b0] sm:$0xff]
        %v2657 = vld [vmem:[#allocation7 + $0x2b8] sm:$0xff]
        %v2658 = vld [vmem:[#allocation7 + $0x2c0] sm:$0xff]
        %v2659 = vld [vmem:[#allocation7 + $0x2c8] sm:$0xff]
        %v2660 = vld [vmem:[#allocation7 + $0x2d0] sm:$0xff]
        %v2661 = vld [vmem:[#allocation7 + $0x2d8] sm:$0xff]
        %v2662 = vld [vmem:[#allocation7 + $0x2e0] sm:$0xff]
        %v2663 = vld [vmem:[#allocation7 + $0x2e8] sm:$0xff]
        %v2664 = vld [vmem:[#allocation7 + $0x2f0] sm:$0xff]
        %v2665 = vld [vmem:[#allocation7 + $0x2f8] sm:$0xff]
        %v2666 = vld [vmem:[#allocation7 + $0x300] sm:$0xff]
        %v2667 = vld [vmem:[#allocation7 + $0x308] sm:$0xff]
        %v2668 = vld [vmem:[#allocation7 + $0x310] sm:$0xff]
        %v2669 = vld [vmem:[#allocation7 + $0x318] sm:$0xff]
        %v2670 = vld [vmem:[#allocation7 + $0x320] sm:$0xff]
        %v2671 = vld [vmem:[#allocation7 + $0x328] sm:$0xff]
        %v2672 = vld [vmem:[#allocation7 + $0x330] sm:$0xff]
        %v2673 = vld [vmem:[#allocation7 + $0x338] sm:$0xff]
        %v2674 = vld [vmem:[#allocation7 + $0x340] sm:$0xff]
        %v2675 = vld [vmem:[#allocation7 + $0x348] sm:$0xff]
        %v2676 = vld [vmem:[#allocation7 + $0x350] sm:$0xff]
        %v2677 = vld [vmem:[#allocation7 + $0x358] sm:$0xff]
        %v2678 = vld [vmem:[#allocation7 + $0x360] sm:$0xff]
        %v2679 = vld [vmem:[#allocation7 + $0x368] sm:$0xff]
        %v2680 = vld [vmem:[#allocation7 + $0x370] sm:$0xff]
        %v2681 = vld [vmem:[#allocation7 + $0x378] sm:$0xff]
        %v2682 = vld [vmem:[#allocation7 + $0x380] sm:$0xff]
        %v2683 = vld [vmem:[#allocation7 + $0x388] sm:$0xff]
        %v2684 = vld [vmem:[#allocation7 + $0x390] sm:$0xff]
        %v2685 = vld [vmem:[#allocation7 + $0x398] sm:$0xff]
        %v2686 = vld [vmem:[#allocation7 + $0x3a0] sm:$0xff]
        %v2687 = vld [vmem:[#allocation7 + $0x3a8] sm:$0xff]
        %v2688 = vld [vmem:[#allocation7 + $0x3b0] sm:$0xff]
        %v2689 = vld [vmem:[#allocation7 + $0x3b8] sm:$0xff]
        %v2690 = vld [vmem:[#allocation7 + $0x3c0] sm:$0xff]
        %v2691 = vld [vmem:[#allocation7 + $0x3c8] sm:$0xff]
        %v2692 = vld [vmem:[#allocation7 + $0x3d0] sm:$0xff]
        %v2693 = vld [vmem:[#allocation7 + $0x3d8] sm:$0xff]
        %v2694 = vld [vmem:[#allocation7 + $0x3e0] sm:$0xff]
        %v2695 = vld [vmem:[#allocation7 + $0x3e8] sm:$0xff]
        %v2696 = vld [vmem:[#allocation7 + $0x3f0] sm:$0xff]
        %v2697 = vld [vmem:[#allocation7 + $0x3f8] sm:$0xff]
        %v2698 = vld [vmem:[#allocation7 + $0x400] sm:$0xff]
        %v2699 = vld [vmem:[#allocation7 + $0x408] sm:$0xff]
        %v2700 = vld [vmem:[#allocation7 + $0x410] sm:$0xff]
        %v2701 = vld [vmem:[#allocation7 + $0x418] sm:$0xff]
        %v2702 = vld [vmem:[#allocation7 + $0x420] sm:$0xff]
        %v2703 = vld [vmem:[#allocation7 + $0x428] sm:$0xff]
        %v2704 = vld [vmem:[#allocation7 + $0x430] sm:$0xff]
        %v2705 = vld [vmem:[#allocation7 + $0x438] sm:$0xff]
        %v2706 = vld [vmem:[#allocation7 + $0x440] sm:$0xff]
        %v2707 = vld [vmem:[#allocation7 + $0x448] sm:$0xff]
        %v2708 = vld [vmem:[#allocation7 + $0x450] sm:$0xff]
        %v2709 = vld [vmem:[#allocation7 + $0x458] sm:$0xff]
        %v2710 = vld [vmem:[#allocation7 + $0x460] sm:$0xff]
        %v2711 = vld [vmem:[#allocation7 + $0x468] sm:$0xff]
        %v2712 = vld [vmem:[#allocation7 + $0x470] sm:$0xff]
        %v2713 = vld [vmem:[#allocation7 + $0x478] sm:$0xff]
        %v2714 = vld [vmem:[#allocation7 + $0x480] sm:$0xff]
        %v2715 = vld [vmem:[#allocation7 + $0x488] sm:$0xff]
        %v2716 = vld [vmem:[#allocation7 + $0x490] sm:$0xff]
        %v2717 = vld [vmem:[#allocation7 + $0x498] sm:$0xff]
        %v2718 = vld [vmem:[#allocation7 + $0x4a0] sm:$0xff]
        %v2719 = vld [vmem:[#allocation7 + $0x4a8] sm:$0xff]
        %v2720 = vld [vmem:[#allocation7 + $0x4b0] sm:$0xff]
        %v2721 = vld [vmem:[#allocation7 + $0x4b8] sm:$0xff]
        %v2722 = vld [vmem:[#allocation7 + $0x4c0] sm:$0xff]
        %v2723 = vld [vmem:[#allocation7 + $0x4c8] sm:$0xff]
        %v2724 = vld [vmem:[#allocation7 + $0x4d0] sm:$0xff]
        %v2725 = vld [vmem:[#allocation7 + $0x4d8] sm:$0xff]
        %v2726 = vld [vmem:[#allocation7 + $0x4e0] sm:$0xff]
        %v2727 = vld [vmem:[#allocation7 + $0x4e8] sm:$0xff]
        %v2728 = vld [vmem:[#allocation7 + $0x4f0] sm:$0xff]
        %v2729 = vld [vmem:[#allocation7 + $0x4f8] sm:$0xff]
        %v2730 = vld [vmem:[#allocation7 + $0x500] sm:$0xff]
        %v2731 = vld [vmem:[#allocation7 + $0x508] sm:$0xff]
        %v2732 = vld [vmem:[#allocation7 + $0x510] sm:$0xff]
        %v2733 = vld [vmem:[#allocation7 + $0x518] sm:$0xff]
        %v2734 = vld [vmem:[#allocation7 + $0x520] sm:$0xff]
        %v2735 = vld [vmem:[#allocation7 + $0x528] sm:$0xff]
        %v2736 = vld [vmem:[#allocation7 + $0x530] sm:$0xff]
        %v2737 = vld [vmem:[#allocation7 + $0x538] sm:$0xff]
        %v2738 = vld [vmem:[#allocation7 + $0x540] sm:$0xff]
        %v2739 = vld [vmem:[#allocation7 + $0x548] sm:$0xff]
        %v2740 = vld [vmem:[#allocation7 + $0x550] sm:$0xff]
        %v2741 = vld [vmem:[#allocation7 + $0x558] sm:$0xff]
        %v2742 = vld [vmem:[#allocation7 + $0x560] sm:$0xff]
        %v2743 = vld [vmem:[#allocation7 + $0x568] sm:$0xff]
        %v2744 = vld [vmem:[#allocation7 + $0x570] sm:$0xff]
        %v2745 = vld [vmem:[#allocation7 + $0x578] sm:$0xff]
        %v2746 = vld [vmem:[#allocation7 + $0x580] sm:$0xff]
        %v2747 = vld [vmem:[#allocation7 + $0x588] sm:$0xff]
        %v2748 = vld [vmem:[#allocation7 + $0x590] sm:$0xff]
        %v2749 = vld [vmem:[#allocation7 + $0x598] sm:$0xff]
        %v2750 = vld [vmem:[#allocation7 + $0x5a0] sm:$0xff]
        %v2751 = vld [vmem:[#allocation7 + $0x5a8] sm:$0xff]
        %v2752 = vld [vmem:[#allocation7 + $0x5b0] sm:$0xff]
        %v2753 = vld [vmem:[#allocation7 + $0x5b8] sm:$0xff]
        %v2754 = vld [vmem:[#allocation7 + $0x5c0] sm:$0xff]
        %v2755 = vld [vmem:[#allocation7 + $0x5c8] sm:$0xff]
        %v2756 = vld [vmem:[#allocation7 + $0x5d0] sm:$0xff]
        %v2757 = vld [vmem:[#allocation7 + $0x5d8] sm:$0xff]
        %v2758 = vld [vmem:[#allocation7 + $0x5e0] sm:$0xff]
        %v2759 = vld [vmem:[#allocation7 + $0x5e8] sm:$0xff]
        %v2760 = vld [vmem:[#allocation7 + $0x5f0] sm:$0xff]
        %v2761 = vld [vmem:[#allocation7 + $0x5f8] sm:$0xff]
        %v2762 = vld [vmem:[#allocation7 + $0x600] sm:$0xff]
        %v2763 = vld [vmem:[#allocation7 + $0x608] sm:$0xff]
        %v2764 = vld [vmem:[#allocation7 + $0x610] sm:$0xff]
        %v2765 = vld [vmem:[#allocation7 + $0x618] sm:$0xff]
        %v2766 = vld [vmem:[#allocation7 + $0x620] sm:$0xff]
        %v2767 = vld [vmem:[#allocation7 + $0x628] sm:$0xff]
        %v2768 = vld [vmem:[#allocation7 + $0x630] sm:$0xff]
        %v2769 = vld [vmem:[#allocation7 + $0x638] sm:$0xff]
        %v2770 = vld [vmem:[#allocation7 + $0x640] sm:$0xff]
        %v2771 = vld [vmem:[#allocation7 + $0x648] sm:$0xff]
        %v2772 = vld [vmem:[#allocation7 + $0x650] sm:$0xff]
        %v2773 = vld [vmem:[#allocation7 + $0x658] sm:$0xff]
        %v2774 = vld [vmem:[#allocation7 + $0x660] sm:$0xff]
        %v2775 = vld [vmem:[#allocation7 + $0x668] sm:$0xff]
        %v2776 = vld [vmem:[#allocation7 + $0x670] sm:$0xff]
        %v2777 = vld [vmem:[#allocation7 + $0x678] sm:$0xff]
        %v2778 = vld [vmem:[#allocation7 + $0x680] sm:$0xff]
        %v2779 = vld [vmem:[#allocation7 + $0x688] sm:$0xff]
        %v2780 = vld [vmem:[#allocation7 + $0x690] sm:$0xff]
        %v2781 = vld [vmem:[#allocation7 + $0x698] sm:$0xff]
        %v2782 = vld [vmem:[#allocation7 + $0x6a0] sm:$0xff]
        %v2783 = vld [vmem:[#allocation7 + $0x6a8] sm:$0xff]
        %v2784 = vld [vmem:[#allocation7 + $0x6b0] sm:$0xff]
        %v2785 = vld [vmem:[#allocation7 + $0x6b8] sm:$0xff]
        %v2786 = vld [vmem:[#allocation7 + $0x6c0] sm:$0xff]
        %v2787 = vld [vmem:[#allocation7 + $0x6c8] sm:$0xff]
        %v2788 = vld [vmem:[#allocation7 + $0x6d0] sm:$0xff]
        %v2789 = vld [vmem:[#allocation7 + $0x6d8] sm:$0xff]
        %v2790 = vld [vmem:[#allocation7 + $0x6e0] sm:$0xff]
        %v2791 = vld [vmem:[#allocation7 + $0x6e8] sm:$0xff]
        %v2792 = vld [vmem:[#allocation7 + $0x6f0] sm:$0xff]
        %v2793 = vld [vmem:[#allocation7 + $0x6f8] sm:$0xff]
        %v2794 = vld [vmem:[#allocation7 + $0x700] sm:$0xff]
        %v2795 = vld [vmem:[#allocation7 + $0x708] sm:$0xff]
        %v2796 = vld [vmem:[#allocation7 + $0x710] sm:$0xff]
        %v2797 = vld [vmem:[#allocation7 + $0x718] sm:$0xff]
        %v2798 = vld [vmem:[#allocation7 + $0x720] sm:$0xff]
        %v2799 = vld [vmem:[#allocation7 + $0x728] sm:$0xff]
        %v2800 = vld [vmem:[#allocation7 + $0x730] sm:$0xff]
        %v2801 = vld [vmem:[#allocation7 + $0x738] sm:$0xff]
        %v2802 = vld [vmem:[#allocation7 + $0x740] sm:$0xff]
        %v2803 = vld [vmem:[#allocation7 + $0x748] sm:$0xff]
        %v2804 = vld [vmem:[#allocation7 + $0x750] sm:$0xff]
        %v2805 = vld [vmem:[#allocation7 + $0x758] sm:$0xff]
        %v2806 = vld [vmem:[#allocation7 + $0x760] sm:$0xff]
        %v2807 = vld [vmem:[#allocation7 + $0x768] sm:$0xff]
        %v2808 = vld [vmem:[#allocation7 + $0x770] sm:$0xff]
        %v2809 = vld [vmem:[#allocation7 + $0x778] sm:$0xff]
        %v2810 = vld [vmem:[#allocation7 + $0x780] sm:$0xff]
        %v2811 = vld [vmem:[#allocation7 + $0x788] sm:$0xff]
        %v2812 = vld [vmem:[#allocation7 + $0x790] sm:$0xff]
        %v2813 = vld [vmem:[#allocation7 + $0x798] sm:$0xff]
        %v2814 = vld [vmem:[#allocation7 + $0x7a0] sm:$0xff]
        %v2815 = vld [vmem:[#allocation7 + $0x7a8] sm:$0xff]
        %v2816 = vld [vmem:[#allocation7 + $0x7b0] sm:$0xff]
        %v2817 = vld [vmem:[#allocation7 + $0x7b8] sm:$0xff]
        %v2818 = vld [vmem:[#allocation7 + $0x7c0] sm:$0xff]
        %v2819 = vld [vmem:[#allocation7 + $0x7c8] sm:$0xff]
        %v2820 = vld [vmem:[#allocation7 + $0x7d0] sm:$0xff]
        %v2821 = vld [vmem:[#allocation7 + $0x7d8] sm:$0xff]
        %v2822 = vld [vmem:[#allocation7 + $0x7e0] sm:$0xff]
        %v2823 = vld [vmem:[#allocation7 + $0x7e8] sm:$0xff]
        %v2824 = vld [vmem:[#allocation7 + $0x7f0] sm:$0xff]
        %v2825 = vld [vmem:[#allocation7 + $0x7f8] sm:$0xff]
        %2826 = vmatprep.subr.mxu0 %v2571
        %2827 = vmatpush1.msra.mxu0 %v2570
        %2828 = vmatprep.subr.mxu0 %v2579
        %2829 = vmatpush1.msra.mxu0 %v2578
        %2830 = vmatprep.subr.mxu0 %v2587
        %2831 = vmatpush1.msra.mxu0 %v2586
        %2832 = vmatprep.subr.mxu0 %v2595
        %2833 = vmatpush1.msra.mxu0 %v2594
        %2834 = vmatprep.subr.mxu0 %v2603
        %2835 = vmatpush1.msra.mxu0 %v2602
        %2836 = vmatprep.subr.mxu0 %v2611
        %2837 = vmatpush1.msra.mxu0 %v2610
        %2838 = vmatprep.subr.mxu0 %v2619
        %2839 = vmatpush1.msra.mxu0 %v2618
        %2840 = vmatprep.subr.mxu0 %v2627
        %2841 = vmatpush1.msra.mxu0 %v2626
        %2842 = vmatprep.subr.mxu0 %v2635
        %2843 = vmatpush1.msra.mxu0 %v2634
        %2844 = vmatprep.subr.mxu0 %v2643
        %2845 = vmatpush1.msra.mxu0 %v2642
        %2846 = vmatprep.subr.mxu0 %v2651
        %2847 = vmatpush1.msra.mxu0 %v2650
        %2848 = vmatprep.subr.mxu0 %v2659
        %2849 = vmatpush1.msra.mxu0 %v2658
        %2850 = vmatprep.subr.mxu0 %v2667
        %2851 = vmatpush1.msra.mxu0 %v2666
        %2852 = vmatprep.subr.mxu0 %v2675
        %2853 = vmatpush1.msra.mxu0 %v2674
        %2854 = vmatprep.subr.mxu0 %v2683
        %2855 = vmatpush1.msra.mxu0 %v2682
        %2856 = vmatprep.subr.mxu0 %v2691
        %2857 = vmatpush1.msra.mxu0 %v2690
        %2858 = vmatprep.subr.mxu0 %v2699
        %2859 = vmatpush1.msra.mxu0 %v2698
        %2860 = vmatprep.subr.mxu0 %v2707
        %2861 = vmatpush1.msra.mxu0 %v2706
        %2862 = vmatprep.subr.mxu0 %v2715
        %2863 = vmatpush1.msra.mxu0 %v2714
        %2864 = vmatprep.subr.mxu0 %v2723
        %2865 = vmatpush1.msra.mxu0 %v2722
        %2866 = vmatprep.subr.mxu0 %v2731
        %2867 = vmatpush1.msra.mxu0 %v2730
        %2868 = vmatprep.subr.mxu0 %v2739
        %2869 = vmatpush1.msra.mxu0 %v2738
        %2870 = vmatprep.subr.mxu0 %v2747
        %2871 = vmatpush1.msra.mxu0 %v2746
        %2872 = vmatprep.subr.mxu0 %v2755
        %2873 = vmatpush1.msra.mxu0 %v2754
        %2874 = vmatprep.subr.mxu0 %v2763
        %2875 = vmatpush1.msra.mxu0 %v2762
        %2876 = vmatprep.subr.mxu0 %v2771
        %2877 = vmatpush1.msra.mxu0 %v2770
        %2878 = vmatprep.subr.mxu0 %v2779
        %2879 = vmatpush1.msra.mxu0 %v2778
        %2880 = vmatprep.subr.mxu0 %v2787
        %2881 = vmatpush1.msra.mxu0 %v2786
        %2882 = vmatprep.subr.mxu0 %v2795
        %2883 = vmatpush1.msra.mxu0 %v2794
        %2884 = vmatprep.subr.mxu0 %v2803
        %2885 = vmatpush1.msra.mxu0 %v2802
        %2886 = vmatprep.subr.mxu0 %v2811
        %2887 = vmatpush1.msra.mxu0 %v2810
        %2888 = vmatprep.subr.mxu0 %v2819
        %2889 = vmatpush1.msra.mxu0 %v2818
        %2890 = vmatprep.mubr.f32.mxu0 %v2567
        %2891 = vmatmul.mubr.f32.gmra.mrb[0].mxu0 %v2566
        %v2892 = vpop.f32.mrb[0].mxu0
        %v2893 = vadd.f32 0.0, %v2892
        %v2894 = vpop.f32.mrb[0].mxu0
        %v2895 = vadd.f32 0.0, %v2894
        %2896 = vmatprep.mubr.f32.mxu0 %v2569
        %2897 = vmatmul.mubr.f32.gmra.mrb[0].mxu0 %v2568
        %v2898 = vpop.f32.mrb[0].mxu0
        %v2899 = vadd.f32 0.0, %v2898
        %v2900 = vpop.f32.mrb[0].mxu0
        %v2901 = vadd.f32 0.0, %v2900
        %2902 = vdwg.mxu0
        %2903 = vmatprep.subr.mxu0 %v2573
        %2904 = vmatpush1.msra.mxu0 %v2572
        %2905 = vmatprep.subr.mxu0 %v2581
        %2906 = vmatpush1.msra.mxu0 %v2580
        %2907 = vmatprep.subr.mxu0 %v2589
        %2908 = vmatpush1.msra.mxu0 %v2588
        %2909 = vmatprep.subr.mxu0 %v2597
        %2910 = vmatpush1.msra.mxu0 %v2596
        %2911 = vmatprep.subr.mxu0 %v2605
        %2912 = vmatpush1.msra.mxu0 %v2604
        %2913 = vmatprep.subr.mxu0 %v2613
        %2914 = vmatpush1.msra.mxu0 %v2612
        %2915 = vmatprep.subr.mxu0 %v2621
        %2916 = vmatpush1.msra.mxu0 %v2620
        %2917 = vmatprep.subr.mxu0 %v2629
        %2918 = vmatpush1.msra.mxu0 %v2628
        %2919 = vmatprep.subr.mxu0 %v2637
        %2920 = vmatpush1.msra.mxu0 %v2636
        %2921 = vmatprep.subr.mxu0 %v2645
        %2922 = vmatpush1.msra.mxu0 %v2644
        %2923 = vmatprep.subr.mxu0 %v2653
        %2924 = vmatpush1.msra.mxu0 %v2652
        %2925 = vmatprep.subr.mxu0 %v2661
        %2926 = vmatpush1.msra.mxu0 %v2660
        %2927 = vmatprep.subr.mxu0 %v2669
        %2928 = vmatpush1.msra.mxu0 %v2668
        %2929 = vmatprep.subr.mxu0 %v2677
        %2930 = vmatpush1.msra.mxu0 %v2676
        %2931 = vmatprep.subr.mxu0 %v2685
        %2932 = vmatpush1.msra.mxu0 %v2684
        %2933 = vmatprep.subr.mxu0 %v2693
        %2934 = vmatpush1.msra.mxu0 %v2692
        %2935 = vmatprep.subr.mxu0 %v2701
        %2936 = vmatpush1.msra.mxu0 %v2700
        %2937 = vmatprep.subr.mxu0 %v2709
        %2938 = vmatpush1.msra.mxu0 %v2708
        %2939 = vmatprep.subr.mxu0 %v2717
        %2940 = vmatpush1.msra.mxu0 %v2716
        %2941 = vmatprep.subr.mxu0 %v2725
        %2942 = vmatpush1.msra.mxu0 %v2724
        %2943 = vmatprep.subr.mxu0 %v2733
        %2944 = vmatpush1.msra.mxu0 %v2732
        %2945 = vmatprep.subr.mxu0 %v2741
        %2946 = vmatpush1.msra.mxu0 %v2740
        %2947 = vmatprep.subr.mxu0 %v2749
        %2948 = vmatpush1.msra.mxu0 %v2748
        %2949 = vmatprep.subr.mxu0 %v2757
        %2950 = vmatpush1.msra.mxu0 %v2756
        %2951 = vmatprep.subr.mxu0 %v2765
        %2952 = vmatpush1.msra.mxu0 %v2764
        %2953 = vmatprep.subr.mxu0 %v2773
        %2954 = vmatpush1.msra.mxu0 %v2772
        %2955 = vmatprep.subr.mxu0 %v2781
        %2956 = vmatpush1.msra.mxu0 %v2780
        %2957 = vmatprep.subr.mxu0 %v2789
        %2958 = vmatpush1.msra.mxu0 %v2788
        %2959 = vmatprep.subr.mxu0 %v2797
        %2960 = vmatpush1.msra.mxu0 %v2796
        %2961 = vmatprep.subr.mxu0 %v2805
        %2962 = vmatpush1.msra.mxu0 %v2804
        %2963 = vmatprep.subr.mxu0 %v2813
        %2964 = vmatpush1.msra.mxu0 %v2812
        %2965 = vmatprep.subr.mxu0 %v2821
        %2966 = vmatpush1.msra.mxu0 %v2820
        %2967 = vmatprep.mubr.f32.mxu0 %v2567
        %2968 = vmatmul.mubr.f32.gmra.mrb[0].mxu0 %v2566
        %v2969 = vpop.f32.mrb[0].mxu0
        %v2970 = vadd.f32 0.0, %v2969
        %v2971 = vpop.f32.mrb[0].mxu0
        %v2972 = vadd.f32 0.0, %v2971
        %2973 = vmatprep.mubr.f32.mxu0 %v2569
        %2974 = vmatmul.mubr.f32.gmra.mrb[0].mxu0 %v2568
        %v2975 = vpop.f32.mrb[0].mxu0
        %v2976 = vadd.f32 0.0, %v2975
        %v2977 = vpop.f32.mrb[0].mxu0
        %v2978 = vadd.f32 0.0, %v2977
        %2979 = vdwg.mxu0
        %2980 = vmatprep.subr.mxu0 %v2575
        %2981 = vmatpush1.msra.mxu0 %v2574
        %2982 = vmatprep.subr.mxu0 %v2583
        %2983 = vmatpush1.msra.mxu0 %v2582
        %2984 = vmatprep.subr.mxu0 %v2591
        %2985 = vmatpush1.msra.mxu0 %v2590
        %2986 = vmatprep.subr.mxu0 %v2599
        %2987 = vmatpush1.msra.mxu0 %v2598
        %2988 = vmatprep.subr.mxu0 %v2607
        %2989 = vmatpush1.msra.mxu0 %v2606
        %2990 = vmatprep.subr.mxu0 %v2615
        %2991 = vmatpush1.msra.mxu0 %v2614
        %2992 = vmatprep.subr.mxu0 %v2623
        %2993 = vmatpush1.msra.mxu0 %v2622
        %2994 = vmatprep.subr.mxu0 %v2631
        %2995 = vmatpush1.msra.mxu0 %v2630
        %2996 = vmatprep.subr.mxu0 %v2639
        %2997 = vmatpush1.msra.mxu0 %v2638
        %2998 = vmatprep.subr.mxu0 %v2647
        %2999 = vmatpush1.msra.mxu0 %v2646
        %3000 = vmatprep.subr.mxu0 %v2655
        %3001 = vmatpush1.msra.mxu0 %v2654
        %3002 = vmatprep.subr.mxu0 %v2663
        %3003 = vmatpush1.msra.mxu0 %v2662
        %3004 = vmatprep.subr.mxu0 %v2671
        %3005 = vmatpush1.msra.mxu0 %v2670
        %3006 = vmatprep.subr.mxu0 %v2679
        %3007 = vmatpush1.msra.mxu0 %v2678
        %3008 = vmatprep.subr.mxu0 %v2687
        %3009 = vmatpush1.msra.mxu0 %v2686
        %3010 = vmatprep.subr.mxu0 %v2695
        %3011 = vmatpush1.msra.mxu0 %v2694
        %3012 = vmatprep.subr.mxu0 %v2703
        %3013 = vmatpush1.msra.mxu0 %v2702
        %3014 = vmatprep.subr.mxu0 %v2711
        %3015 = vmatpush1.msra.mxu0 %v2710
        %3016 = vmatprep.subr.mxu0 %v2719
        %3017 = vmatpush1.msra.mxu0 %v2718
        %3018 = vmatprep.subr.mxu0 %v2727
        %3019 = vmatpush1.msra.mxu0 %v2726
        %3020 = vmatprep.subr.mxu0 %v2735
        %3021 = vmatpush1.msra.mxu0 %v2734
        %3022 = vmatprep.subr.mxu0 %v2743
        %3023 = vmatpush1.msra.mxu0 %v2742
        %3024 = vmatprep.subr.mxu0 %v2751
        %3025 = vmatpush1.msra.mxu0 %v2750
        %3026 = vmatprep.subr.mxu0 %v2759
        %3027 = vmatpush1.msra.mxu0 %v2758
        %3028 = vmatprep.subr.mxu0 %v2767
        %3029 = vmatpush1.msra.mxu0 %v2766
        %3030 = vmatprep.subr.mxu0 %v2775
        %3031 = vmatpush1.msra.mxu0 %v2774
        %3032 = vmatprep.subr.mxu0 %v2783
        %3033 = vmatpush1.msra.mxu0 %v2782
        %3034 = vmatprep.subr.mxu0 %v2791
        %3035 = vmatpush1.msra.mxu0 %v2790
        %3036 = vmatprep.subr.mxu0 %v2799
        %3037 = vmatpush1.msra.mxu0 %v2798
        %3038 = vmatprep.subr.mxu0 %v2807
        %3039 = vmatpush1.msra.mxu0 %v2806
        %3040 = vmatprep.subr.mxu0 %v2815
        %3041 = vmatpush1.msra.mxu0 %v2814
        %3042 = vmatprep.subr.mxu0 %v2823
        %3043 = vmatpush1.msra.mxu0 %v2822
        %3044 = vmatprep.mubr.f32.mxu0 %v2567
        %3045 = vmatmul.mubr.f32.gmra.mrb[0].mxu0 %v2566
        %v3046 = vpop.f32.mrb[0].mxu0
        %v3047 = vadd.f32 0.0, %v3046
        %v3048 = vpop.f32.mrb[0].mxu0
        %v3049 = vadd.f32 0.0, %v3048
        %3050 = vmatprep.mubr.f32.mxu0 %v2569
        %3051 = vmatmul.mubr.f32.gmra.mrb[0].mxu0 %v2568
        %v3052 = vpop.f32.mrb[0].mxu0
        %v3053 = vadd.f32 0.0, %v3052
        %v3054 = vpop.f32.mrb[0].mxu0
        %v3055 = vadd.f32 0.0, %v3054
        %3056 = vdwg.mxu0
        %3057 = vmatprep.subr.mxu0 %v2577
        %3058 = vmatpush1.msra.mxu0 %v2576
        %3059 = vmatprep.subr.mxu0 %v2585
        %3060 = vmatpush1.msra.mxu0 %v2584
        %3061 = vmatprep.subr.mxu0 %v2593
        %3062 = vmatpush1.msra.mxu0 %v2592
        %3063 = vmatprep.subr.mxu0 %v2601
        %3064 = vmatpush1.msra.mxu0 %v2600
        %3065 = vmatprep.subr.mxu0 %v2609
        %3066 = vmatpush1.msra.mxu0 %v2608
        %3067 = vmatprep.subr.mxu0 %v2617
        %3068 = vmatpush1.msra.mxu0 %v2616
        %3069 = vmatprep.subr.mxu0 %v2625
        %3070 = vmatpush1.msra.mxu0 %v2624
        %3071 = vmatprep.subr.mxu0 %v2633
        %3072 = vmatpush1.msra.mxu0 %v2632
        %3073 = vmatprep.subr.mxu0 %v2641
        %3074 = vmatpush1.msra.mxu0 %v2640
        %3075 = vmatprep.subr.mxu0 %v2649
        %3076 = vmatpush1.msra.mxu0 %v2648
        %3077 = vmatprep.subr.mxu0 %v2657
        %3078 = vmatpush1.msra.mxu0 %v2656
        %3079 = vmatprep.subr.mxu0 %v2665
        %3080 = vmatpush1.msra.mxu0 %v2664
        %3081 = vmatprep.subr.mxu0 %v2673
        %3082 = vmatpush1.msra.mxu0 %v2672
        %3083 = vmatprep.subr.mxu0 %v2681
        %3084 = vmatpush1.msra.mxu0 %v2680
        %3085 = vmatprep.subr.mxu0 %v2689
        %3086 = vmatpush1.msra.mxu0 %v2688
        %3087 = vmatprep.subr.mxu0 %v2697
        %3088 = vmatpush1.msra.mxu0 %v2696
        %3089 = vmatprep.subr.mxu0 %v2705
        %3090 = vmatpush1.msra.mxu0 %v2704
        %3091 = vmatprep.subr.mxu0 %v2713
        %3092 = vmatpush1.msra.mxu0 %v2712
        %3093 = vmatprep.subr.mxu0 %v2721
        %3094 = vmatpush1.msra.mxu0 %v2720
        %3095 = vmatprep.subr.mxu0 %v2729
        %3096 = vmatpush1.msra.mxu0 %v2728
        %3097 = vmatprep.subr.mxu0 %v2737
        %3098 = vmatpush1.msra.mxu0 %v2736
        %3099 = vmatprep.subr.mxu0 %v2745
        %3100 = vmatpush1.msra.mxu0 %v2744
        %3101 = vmatprep.subr.mxu0 %v2753
        %3102 = vmatpush1.msra.mxu0 %v2752
        %3103 = vmatprep.subr.mxu0 %v2761
        %3104 = vmatpush1.msra.mxu0 %v2760
        %3105 = vmatprep.subr.mxu0 %v2769
        %3106 = vmatpush1.msra.mxu0 %v2768
        %3107 = vmatprep.subr.mxu0 %v2777
        %3108 = vmatpush1.msra.mxu0 %v2776
        %3109 = vmatprep.subr.mxu0 %v2785
        %3110 = vmatpush1.msra.mxu0 %v2784
        %3111 = vmatprep.subr.mxu0 %v2793
        %3112 = vmatpush1.msra.mxu0 %v2792
        %3113 = vmatprep.subr.mxu0 %v2801
        %3114 = vmatpush1.msra.mxu0 %v2800
        %3115 = vmatprep.subr.mxu0 %v2809
        %3116 = vmatpush1.msra.mxu0 %v2808
        %3117 = vmatprep.subr.mxu0 %v2817
        %3118 = vmatpush1.msra.mxu0 %v2816
        %3119 = vmatprep.subr.mxu0 %v2825
        %3120 = vmatpush1.msra.mxu0 %v2824
        %3121 = vmatprep.mubr.f32.mxu0 %v2567
        %3122 = vmatmul.mubr.f32.gmra.mrb[0].mxu0 %v2566
        %v3123 = vpop.f32.mrb[0].mxu0
        %v3124 = vadd.f32 0.0, %v3123
        %v3125 = vpop.f32.mrb[0].mxu0
        %v3126 = vadd.f32 0.0, %v3125
        %3127 = vmatprep.mubr.f32.mxu0 %v2569
        %3128 = vmatmul.mubr.f32.gmra.mrb[0].mxu0 %v2568
        %v3129 = vpop.f32.mrb[0].mxu0
        %v3130 = vadd.f32 0.0, %v3129
        %v3131 = vpop.f32.mrb[0].mxu0
        %v3132 = vadd.f32 0.0, %v3131
        %3133 = vdwg.mxu0
        %v3134 = vld [vmem:[%s6] sm:$0xff]
        %s3135 = scalar_lea.vmem %s6, 8
        %v3136 = vld [vmem:[%s3135] sm:$0xff]
        %vm3137 = vcmask 130048
        %v3139 = vsel %vm3137, %v3136, 0
        %3141 = vmatprep.subr.mxu0 %v2972
        %3142 = vmatpush1.msra.mxu0 %v2970
        %3143 = vmatprep.subr.mxu0 %v2978
        %3144 = vmatpush1.msra.mxu0 %v2976
        %3145 = vmatprep.subr.mxu0 0.0
        %3146 = vmatpush1.msra.mxu0 0.0
        %3147 = vmatprep.subr.mxu0 0.0
        %3148 = vmatpush1.msra.mxu0 0.0
        %3149 = vmatprep.subr.mxu0 0.0
        %3150 = vmatpush1.msra.mxu0 0.0
        %3151 = vmatprep.subr.mxu0 0.0
        %3152 = vmatpush1.msra.mxu0 0.0
        %3153 = vmatprep.subr.mxu0 0.0
        %3154 = vmatpush1.msra.mxu0 0.0
        %3155 = vmatprep.subr.mxu0 0.0
        %3156 = vmatpush1.msra.mxu0 0.0
        %3157 = vmatprep.subr.mxu0 0.0
        %3158 = vmatpush1.msra.mxu0 0.0
        %3159 = vmatprep.subr.mxu0 0.0
        %3160 = vmatpush1.msra.mxu0 0.0
        %3161 = vmatprep.subr.mxu0 0.0
        %3162 = vmatpush1.msra.mxu0 0.0
        %3163 = vmatprep.subr.mxu0 0.0
        %3164 = vmatpush1.msra.mxu0 0.0
        %3165 = vmatprep.subr.mxu0 0.0
        %3166 = vmatpush1.msra.mxu0 0.0
        %3167 = vmatprep.subr.mxu0 0.0
        %3168 = vmatpush1.msra.mxu0 0.0
        %3169 = vmatprep.subr.mxu0 0.0
        %3170 = vmatpush1.msra.mxu0 0.0
        %3171 = vmatprep.subr.mxu0 0.0
        %3172 = vmatpush1.msra.mxu0 0.0
        %3173 = vmatprep.subr.mxu0 0.0
        %3174 = vmatpush1.msra.mxu0 0.0
        %3175 = vmatprep.subr.mxu0 0.0
        %3176 = vmatpush1.msra.mxu0 0.0
        %3177 = vmatprep.subr.mxu0 0.0
        %3178 = vmatpush1.msra.mxu0 0.0
        %3179 = vmatprep.subr.mxu0 0.0
        %3180 = vmatpush1.msra.mxu0 0.0
        %3181 = vmatprep.subr.mxu0 0.0
        %3182 = vmatpush1.msra.mxu0 0.0
        %3183 = vmatprep.subr.mxu0 0.0
        %3184 = vmatpush1.msra.mxu0 0.0
        %3185 = vmatprep.subr.mxu0 0.0
        %3186 = vmatpush1.msra.mxu0 0.0
        %3187 = vmatprep.subr.mxu0 0.0
        %3188 = vmatpush1.msra.mxu0 0.0
        %3189 = vmatprep.subr.mxu0 0.0
        %3190 = vmatpush1.msra.mxu0 0.0
        %3191 = vmatprep.subr.mxu0 0.0
        %3192 = vmatpush1.msra.mxu0 0.0
        %3193 = vmatprep.subr.mxu0 0.0
        %3194 = vmatpush1.msra.mxu0 0.0
        %3195 = vmatprep.subr.mxu0 0.0
        %3196 = vmatpush1.msra.mxu0 0.0
        %3197 = vmatprep.subr.mxu0 0.0
        %3198 = vmatpush1.msra.mxu0 0.0
        %3199 = vmatprep.subr.mxu0 0.0
        %3200 = vmatpush1.msra.mxu0 0.0
        %3201 = vmatprep.subr.mxu0 0.0
        %3202 = vmatpush1.msra.mxu0 0.0
        %3203 = vmatprep.subr.mxu0 0.0
        %3204 = vmatpush1.msra.mxu0 0.0
        %3205 = vmatprep.mubr.f32.mxu0 0.0
        %3206 = vmatmul.mubr.f32.gmra.mrb[0].mxu0 %v3139
        %v3207 = vpop.f32.mrb[0].mxu0
        %v3208 = vadd.f32 0.0, %v3207
        %v3209 = vpop.f32.mrb[0].mxu0
        %v3210 = vadd.f32 0.0, %v3209
        %3211 = vdwg.mxu0
        %v3213 = vsel %vm3137, %v3134, 0
        %3215 = vmatprep.subr.mxu0 %v2895
        %3216 = vmatpush1.msra.mxu0 %v2893
        %3217 = vmatprep.subr.mxu0 %v2901
        %3218 = vmatpush1.msra.mxu0 %v2899
        %3219 = vmatprep.subr.mxu0 0.0
        %3220 = vmatpush1.msra.mxu0 0.0
        %3221 = vmatprep.subr.mxu0 0.0
        %3222 = vmatpush1.msra.mxu0 0.0
        %3223 = vmatprep.subr.mxu0 0.0
        %3224 = vmatpush1.msra.mxu0 0.0
        %3225 = vmatprep.subr.mxu0 0.0
        %3226 = vmatpush1.msra.mxu0 0.0
        %3227 = vmatprep.subr.mxu0 0.0
        %3228 = vmatpush1.msra.mxu0 0.0
        %3229 = vmatprep.subr.mxu0 0.0
        %3230 = vmatpush1.msra.mxu0 0.0
        %3231 = vmatprep.subr.mxu0 0.0
        %3232 = vmatpush1.msra.mxu0 0.0
        %3233 = vmatprep.subr.mxu0 0.0
        %3234 = vmatpush1.msra.mxu0 0.0
        %3235 = vmatprep.subr.mxu0 0.0
        %3236 = vmatpush1.msra.mxu0 0.0
        %3237 = vmatprep.subr.mxu0 0.0
        %3238 = vmatpush1.msra.mxu0 0.0
        %3239 = vmatprep.subr.mxu0 0.0
        %3240 = vmatpush1.msra.mxu0 0.0
        %3241 = vmatprep.subr.mxu0 0.0
        %3242 = vmatpush1.msra.mxu0 0.0
        %3243 = vmatprep.subr.mxu0 0.0
        %3244 = vmatpush1.msra.mxu0 0.0
        %3245 = vmatprep.subr.mxu0 0.0
        %3246 = vmatpush1.msra.mxu0 0.0
        %3247 = vmatprep.subr.mxu0 0.0
        %3248 = vmatpush1.msra.mxu0 0.0
        %3249 = vmatprep.subr.mxu0 0.0
        %3250 = vmatpush1.msra.mxu0 0.0
        %3251 = vmatprep.subr.mxu0 0.0
        %3252 = vmatpush1.msra.mxu0 0.0
        %3253 = vmatprep.subr.mxu0 0.0
        %3254 = vmatpush1.msra.mxu0 0.0
        %3255 = vmatprep.subr.mxu0 0.0
        %3256 = vmatpush1.msra.mxu0 0.0
        %3257 = vmatprep.subr.mxu0 0.0
        %3258 = vmatpush1.msra.mxu0 0.0
        %3259 = vmatprep.subr.mxu0 0.0
        %3260 = vmatpush1.msra.mxu0 0.0
        %3261 = vmatprep.subr.mxu0 0.0
        %3262 = vmatpush1.msra.mxu0 0.0
        %3263 = vmatprep.subr.mxu0 0.0
        %3264 = vmatpush1.msra.mxu0 0.0
        %3265 = vmatprep.subr.mxu0 0.0
        %3266 = vmatpush1.msra.mxu0 0.0
        %3267 = vmatprep.subr.mxu0 0.0
        %3268 = vmatpush1.msra.mxu0 0.0
        %3269 = vmatprep.subr.mxu0 0.0
        %3270 = vmatpush1.msra.mxu0 0.0
        %3271 = vmatprep.subr.mxu0 0.0
        %3272 = vmatpush1.msra.mxu0 0.0
        %3273 = vmatprep.subr.mxu0 0.0
        %3274 = vmatpush1.msra.mxu0 0.0
        %3275 = vmatprep.subr.mxu0 0.0
        %3276 = vmatpush1.msra.mxu0 0.0
        %3277 = vmatprep.subr.mxu0 0.0
        %3278 = vmatpush1.msra.mxu0 0.0
        %3279 = vmatprep.mubr.f32.mxu0 0.0
        %3280 = vmatmul.mubr.f32.gmra.mrb[0].mxu0 %v3213
        %v3281 = vpop.f32.mrb[0].mxu0
        %v3282 = vadd.f32 %v3208, %v3281
        %v3283 = vpop.f32.mrb[0].mxu0
        %v3284 = vadd.f32 %v3210, %v3283
        %3285 = vdwg.mxu0
        %s3286 = scalar_lea.vmem %s6, 16
        %v3287 = vld [vmem:[%s3286] sm:$0xff]
        %v3289 = vsel %vm3137, %v3287, 0
        %3291 = vmatprep.subr.mxu0 %v3049
        %3292 = vmatpush1.msra.mxu0 %v3047
        %3293 = vmatprep.subr.mxu0 %v3055
        %3294 = vmatpush1.msra.mxu0 %v3053
        %3295 = vmatprep.subr.mxu0 0.0
        %3296 = vmatpush1.msra.mxu0 0.0
        %3297 = vmatprep.subr.mxu0 0.0
        %3298 = vmatpush1.msra.mxu0 0.0
        %3299 = vmatprep.subr.mxu0 0.0
        %3300 = vmatpush1.msra.mxu0 0.0
        %3301 = vmatprep.subr.mxu0 0.0
        %3302 = vmatpush1.msra.mxu0 0.0
        %3303 = vmatprep.subr.mxu0 0.0
        %3304 = vmatpush1.msra.mxu0 0.0
        %3305 = vmatprep.subr.mxu0 0.0
        %3306 = vmatpush1.msra.mxu0 0.0
        %3307 = vmatprep.subr.mxu0 0.0
        %3308 = vmatpush1.msra.mxu0 0.0
        %3309 = vmatprep.subr.mxu0 0.0
        %3310 = vmatpush1.msra.mxu0 0.0
        %3311 = vmatprep.subr.mxu0 0.0
        %3312 = vmatpush1.msra.mxu0 0.0
        %3313 = vmatprep.subr.mxu0 0.0
        %3314 = vmatpush1.msra.mxu0 0.0
        %3315 = vmatprep.subr.mxu0 0.0
        %3316 = vmatpush1.msra.mxu0 0.0
        %3317 = vmatprep.subr.mxu0 0.0
        %3318 = vmatpush1.msra.mxu0 0.0
        %3319 = vmatprep.subr.mxu0 0.0
        %3320 = vmatpush1.msra.mxu0 0.0
        %3321 = vmatprep.subr.mxu0 0.0
        %3322 = vmatpush1.msra.mxu0 0.0
        %3323 = vmatprep.subr.mxu0 0.0
        %3324 = vmatpush1.msra.mxu0 0.0
        %3325 = vmatprep.subr.mxu0 0.0
        %3326 = vmatpush1.msra.mxu0 0.0
        %3327 = vmatprep.subr.mxu0 0.0
        %3328 = vmatpush1.msra.mxu0 0.0
        %3329 = vmatprep.subr.mxu0 0.0
        %3330 = vmatpush1.msra.mxu0 0.0
        %3331 = vmatprep.subr.mxu0 0.0
        %3332 = vmatpush1.msra.mxu0 0.0
        %3333 = vmatprep.subr.mxu0 0.0
        %3334 = vmatpush1.msra.mxu0 0.0
        %3335 = vmatprep.subr.mxu0 0.0
        %3336 = vmatpush1.msra.mxu0 0.0
        %3337 = vmatprep.subr.mxu0 0.0
        %3338 = vmatpush1.msra.mxu0 0.0
        %3339 = vmatprep.subr.mxu0 0.0
        %3340 = vmatpush1.msra.mxu0 0.0
        %3341 = vmatprep.subr.mxu0 0.0
        %3342 = vmatpush1.msra.mxu0 0.0
        %3343 = vmatprep.subr.mxu0 0.0
        %3344 = vmatpush1.msra.mxu0 0.0
        %3345 = vmatprep.subr.mxu0 0.0
        %3346 = vmatpush1.msra.mxu0 0.0
        %3347 = vmatprep.subr.mxu0 0.0
        %3348 = vmatpush1.msra.mxu0 0.0
        %3349 = vmatprep.subr.mxu0 0.0
        %3350 = vmatpush1.msra.mxu0 0.0
        %3351 = vmatprep.subr.mxu0 0.0
        %3352 = vmatpush1.msra.mxu0 0.0
        %3353 = vmatprep.subr.mxu0 0.0
        %3354 = vmatpush1.msra.mxu0 0.0
        %3355 = vmatprep.mubr.f32.mxu0 0.0
        %3356 = vmatmul.mubr.f32.gmra.mrb[0].mxu0 %v3289
        %v3357 = vpop.f32.mrb[0].mxu0
        %v3358 = vadd.f32 0.0, %v3357
        %v3359 = vpop.f32.mrb[0].mxu0
        %v3360 = vadd.f32 0.0, %v3359
        %3361 = vdwg.mxu0
        %v3362 = vadd.f32 %v3282, %v3358
        %v3363 = vadd.f32 %v3284, %v3360
        %s3364 = scalar_lea.vmem %s6, 24
        %v3365 = vld [vmem:[%s3364] sm:$0xff]
        %v3367 = vsel %vm3137, %v3365, 0
        %3369 = vmatprep.subr.mxu0 %v3126
        %3370 = vmatpush1.msra.mxu0 %v3124
        %3371 = vmatprep.subr.mxu0 %v3132
        %3372 = vmatpush1.msra.mxu0 %v3130
        %3373 = vmatprep.subr.mxu0 0.0
        %3374 = vmatpush1.msra.mxu0 0.0
        %3375 = vmatprep.subr.mxu0 0.0
        %3376 = vmatpush1.msra.mxu0 0.0
        %3377 = vmatprep.subr.mxu0 0.0
        %3378 = vmatpush1.msra.mxu0 0.0
        %3379 = vmatprep.subr.mxu0 0.0
        %3380 = vmatpush1.msra.mxu0 0.0
        %3381 = vmatprep.subr.mxu0 0.0
        %3382 = vmatpush1.msra.mxu0 0.0
        %3383 = vmatprep.subr.mxu0 0.0
        %3384 = vmatpush1.msra.mxu0 0.0
        %3385 = vmatprep.subr.mxu0 0.0
        %3386 = vmatpush1.msra.mxu0 0.0
        %3387 = vmatprep.subr.mxu0 0.0
        %3388 = vmatpush1.msra.mxu0 0.0
        %3389 = vmatprep.subr.mxu0 0.0
        %3390 = vmatpush1.msra.mxu0 0.0
        %3391 = vmatprep.subr.mxu0 0.0
        %3392 = vmatpush1.msra.mxu0 0.0
        %3393 = vmatprep.subr.mxu0 0.0
        %3394 = vmatpush1.msra.mxu0 0.0
        %3395 = vmatprep.subr.mxu0 0.0
        %3396 = vmatpush1.msra.mxu0 0.0
        %3397 = vmatprep.subr.mxu0 0.0
        %3398 = vmatpush1.msra.mxu0 0.0
        %3399 = vmatprep.subr.mxu0 0.0
        %3400 = vmatpush1.msra.mxu0 0.0
        %3401 = vmatprep.subr.mxu0 0.0
        %3402 = vmatpush1.msra.mxu0 0.0
        %3403 = vmatprep.subr.mxu0 0.0
        %3404 = vmatpush1.msra.mxu0 0.0
        %3405 = vmatprep.subr.mxu0 0.0
        %3406 = vmatpush1.msra.mxu0 0.0
        %3407 = vmatprep.subr.mxu0 0.0
        %3408 = vmatpush1.msra.mxu0 0.0
        %3409 = vmatprep.subr.mxu0 0.0
        %3410 = vmatpush1.msra.mxu0 0.0
        %3411 = vmatprep.subr.mxu0 0.0
        %3412 = vmatpush1.msra.mxu0 0.0
        %3413 = vmatprep.subr.mxu0 0.0
        %3414 = vmatpush1.msra.mxu0 0.0
        %3415 = vmatprep.subr.mxu0 0.0
        %3416 = vmatpush1.msra.mxu0 0.0
        %3417 = vmatprep.subr.mxu0 0.0
        %3418 = vmatpush1.msra.mxu0 0.0
        %3419 = vmatprep.subr.mxu0 0.0
        %3420 = vmatpush1.msra.mxu0 0.0
        %3421 = vmatprep.subr.mxu0 0.0
        %3422 = vmatpush1.msra.mxu0 0.0
        %3423 = vmatprep.subr.mxu0 0.0
        %3424 = vmatpush1.msra.mxu0 0.0
        %3425 = vmatprep.subr.mxu0 0.0
        %3426 = vmatpush1.msra.mxu0 0.0
        %3427 = vmatprep.subr.mxu0 0.0
        %3428 = vmatpush1.msra.mxu0 0.0
        %3429 = vmatprep.subr.mxu0 0.0
        %3430 = vmatpush1.msra.mxu0 0.0
        %3431 = vmatprep.subr.mxu0 0.0
        %3432 = vmatpush1.msra.mxu0 0.0
        %3433 = vmatprep.mubr.f32.mxu0 0.0
        %3434 = vmatmul.mubr.f32.gmra.mrb[0].mxu0 %v3367
        %v3435 = vpop.f32.mrb[0].mxu0
        %v3436 = vadd.f32 0.0, %v3435
        %v3437 = vpop.f32.mrb[0].mxu0
        %v3438 = vadd.f32 0.0, %v3437
        %3439 = vdwg.mxu0
        %v3440 = vadd.f32 %v3362, %v3436
        %v3441 = vadd.f32 %v3363, %v3438
        %v3442 = vmax.f32 %v3440, 0.0
        %v3443 = vmax.f32 %v3441, 0.0
        %v3444 = vld [vmem:[#allocation8] sm:$0xff]
        %v3445 = vld [vmem:[#allocation8 + $0x8] sm:$0xff]
        %v3446 = vld [vmem:[#allocation8 + $0x10] sm:$0xff]
        %v3447 = vld [vmem:[#allocation8 + $0x18] sm:$0xff]
        %v3448 = vld [vmem:[#allocation8 + $0x20] sm:$0xff]
        %v3449 = vld [vmem:[#allocation8 + $0x28] sm:$0xff]
        %v3450 = vld [vmem:[#allocation8 + $0x30] sm:$0xff]
        %v3451 = vld [vmem:[#allocation8 + $0x38] sm:$0xff]
        %v3452 = vld [vmem:[#allocation8 + $0x40] sm:$0xff]
        %v3453 = vld [vmem:[#allocation8 + $0x48] sm:$0xff]
        %v3454 = vld [vmem:[#allocation8 + $0x50] sm:$0xff]
        %v3455 = vld [vmem:[#allocation8 + $0x58] sm:$0xff]
        %v3456 = vld [vmem:[#allocation8 + $0x60] sm:$0xff]
        %v3457 = vld [vmem:[#allocation8 + $0x68] sm:$0xff]
        %v3458 = vld [vmem:[#allocation8 + $0x70] sm:$0xff]
        %v3459 = vld [vmem:[#allocation8 + $0x78] sm:$0xff]
        %v3460 = vld [vmem:[#allocation8 + $0x80] sm:$0xff]
        %v3461 = vld [vmem:[#allocation8 + $0x88] sm:$0xff]
        %v3462 = vld [vmem:[#allocation8 + $0x90] sm:$0xff]
        %v3463 = vld [vmem:[#allocation8 + $0x98] sm:$0xff]
        %v3464 = vld [vmem:[#allocation8 + $0xa0] sm:$0xff]
        %v3465 = vld [vmem:[#allocation8 + $0xa8] sm:$0xff]
        %v3466 = vld [vmem:[#allocation8 + $0xb0] sm:$0xff]
        %v3467 = vld [vmem:[#allocation8 + $0xb8] sm:$0xff]
        %v3468 = vld [vmem:[#allocation8 + $0xc0] sm:$0xff]
        %v3469 = vld [vmem:[#allocation8 + $0xc8] sm:$0xff]
        %v3470 = vld [vmem:[#allocation8 + $0xd0] sm:$0xff]
        %v3471 = vld [vmem:[#allocation8 + $0xd8] sm:$0xff]
        %v3472 = vld [vmem:[#allocation8 + $0xe0] sm:$0xff]
        %v3473 = vld [vmem:[#allocation8 + $0xe8] sm:$0xff]
        %v3474 = vld [vmem:[#allocation8 + $0xf0] sm:$0xff]
        %v3475 = vld [vmem:[#allocation8 + $0xf8] sm:$0xff]
        %v3476 = vld [vmem:[#allocation8 + $0x100] sm:$0xff]
        %v3477 = vld [vmem:[#allocation8 + $0x108] sm:$0xff]
        %v3478 = vld [vmem:[#allocation8 + $0x110] sm:$0xff]
        %v3479 = vld [vmem:[#allocation8 + $0x118] sm:$0xff]
        %v3480 = vld [vmem:[#allocation8 + $0x120] sm:$0xff]
        %v3481 = vld [vmem:[#allocation8 + $0x128] sm:$0xff]
        %v3482 = vld [vmem:[#allocation8 + $0x130] sm:$0xff]
        %v3483 = vld [vmem:[#allocation8 + $0x138] sm:$0xff]
        %v3484 = vld [vmem:[#allocation8 + $0x140] sm:$0xff]
        %v3485 = vld [vmem:[#allocation8 + $0x148] sm:$0xff]
        %v3486 = vld [vmem:[#allocation8 + $0x150] sm:$0xff]
        %v3487 = vld [vmem:[#allocation8 + $0x158] sm:$0xff]
        %v3488 = vld [vmem:[#allocation8 + $0x160] sm:$0xff]
        %v3489 = vld [vmem:[#allocation8 + $0x168] sm:$0xff]
        %v3490 = vld [vmem:[#allocation8 + $0x170] sm:$0xff]
        %v3491 = vld [vmem:[#allocation8 + $0x178] sm:$0xff]
        %v3492 = vld [vmem:[#allocation8 + $0x180] sm:$0xff]
        %v3493 = vld [vmem:[#allocation8 + $0x188] sm:$0xff]
        %v3494 = vld [vmem:[#allocation8 + $0x190] sm:$0xff]
        %v3495 = vld [vmem:[#allocation8 + $0x198] sm:$0xff]
        %v3496 = vld [vmem:[#allocation8 + $0x1a0] sm:$0xff]
        %v3497 = vld [vmem:[#allocation8 + $0x1a8] sm:$0xff]
        %v3498 = vld [vmem:[#allocation8 + $0x1b0] sm:$0xff]
        %v3499 = vld [vmem:[#allocation8 + $0x1b8] sm:$0xff]
        %v3500 = vld [vmem:[#allocation8 + $0x1c0] sm:$0xff]
        %v3501 = vld [vmem:[#allocation8 + $0x1c8] sm:$0xff]
        %v3502 = vld [vmem:[#allocation8 + $0x1d0] sm:$0xff]
        %v3503 = vld [vmem:[#allocation8 + $0x1d8] sm:$0xff]
        %v3504 = vld [vmem:[#allocation8 + $0x1e0] sm:$0xff]
        %v3505 = vld [vmem:[#allocation8 + $0x1e8] sm:$0xff]
        %v3506 = vld [vmem:[#allocation8 + $0x1f0] sm:$0xff]
        %v3507 = vld [vmem:[#allocation8 + $0x1f8] sm:$0xff]
        %v3508 = vld [vmem:[#allocation8 + $0x200] sm:$0xff]
        %v3509 = vld [vmem:[#allocation8 + $0x208] sm:$0xff]
        %v3510 = vld [vmem:[#allocation8 + $0x210] sm:$0xff]
        %v3511 = vld [vmem:[#allocation8 + $0x218] sm:$0xff]
        %v3512 = vld [vmem:[#allocation8 + $0x220] sm:$0xff]
        %v3513 = vld [vmem:[#allocation8 + $0x228] sm:$0xff]
        %v3514 = vld [vmem:[#allocation8 + $0x230] sm:$0xff]
        %v3515 = vld [vmem:[#allocation8 + $0x238] sm:$0xff]
        %v3516 = vld [vmem:[#allocation8 + $0x240] sm:$0xff]
        %v3517 = vld [vmem:[#allocation8 + $0x248] sm:$0xff]
        %v3518 = vld [vmem:[#allocation8 + $0x250] sm:$0xff]
        %v3519 = vld [vmem:[#allocation8 + $0x258] sm:$0xff]
        %v3520 = vld [vmem:[#allocation8 + $0x260] sm:$0xff]
        %v3521 = vld [vmem:[#allocation8 + $0x268] sm:$0xff]
        %v3522 = vld [vmem:[#allocation8 + $0x270] sm:$0xff]
        %v3523 = vld [vmem:[#allocation8 + $0x278] sm:$0xff]
        %v3524 = vld [vmem:[#allocation8 + $0x280] sm:$0xff]
        %v3525 = vld [vmem:[#allocation8 + $0x288] sm:$0xff]
        %v3526 = vld [vmem:[#allocation8 + $0x290] sm:$0xff]
        %v3527 = vld [vmem:[#allocation8 + $0x298] sm:$0xff]
        %v3528 = vld [vmem:[#allocation8 + $0x2a0] sm:$0xff]
        %v3529 = vld [vmem:[#allocation8 + $0x2a8] sm:$0xff]
        %v3530 = vld [vmem:[#allocation8 + $0x2b0] sm:$0xff]
        %v3531 = vld [vmem:[#allocation8 + $0x2b8] sm:$0xff]
        %v3532 = vld [vmem:[#allocation8 + $0x2c0] sm:$0xff]
        %v3533 = vld [vmem:[#allocation8 + $0x2c8] sm:$0xff]
        %v3534 = vld [vmem:[#allocation8 + $0x2d0] sm:$0xff]
        %v3535 = vld [vmem:[#allocation8 + $0x2d8] sm:$0xff]
        %v3536 = vld [vmem:[#allocation8 + $0x2e0] sm:$0xff]
        %v3537 = vld [vmem:[#allocation8 + $0x2e8] sm:$0xff]
        %v3538 = vld [vmem:[#allocation8 + $0x2f0] sm:$0xff]
        %v3539 = vld [vmem:[#allocation8 + $0x2f8] sm:$0xff]
        %v3540 = vld [vmem:[#allocation8 + $0x300] sm:$0xff]
        %v3541 = vld [vmem:[#allocation8 + $0x308] sm:$0xff]
        %v3542 = vld [vmem:[#allocation8 + $0x310] sm:$0xff]
        %v3543 = vld [vmem:[#allocation8 + $0x318] sm:$0xff]
        %v3544 = vld [vmem:[#allocation8 + $0x320] sm:$0xff]
        %v3545 = vld [vmem:[#allocation8 + $0x328] sm:$0xff]
        %v3546 = vld [vmem:[#allocation8 + $0x330] sm:$0xff]
        %v3547 = vld [vmem:[#allocation8 + $0x338] sm:$0xff]
        %v3548 = vld [vmem:[#allocation8 + $0x340] sm:$0xff]
        %v3549 = vld [vmem:[#allocation8 + $0x348] sm:$0xff]
        %v3550 = vld [vmem:[#allocation8 + $0x350] sm:$0xff]
        %v3551 = vld [vmem:[#allocation8 + $0x358] sm:$0xff]
        %v3552 = vld [vmem:[#allocation8 + $0x360] sm:$0xff]
        %v3553 = vld [vmem:[#allocation8 + $0x368] sm:$0xff]
        %v3554 = vld [vmem:[#allocation8 + $0x370] sm:$0xff]
        %v3555 = vld [vmem:[#allocation8 + $0x378] sm:$0xff]
        %v3556 = vld [vmem:[#allocation8 + $0x380] sm:$0xff]
        %v3557 = vld [vmem:[#allocation8 + $0x388] sm:$0xff]
        %v3558 = vld [vmem:[#allocation8 + $0x390] sm:$0xff]
        %v3559 = vld [vmem:[#allocation8 + $0x398] sm:$0xff]
        %v3560 = vld [vmem:[#allocation8 + $0x3a0] sm:$0xff]
        %v3561 = vld [vmem:[#allocation8 + $0x3a8] sm:$0xff]
        %v3562 = vld [vmem:[#allocation8 + $0x3b0] sm:$0xff]
        %v3563 = vld [vmem:[#allocation8 + $0x3b8] sm:$0xff]
        %v3564 = vld [vmem:[#allocation8 + $0x3c0] sm:$0xff]
        %v3565 = vld [vmem:[#allocation8 + $0x3c8] sm:$0xff]
        %v3566 = vld [vmem:[#allocation8 + $0x3d0] sm:$0xff]
        %v3567 = vld [vmem:[#allocation8 + $0x3d8] sm:$0xff]
        %v3568 = vld [vmem:[#allocation8 + $0x3e0] sm:$0xff]
        %v3569 = vld [vmem:[#allocation8 + $0x3e8] sm:$0xff]
        %v3570 = vld [vmem:[#allocation8 + $0x3f0] sm:$0xff]
        %v3571 = vld [vmem:[#allocation8 + $0x3f8] sm:$0xff]
        %v3572 = vld [vmem:[#allocation8 + $0x400] sm:$0xff]
        %v3573 = vld [vmem:[#allocation8 + $0x408] sm:$0xff]
        %v3574 = vld [vmem:[#allocation8 + $0x410] sm:$0xff]
        %v3575 = vld [vmem:[#allocation8 + $0x418] sm:$0xff]
        %v3576 = vld [vmem:[#allocation8 + $0x420] sm:$0xff]
        %v3577 = vld [vmem:[#allocation8 + $0x428] sm:$0xff]
        %v3578 = vld [vmem:[#allocation8 + $0x430] sm:$0xff]
        %v3579 = vld [vmem:[#allocation8 + $0x438] sm:$0xff]
        %v3580 = vld [vmem:[#allocation8 + $0x440] sm:$0xff]
        %v3581 = vld [vmem:[#allocation8 + $0x448] sm:$0xff]
        %v3582 = vld [vmem:[#allocation8 + $0x450] sm:$0xff]
        %v3583 = vld [vmem:[#allocation8 + $0x458] sm:$0xff]
        %v3584 = vld [vmem:[#allocation8 + $0x460] sm:$0xff]
        %v3585 = vld [vmem:[#allocation8 + $0x468] sm:$0xff]
        %v3586 = vld [vmem:[#allocation8 + $0x470] sm:$0xff]
        %v3587 = vld [vmem:[#allocation8 + $0x478] sm:$0xff]
        %v3588 = vld [vmem:[#allocation8 + $0x480] sm:$0xff]
        %v3589 = vld [vmem:[#allocation8 + $0x488] sm:$0xff]
        %v3590 = vld [vmem:[#allocation8 + $0x490] sm:$0xff]
        %v3591 = vld [vmem:[#allocation8 + $0x498] sm:$0xff]
        %v3592 = vld [vmem:[#allocation8 + $0x4a0] sm:$0xff]
        %v3593 = vld [vmem:[#allocation8 + $0x4a8] sm:$0xff]
        %v3594 = vld [vmem:[#allocation8 + $0x4b0] sm:$0xff]
        %v3595 = vld [vmem:[#allocation8 + $0x4b8] sm:$0xff]
        %v3596 = vld [vmem:[#allocation8 + $0x4c0] sm:$0xff]
        %v3597 = vld [vmem:[#allocation8 + $0x4c8] sm:$0xff]
        %v3598 = vld [vmem:[#allocation8 + $0x4d0] sm:$0xff]
        %v3599 = vld [vmem:[#allocation8 + $0x4d8] sm:$0xff]
        %v3600 = vld [vmem:[#allocation8 + $0x4e0] sm:$0xff]
        %v3601 = vld [vmem:[#allocation8 + $0x4e8] sm:$0xff]
        %v3602 = vld [vmem:[#allocation8 + $0x4f0] sm:$0xff]
        %v3603 = vld [vmem:[#allocation8 + $0x4f8] sm:$0xff]
        %v3604 = vld [vmem:[#allocation8 + $0x500] sm:$0xff]
        %v3605 = vld [vmem:[#allocation8 + $0x508] sm:$0xff]
        %v3606 = vld [vmem:[#allocation8 + $0x510] sm:$0xff]
        %v3607 = vld [vmem:[#allocation8 + $0x518] sm:$0xff]
        %v3608 = vld [vmem:[#allocation8 + $0x520] sm:$0xff]
        %v3609 = vld [vmem:[#allocation8 + $0x528] sm:$0xff]
        %v3610 = vld [vmem:[#allocation8 + $0x530] sm:$0xff]
        %v3611 = vld [vmem:[#allocation8 + $0x538] sm:$0xff]
        %v3612 = vld [vmem:[#allocation8 + $0x540] sm:$0xff]
        %v3613 = vld [vmem:[#allocation8 + $0x548] sm:$0xff]
        %v3614 = vld [vmem:[#allocation8 + $0x550] sm:$0xff]
        %v3615 = vld [vmem:[#allocation8 + $0x558] sm:$0xff]
        %v3616 = vld [vmem:[#allocation8 + $0x560] sm:$0xff]
        %v3617 = vld [vmem:[#allocation8 + $0x568] sm:$0xff]
        %v3618 = vld [vmem:[#allocation8 + $0x570] sm:$0xff]
        %v3619 = vld [vmem:[#allocation8 + $0x578] sm:$0xff]
        %v3620 = vld [vmem:[#allocation8 + $0x580] sm:$0xff]
        %v3621 = vld [vmem:[#allocation8 + $0x588] sm:$0xff]
        %v3622 = vld [vmem:[#allocation8 + $0x590] sm:$0xff]
        %v3623 = vld [vmem:[#allocation8 + $0x598] sm:$0xff]
        %v3624 = vld [vmem:[#allocation8 + $0x5a0] sm:$0xff]
        %v3625 = vld [vmem:[#allocation8 + $0x5a8] sm:$0xff]
        %v3626 = vld [vmem:[#allocation8 + $0x5b0] sm:$0xff]
        %v3627 = vld [vmem:[#allocation8 + $0x5b8] sm:$0xff]
        %v3628 = vld [vmem:[#allocation8 + $0x5c0] sm:$0xff]
        %v3629 = vld [vmem:[#allocation8 + $0x5c8] sm:$0xff]
        %v3630 = vld [vmem:[#allocation8 + $0x5d0] sm:$0xff]
        %v3631 = vld [vmem:[#allocation8 + $0x5d8] sm:$0xff]
        %v3632 = vld [vmem:[#allocation8 + $0x5e0] sm:$0xff]
        %v3633 = vld [vmem:[#allocation8 + $0x5e8] sm:$0xff]
        %v3634 = vld [vmem:[#allocation8 + $0x5f0] sm:$0xff]
        %v3635 = vld [vmem:[#allocation8 + $0x5f8] sm:$0xff]
        %v3636 = vld [vmem:[#allocation8 + $0x600] sm:$0xff]
        %v3637 = vld [vmem:[#allocation8 + $0x608] sm:$0xff]
        %v3638 = vld [vmem:[#allocation8 + $0x610] sm:$0xff]
        %v3639 = vld [vmem:[#allocation8 + $0x618] sm:$0xff]
        %v3640 = vld [vmem:[#allocation8 + $0x620] sm:$0xff]
        %v3641 = vld [vmem:[#allocation8 + $0x628] sm:$0xff]
        %v3642 = vld [vmem:[#allocation8 + $0x630] sm:$0xff]
        %v3643 = vld [vmem:[#allocation8 + $0x638] sm:$0xff]
        %v3644 = vld [vmem:[#allocation8 + $0x640] sm:$0xff]
        %v3645 = vld [vmem:[#allocation8 + $0x648] sm:$0xff]
        %v3646 = vld [vmem:[#allocation8 + $0x650] sm:$0xff]
        %v3647 = vld [vmem:[#allocation8 + $0x658] sm:$0xff]
        %v3648 = vld [vmem:[#allocation8 + $0x660] sm:$0xff]
        %v3649 = vld [vmem:[#allocation8 + $0x668] sm:$0xff]
        %v3650 = vld [vmem:[#allocation8 + $0x670] sm:$0xff]
        %v3651 = vld [vmem:[#allocation8 + $0x678] sm:$0xff]
        %v3652 = vld [vmem:[#allocation8 + $0x680] sm:$0xff]
        %v3653 = vld [vmem:[#allocation8 + $0x688] sm:$0xff]
        %v3654 = vld [vmem:[#allocation8 + $0x690] sm:$0xff]
        %v3655 = vld [vmem:[#allocation8 + $0x698] sm:$0xff]
        %v3656 = vld [vmem:[#allocation8 + $0x6a0] sm:$0xff]
        %v3657 = vld [vmem:[#allocation8 + $0x6a8] sm:$0xff]
        %v3658 = vld [vmem:[#allocation8 + $0x6b0] sm:$0xff]
        %v3659 = vld [vmem:[#allocation8 + $0x6b8] sm:$0xff]
        %v3660 = vld [vmem:[#allocation8 + $0x6c0] sm:$0xff]
        %v3661 = vld [vmem:[#allocation8 + $0x6c8] sm:$0xff]
        %v3662 = vld [vmem:[#allocation8 + $0x6d0] sm:$0xff]
        %v3663 = vld [vmem:[#allocation8 + $0x6d8] sm:$0xff]
        %v3664 = vld [vmem:[#allocation8 + $0x6e0] sm:$0xff]
        %v3665 = vld [vmem:[#allocation8 + $0x6e8] sm:$0xff]
        %v3666 = vld [vmem:[#allocation8 + $0x6f0] sm:$0xff]
        %v3667 = vld [vmem:[#allocation8 + $0x6f8] sm:$0xff]
        %v3668 = vld [vmem:[#allocation8 + $0x700] sm:$0xff]
        %v3669 = vld [vmem:[#allocation8 + $0x708] sm:$0xff]
        %v3670 = vld [vmem:[#allocation8 + $0x710] sm:$0xff]
        %v3671 = vld [vmem:[#allocation8 + $0x718] sm:$0xff]
        %v3672 = vld [vmem:[#allocation8 + $0x720] sm:$0xff]
        %v3673 = vld [vmem:[#allocation8 + $0x728] sm:$0xff]
        %v3674 = vld [vmem:[#allocation8 + $0x730] sm:$0xff]
        %v3675 = vld [vmem:[#allocation8 + $0x738] sm:$0xff]
        %v3676 = vld [vmem:[#allocation8 + $0x740] sm:$0xff]
        %v3677 = vld [vmem:[#allocation8 + $0x748] sm:$0xff]
        %v3678 = vld [vmem:[#allocation8 + $0x750] sm:$0xff]
        %v3679 = vld [vmem:[#allocation8 + $0x758] sm:$0xff]
        %v3680 = vld [vmem:[#allocation8 + $0x760] sm:$0xff]
        %v3681 = vld [vmem:[#allocation8 + $0x768] sm:$0xff]
        %v3682 = vld [vmem:[#allocation8 + $0x770] sm:$0xff]
        %v3683 = vld [vmem:[#allocation8 + $0x778] sm:$0xff]
        %v3684 = vld [vmem:[#allocation8 + $0x780] sm:$0xff]
        %v3685 = vld [vmem:[#allocation8 + $0x788] sm:$0xff]
        %v3686 = vld [vmem:[#allocation8 + $0x790] sm:$0xff]
        %v3687 = vld [vmem:[#allocation8 + $0x798] sm:$0xff]
        %v3688 = vld [vmem:[#allocation8 + $0x7a0] sm:$0xff]
        %v3689 = vld [vmem:[#allocation8 + $0x7a8] sm:$0xff]
        %v3690 = vld [vmem:[#allocation8 + $0x7b0] sm:$0xff]
        %v3691 = vld [vmem:[#allocation8 + $0x7b8] sm:$0xff]
        %v3692 = vld [vmem:[#allocation8 + $0x7c0] sm:$0xff]
        %v3693 = vld [vmem:[#allocation8 + $0x7c8] sm:$0xff]
        %v3694 = vld [vmem:[#allocation8 + $0x7d0] sm:$0xff]
        %v3695 = vld [vmem:[#allocation8 + $0x7d8] sm:$0xff]
        %v3696 = vld [vmem:[#allocation8 + $0x7e0] sm:$0xff]
        %v3697 = vld [vmem:[#allocation8 + $0x7e8] sm:$0xff]
        %v3698 = vld [vmem:[#allocation8 + $0x7f0] sm:$0xff]
        %v3699 = vld [vmem:[#allocation8 + $0x7f8] sm:$0xff]
        %3700 = vmatprep.subr.mxu0 %v3445
        %3701 = vmatpush1.msra.mxu0 %v3444
        %3702 = vmatprep.subr.mxu0 %v3453
        %3703 = vmatpush1.msra.mxu0 %v3452
        %3704 = vmatprep.subr.mxu0 %v3461
        %3705 = vmatpush1.msra.mxu0 %v3460
        %3706 = vmatprep.subr.mxu0 %v3469
        %3707 = vmatpush1.msra.mxu0 %v3468
        %3708 = vmatprep.subr.mxu0 %v3477
        %3709 = vmatpush1.msra.mxu0 %v3476
        %3710 = vmatprep.subr.mxu0 %v3485
        %3711 = vmatpush1.msra.mxu0 %v3484
        %3712 = vmatprep.subr.mxu0 %v3493
        %3713 = vmatpush1.msra.mxu0 %v3492
        %3714 = vmatprep.subr.mxu0 %v3501
        %3715 = vmatpush1.msra.mxu0 %v3500
        %3716 = vmatprep.subr.mxu0 %v3509
        %3717 = vmatpush1.msra.mxu0 %v3508
        %3718 = vmatprep.subr.mxu0 %v3517
        %3719 = vmatpush1.msra.mxu0 %v3516
        %3720 = vmatprep.subr.mxu0 %v3525
        %3721 = vmatpush1.msra.mxu0 %v3524
        %3722 = vmatprep.subr.mxu0 %v3533
        %3723 = vmatpush1.msra.mxu0 %v3532
        %3724 = vmatprep.subr.mxu0 %v3541
        %3725 = vmatpush1.msra.mxu0 %v3540
        %3726 = vmatprep.subr.mxu0 %v3549
        %3727 = vmatpush1.msra.mxu0 %v3548
        %3728 = vmatprep.subr.mxu0 %v3557
        %3729 = vmatpush1.msra.mxu0 %v3556
        %3730 = vmatprep.subr.mxu0 %v3565
        %3731 = vmatpush1.msra.mxu0 %v3564
        %3732 = vmatprep.subr.mxu0 %v3573
        %3733 = vmatpush1.msra.mxu0 %v3572
        %3734 = vmatprep.subr.mxu0 %v3581
        %3735 = vmatpush1.msra.mxu0 %v3580
        %3736 = vmatprep.subr.mxu0 %v3589
        %3737 = vmatpush1.msra.mxu0 %v3588
        %3738 = vmatprep.subr.mxu0 %v3597
        %3739 = vmatpush1.msra.mxu0 %v3596
        %3740 = vmatprep.subr.mxu0 %v3605
        %3741 = vmatpush1.msra.mxu0 %v3604
        %3742 = vmatprep.subr.mxu0 %v3613
        %3743 = vmatpush1.msra.mxu0 %v3612
        %3744 = vmatprep.subr.mxu0 %v3621
        %3745 = vmatpush1.msra.mxu0 %v3620
        %3746 = vmatprep.subr.mxu0 %v3629
        %3747 = vmatpush1.msra.mxu0 %v3628
        %3748 = vmatprep.subr.mxu0 %v3637
        %3749 = vmatpush1.msra.mxu0 %v3636
        %3750 = vmatprep.subr.mxu0 %v3645
        %3751 = vmatpush1.msra.mxu0 %v3644
        %3752 = vmatprep.subr.mxu0 %v3653
        %3753 = vmatpush1.msra.mxu0 %v3652
        %3754 = vmatprep.subr.mxu0 %v3661
        %3755 = vmatpush1.msra.mxu0 %v3660
        %3756 = vmatprep.subr.mxu0 %v3669
        %3757 = vmatpush1.msra.mxu0 %v3668
        %3758 = vmatprep.subr.mxu0 %v3677
        %3759 = vmatpush1.msra.mxu0 %v3676
        %3760 = vmatprep.subr.mxu0 %v3685
        %3761 = vmatpush1.msra.mxu0 %v3684
        %3762 = vmatprep.subr.mxu0 %v3693
        %3763 = vmatpush1.msra.mxu0 %v3692
        %3764 = vmatprep.mubr.f32.mxu0 %v3443
        %3765 = vmatmul.mubr.f32.gmra.mrb[0].mxu0 %v3442
        %v3766 = vpop.f32.mrb[0].mxu0
        %v3767 = vadd.f32 0.0, %v3766
        %v3768 = vpop.f32.mrb[0].mxu0
        %v3769 = vadd.f32 0.0, %v3768
        %3770 = vdwg.mxu0
        %3771 = vmatprep.subr.mxu0 %v3447
        %3772 = vmatpush1.msra.mxu0 %v3446
        %3773 = vmatprep.subr.mxu0 %v3455
        %3774 = vmatpush1.msra.mxu0 %v3454
        %3775 = vmatprep.subr.mxu0 %v3463
        %3776 = vmatpush1.msra.mxu0 %v3462
        %3777 = vmatprep.subr.mxu0 %v3471
        %3778 = vmatpush1.msra.mxu0 %v3470
        %3779 = vmatprep.subr.mxu0 %v3479
        %3780 = vmatpush1.msra.mxu0 %v3478
        %3781 = vmatprep.subr.mxu0 %v3487
        %3782 = vmatpush1.msra.mxu0 %v3486
        %3783 = vmatprep.subr.mxu0 %v3495
        %3784 = vmatpush1.msra.mxu0 %v3494
        %3785 = vmatprep.subr.mxu0 %v3503
        %3786 = vmatpush1.msra.mxu0 %v3502
        %3787 = vmatprep.subr.mxu0 %v3511
        %3788 = vmatpush1.msra.mxu0 %v3510
        %3789 = vmatprep.subr.mxu0 %v3519
        %3790 = vmatpush1.msra.mxu0 %v3518
        %3791 = vmatprep.subr.mxu0 %v3527
        %3792 = vmatpush1.msra.mxu0 %v3526
        %3793 = vmatprep.subr.mxu0 %v3535
        %3794 = vmatpush1.msra.mxu0 %v3534
        %3795 = vmatprep.subr.mxu0 %v3543
        %3796 = vmatpush1.msra.mxu0 %v3542
        %3797 = vmatprep.subr.mxu0 %v3551
        %3798 = vmatpush1.msra.mxu0 %v3550
        %3799 = vmatprep.subr.mxu0 %v3559
        %3800 = vmatpush1.msra.mxu0 %v3558
        %3801 = vmatprep.subr.mxu0 %v3567
        %3802 = vmatpush1.msra.mxu0 %v3566
        %3803 = vmatprep.subr.mxu0 %v3575
        %3804 = vmatpush1.msra.mxu0 %v3574
        %3805 = vmatprep.subr.mxu0 %v3583
        %3806 = vmatpush1.msra.mxu0 %v3582
        %3807 = vmatprep.subr.mxu0 %v3591
        %3808 = vmatpush1.msra.mxu0 %v3590
        %3809 = vmatprep.subr.mxu0 %v3599
        %3810 = vmatpush1.msra.mxu0 %v3598
        %3811 = vmatprep.subr.mxu0 %v3607
        %3812 = vmatpush1.msra.mxu0 %v3606
        %3813 = vmatprep.subr.mxu0 %v3615
        %3814 = vmatpush1.msra.mxu0 %v3614
        %3815 = vmatprep.subr.mxu0 %v3623
        %3816 = vmatpush1.msra.mxu0 %v3622
        %3817 = vmatprep.subr.mxu0 %v3631
        %3818 = vmatpush1.msra.mxu0 %v3630
        %3819 = vmatprep.subr.mxu0 %v3639
        %3820 = vmatpush1.msra.mxu0 %v3638
        %3821 = vmatprep.subr.mxu0 %v3647
        %3822 = vmatpush1.msra.mxu0 %v3646
        %3823 = vmatprep.subr.mxu0 %v3655
        %3824 = vmatpush1.msra.mxu0 %v3654
        %3825 = vmatprep.subr.mxu0 %v3663
        %3826 = vmatpush1.msra.mxu0 %v3662
        %3827 = vmatprep.subr.mxu0 %v3671
        %3828 = vmatpush1.msra.mxu0 %v3670
        %3829 = vmatprep.subr.mxu0 %v3679
        %3830 = vmatpush1.msra.mxu0 %v3678
        %3831 = vmatprep.subr.mxu0 %v3687
        %3832 = vmatpush1.msra.mxu0 %v3686
        %3833 = vmatprep.subr.mxu0 %v3695
        %3834 = vmatpush1.msra.mxu0 %v3694
        %3835 = vmatprep.mubr.f32.mxu0 %v3443
        %3836 = vmatmul.mubr.f32.gmra.mrb[0].mxu0 %v3442
        %v3837 = vpop.f32.mrb[0].mxu0
        %v3838 = vadd.f32 0.0, %v3837
        %v3839 = vpop.f32.mrb[0].mxu0
        %v3840 = vadd.f32 0.0, %v3839
        %3841 = vdwg.mxu0
        %3842 = vmatprep.subr.mxu0 %v3449
        %3843 = vmatpush1.msra.mxu0 %v3448
        %3844 = vmatprep.subr.mxu0 %v3457
        %3845 = vmatpush1.msra.mxu0 %v3456
        %3846 = vmatprep.subr.mxu0 %v3465
        %3847 = vmatpush1.msra.mxu0 %v3464
        %3848 = vmatprep.subr.mxu0 %v3473
        %3849 = vmatpush1.msra.mxu0 %v3472
        %3850 = vmatprep.subr.mxu0 %v3481
        %3851 = vmatpush1.msra.mxu0 %v3480
        %3852 = vmatprep.subr.mxu0 %v3489
        %3853 = vmatpush1.msra.mxu0 %v3488
        %3854 = vmatprep.subr.mxu0 %v3497
        %3855 = vmatpush1.msra.mxu0 %v3496
        %3856 = vmatprep.subr.mxu0 %v3505
        %3857 = vmatpush1.msra.mxu0 %v3504
        %3858 = vmatprep.subr.mxu0 %v3513
        %3859 = vmatpush1.msra.mxu0 %v3512
        %3860 = vmatprep.subr.mxu0 %v3521
        %3861 = vmatpush1.msra.mxu0 %v3520
        %3862 = vmatprep.subr.mxu0 %v3529
        %3863 = vmatpush1.msra.mxu0 %v3528
        %3864 = vmatprep.subr.mxu0 %v3537
        %3865 = vmatpush1.msra.mxu0 %v3536
        %3866 = vmatprep.subr.mxu0 %v3545
        %3867 = vmatpush1.msra.mxu0 %v3544
        %3868 = vmatprep.subr.mxu0 %v3553
        %3869 = vmatpush1.msra.mxu0 %v3552
        %3870 = vmatprep.subr.mxu0 %v3561
        %3871 = vmatpush1.msra.mxu0 %v3560
        %3872 = vmatprep.subr.mxu0 %v3569
        %3873 = vmatpush1.msra.mxu0 %v3568
        %3874 = vmatprep.subr.mxu0 %v3577
        %3875 = vmatpush1.msra.mxu0 %v3576
        %3876 = vmatprep.subr.mxu0 %v3585
        %3877 = vmatpush1.msra.mxu0 %v3584
        %3878 = vmatprep.subr.mxu0 %v3593
        %3879 = vmatpush1.msra.mxu0 %v3592
        %3880 = vmatprep.subr.mxu0 %v3601
        %3881 = vmatpush1.msra.mxu0 %v3600
        %3882 = vmatprep.subr.mxu0 %v3609
        %3883 = vmatpush1.msra.mxu0 %v3608
        %3884 = vmatprep.subr.mxu0 %v3617
        %3885 = vmatpush1.msra.mxu0 %v3616
        %3886 = vmatprep.subr.mxu0 %v3625
        %3887 = vmatpush1.msra.mxu0 %v3624
        %3888 = vmatprep.subr.mxu0 %v3633
        %3889 = vmatpush1.msra.mxu0 %v3632
        %3890 = vmatprep.subr.mxu0 %v3641
        %3891 = vmatpush1.msra.mxu0 %v3640
        %3892 = vmatprep.subr.mxu0 %v3649
        %3893 = vmatpush1.msra.mxu0 %v3648
        %3894 = vmatprep.subr.mxu0 %v3657
        %3895 = vmatpush1.msra.mxu0 %v3656
        %3896 = vmatprep.subr.mxu0 %v3665
        %3897 = vmatpush1.msra.mxu0 %v3664
        %3898 = vmatprep.subr.mxu0 %v3673
        %3899 = vmatpush1.msra.mxu0 %v3672
        %3900 = vmatprep.subr.mxu0 %v3681
        %3901 = vmatpush1.msra.mxu0 %v3680
        %3902 = vmatprep.subr.mxu0 %v3689
        %3903 = vmatpush1.msra.mxu0 %v3688
        %3904 = vmatprep.subr.mxu0 %v3697
        %3905 = vmatpush1.msra.mxu0 %v3696
        %3906 = vmatprep.mubr.f32.mxu0 %v3443
        %3907 = vmatmul.mubr.f32.gmra.mrb[0].mxu0 %v3442
        %v3908 = vpop.f32.mrb[0].mxu0
        %v3909 = vadd.f32 0.0, %v3908
        %v3910 = vpop.f32.mrb[0].mxu0
        %v3911 = vadd.f32 0.0, %v3910
        %3912 = vdwg.mxu0
        %3913 = vmatprep.subr.mxu0 %v3451
        %3914 = vmatpush1.msra.mxu0 %v3450
        %3915 = vmatprep.subr.mxu0 %v3459
        %3916 = vmatpush1.msra.mxu0 %v3458
        %3917 = vmatprep.subr.mxu0 %v3467
        %3918 = vmatpush1.msra.mxu0 %v3466
        %3919 = vmatprep.subr.mxu0 %v3475
        %3920 = vmatpush1.msra.mxu0 %v3474
        %3921 = vmatprep.subr.mxu0 %v3483
        %3922 = vmatpush1.msra.mxu0 %v3482
        %3923 = vmatprep.subr.mxu0 %v3491
        %3924 = vmatpush1.msra.mxu0 %v3490
        %3925 = vmatprep.subr.mxu0 %v3499
        %3926 = vmatpush1.msra.mxu0 %v3498
        %3927 = vmatprep.subr.mxu0 %v3507
        %3928 = vmatpush1.msra.mxu0 %v3506
        %3929 = vmatprep.subr.mxu0 %v3515
        %3930 = vmatpush1.msra.mxu0 %v3514
        %3931 = vmatprep.subr.mxu0 %v3523
        %3932 = vmatpush1.msra.mxu0 %v3522
        %3933 = vmatprep.subr.mxu0 %v3531
        %3934 = vmatpush1.msra.mxu0 %v3530
        %3935 = vmatprep.subr.mxu0 %v3539
        %3936 = vmatpush1.msra.mxu0 %v3538
        %3937 = vmatprep.subr.mxu0 %v3547
        %3938 = vmatpush1.msra.mxu0 %v3546
        %3939 = vmatprep.subr.mxu0 %v3555
        %3940 = vmatpush1.msra.mxu0 %v3554
        %3941 = vmatprep.subr.mxu0 %v3563
        %3942 = vmatpush1.msra.mxu0 %v3562
        %3943 = vmatprep.subr.mxu0 %v3571
        %3944 = vmatpush1.msra.mxu0 %v3570
        %3945 = vmatprep.subr.mxu0 %v3579
        %3946 = vmatpush1.msra.mxu0 %v3578
        %3947 = vmatprep.subr.mxu0 %v3587
        %3948 = vmatpush1.msra.mxu0 %v3586
        %3949 = vmatprep.subr.mxu0 %v3595
        %3950 = vmatpush1.msra.mxu0 %v3594
        %3951 = vmatprep.subr.mxu0 %v3603
        %3952 = vmatpush1.msra.mxu0 %v3602
        %3953 = vmatprep.subr.mxu0 %v3611
        %3954 = vmatpush1.msra.mxu0 %v3610
        %3955 = vmatprep.subr.mxu0 %v3619
        %3956 = vmatpush1.msra.mxu0 %v3618
        %3957 = vmatprep.subr.mxu0 %v3627
        %3958 = vmatpush1.msra.mxu0 %v3626
        %3959 = vmatprep.subr.mxu0 %v3635
        %3960 = vmatpush1.msra.mxu0 %v3634
        %3961 = vmatprep.subr.mxu0 %v3643
        %3962 = vmatpush1.msra.mxu0 %v3642
        %3963 = vmatprep.subr.mxu0 %v3651
        %3964 = vmatpush1.msra.mxu0 %v3650
        %3965 = vmatprep.subr.mxu0 %v3659
        %3966 = vmatpush1.msra.mxu0 %v3658
        %3967 = vmatprep.subr.mxu0 %v3667
        %3968 = vmatpush1.msra.mxu0 %v3666
        %3969 = vmatprep.subr.mxu0 %v3675
        %3970 = vmatpush1.msra.mxu0 %v3674
        %3971 = vmatprep.subr.mxu0 %v3683
        %3972 = vmatpush1.msra.mxu0 %v3682
        %3973 = vmatprep.subr.mxu0 %v3691
        %3974 = vmatpush1.msra.mxu0 %v3690
        %3975 = vmatprep.subr.mxu0 %v3699
        %3976 = vmatpush1.msra.mxu0 %v3698
        %3977 = vmatprep.mubr.f32.mxu0 %v3443
        %3978 = vmatmul.mubr.f32.gmra.mrb[0].mxu0 %v3442
        %v3979 = vpop.f32.mrb[0].mxu0
        %v3980 = vadd.f32 0.0, %v3979
        %v3981 = vpop.f32.mrb[0].mxu0
        %v3982 = vadd.f32 0.0, %v3981
        %3983 = vdwg.mxu0
        %v3984 = vld [vmem:[%s8] sm:$0xf]
        %s3985 = scalar_lea.vmem %s8, 4
        %v3986 = vld [vmem:[%s3985] sm:$0xf]
        %vm3987 = vcmask 64512
        %v3989 = vsel %vm3987, %v3986, 0
        %3991 = vmatprep.subr.mxu0 %v3840
        %3992 = vmatpush1.msra.mxu0 %v3838
        %3993 = vmatprep.subr.mxu0 0.0
        %3994 = vmatpush1.msra.mxu0 0.0
        %3995 = vmatprep.subr.mxu0 0.0
        %3996 = vmatpush1.msra.mxu0 0.0
        %3997 = vmatprep.subr.mxu0 0.0
        %3998 = vmatpush1.msra.mxu0 0.0
        %3999 = vmatprep.subr.mxu0 0.0
        %4000 = vmatpush1.msra.mxu0 0.0
        %4001 = vmatprep.subr.mxu0 0.0
        %4002 = vmatpush1.msra.mxu0 0.0
        %4003 = vmatprep.subr.mxu0 0.0
        %4004 = vmatpush1.msra.mxu0 0.0
        %4005 = vmatprep.subr.mxu0 0.0
        %4006 = vmatpush1.msra.mxu0 0.0
        %4007 = vmatprep.subr.mxu0 0.0
        %4008 = vmatpush1.msra.mxu0 0.0
        %4009 = vmatprep.subr.mxu0 0.0
        %4010 = vmatpush1.msra.mxu0 0.0
        %4011 = vmatprep.subr.mxu0 0.0
        %4012 = vmatpush1.msra.mxu0 0.0
        %4013 = vmatprep.subr.mxu0 0.0
        %4014 = vmatpush1.msra.mxu0 0.0
        %4015 = vmatprep.subr.mxu0 0.0
        %4016 = vmatpush1.msra.mxu0 0.0
        %4017 = vmatprep.subr.mxu0 0.0
        %4018 = vmatpush1.msra.mxu0 0.0
        %4019 = vmatprep.subr.mxu0 0.0
        %4020 = vmatpush1.msra.mxu0 0.0
        %4021 = vmatprep.subr.mxu0 0.0
        %4022 = vmatpush1.msra.mxu0 0.0
        %4023 = vmatprep.subr.mxu0 0.0
        %4024 = vmatpush1.msra.mxu0 0.0
        %4025 = vmatprep.subr.mxu0 0.0
        %4026 = vmatpush1.msra.mxu0 0.0
        %4027 = vmatprep.subr.mxu0 0.0
        %4028 = vmatpush1.msra.mxu0 0.0
        %4029 = vmatprep.subr.mxu0 0.0
        %4030 = vmatpush1.msra.mxu0 0.0
        %4031 = vmatprep.subr.mxu0 0.0
        %4032 = vmatpush1.msra.mxu0 0.0
        %4033 = vmatprep.subr.mxu0 0.0
        %4034 = vmatpush1.msra.mxu0 0.0
        %4035 = vmatprep.subr.mxu0 0.0
        %4036 = vmatpush1.msra.mxu0 0.0
        %4037 = vmatprep.subr.mxu0 0.0
        %4038 = vmatpush1.msra.mxu0 0.0
        %4039 = vmatprep.subr.mxu0 0.0
        %4040 = vmatpush1.msra.mxu0 0.0
        %4041 = vmatprep.subr.mxu0 0.0
        %4042 = vmatpush1.msra.mxu0 0.0
        %4043 = vmatprep.subr.mxu0 0.0
        %4044 = vmatpush1.msra.mxu0 0.0
        %4045 = vmatprep.subr.mxu0 0.0
        %4046 = vmatpush1.msra.mxu0 0.0
        %4047 = vmatprep.subr.mxu0 0.0
        %4048 = vmatpush1.msra.mxu0 0.0
        %4049 = vmatprep.subr.mxu0 0.0
        %4050 = vmatpush1.msra.mxu0 0.0
        %4051 = vmatprep.subr.mxu0 0.0
        %4052 = vmatpush1.msra.mxu0 0.0
        %4053 = vmatprep.subr.mxu0 0.0
        %4054 = vmatpush1.msra.mxu0 0.0
        %4055 = vmatprep.mubr.f32.mxu0 0.0
        %4056 = vmatmul.mubr.f32.gmra.mrb[0].mxu0 %v3989
        %v4057 = vpop.f32.mrb[0].mxu0
        %v4058 = vadd.f32 0.0, %v4057
        %v4059 = vpop.f32.mrb[0].mxu0
        %v4060 = vadd.f32 0.0, %v4059
        %4061 = vdwg.mxu0
        %v4063 = vsel %vm3987, %v3984, 0
        %4065 = vmatprep.subr.mxu0 %v3769
        %4066 = vmatpush1.msra.mxu0 %v3767
        %4067 = vmatprep.subr.mxu0 0.0
        %4068 = vmatpush1.msra.mxu0 0.0
        %4069 = vmatprep.subr.mxu0 0.0
        %4070 = vmatpush1.msra.mxu0 0.0
        %4071 = vmatprep.subr.mxu0 0.0
        %4072 = vmatpush1.msra.mxu0 0.0
        %4073 = vmatprep.subr.mxu0 0.0
        %4074 = vmatpush1.msra.mxu0 0.0
        %4075 = vmatprep.subr.mxu0 0.0
        %4076 = vmatpush1.msra.mxu0 0.0
        %4077 = vmatprep.subr.mxu0 0.0
        %4078 = vmatpush1.msra.mxu0 0.0
        %4079 = vmatprep.subr.mxu0 0.0
        %4080 = vmatpush1.msra.mxu0 0.0
        %4081 = vmatprep.subr.mxu0 0.0
        %4082 = vmatpush1.msra.mxu0 0.0
        %4083 = vmatprep.subr.mxu0 0.0
        %4084 = vmatpush1.msra.mxu0 0.0
        %4085 = vmatprep.subr.mxu0 0.0
        %4086 = vmatpush1.msra.mxu0 0.0
        %4087 = vmatprep.subr.mxu0 0.0
        %4088 = vmatpush1.msra.mxu0 0.0
        %4089 = vmatprep.subr.mxu0 0.0
        %4090 = vmatpush1.msra.mxu0 0.0
        %4091 = vmatprep.subr.mxu0 0.0
        %4092 = vmatpush1.msra.mxu0 0.0
        %4093 = vmatprep.subr.mxu0 0.0
        %4094 = vmatpush1.msra.mxu0 0.0
        %4095 = vmatprep.subr.mxu0 0.0
        %4096 = vmatpush1.msra.mxu0 0.0
        %4097 = vmatprep.subr.mxu0 0.0
        %4098 = vmatpush1.msra.mxu0 0.0
        %4099 = vmatprep.subr.mxu0 0.0
        %4100 = vmatpush1.msra.mxu0 0.0
        %4101 = vmatprep.subr.mxu0 0.0
        %4102 = vmatpush1.msra.mxu0 0.0
        %4103 = vmatprep.subr.mxu0 0.0
        %4104 = vmatpush1.msra.mxu0 0.0
        %4105 = vmatprep.subr.mxu0 0.0
        %4106 = vmatpush1.msra.mxu0 0.0
        %4107 = vmatprep.subr.mxu0 0.0
        %4108 = vmatpush1.msra.mxu0 0.0
        %4109 = vmatprep.subr.mxu0 0.0
        %4110 = vmatpush1.msra.mxu0 0.0
        %4111 = vmatprep.subr.mxu0 0.0
        %4112 = vmatpush1.msra.mxu0 0.0
        %4113 = vmatprep.subr.mxu0 0.0
        %4114 = vmatpush1.msra.mxu0 0.0
        %4115 = vmatprep.subr.mxu0 0.0
        %4116 = vmatpush1.msra.mxu0 0.0
        %4117 = vmatprep.subr.mxu0 0.0
        %4118 = vmatpush1.msra.mxu0 0.0
        %4119 = vmatprep.subr.mxu0 0.0
        %4120 = vmatpush1.msra.mxu0 0.0
        %4121 = vmatprep.subr.mxu0 0.0
        %4122 = vmatpush1.msra.mxu0 0.0
        %4123 = vmatprep.subr.mxu0 0.0
        %4124 = vmatpush1.msra.mxu0 0.0
        %4125 = vmatprep.subr.mxu0 0.0
        %4126 = vmatpush1.msra.mxu0 0.0
        %4127 = vmatprep.subr.mxu0 0.0
        %4128 = vmatpush1.msra.mxu0 0.0
        %4129 = vmatprep.mubr.f32.mxu0 0.0
        %4130 = vmatmul.mubr.f32.gmra.mrb[0].mxu0 %v4063
        %v4131 = vpop.f32.mrb[0].mxu0
        %v4132 = vadd.f32 %v4058, %v4131
        %v4133 = vpop.f32.mrb[0].mxu0
        %v4134 = vadd.f32 %v4060, %v4133
        %4135 = vdwg.mxu0
        %s4136 = scalar_lea.vmem %s8, 8
        %v4137 = vld [vmem:[%s4136] sm:$0xf]
        %v4139 = vsel %vm3987, %v4137, 0
        %4141 = vmatprep.subr.mxu0 %v3911
        %4142 = vmatpush1.msra.mxu0 %v3909
        %4143 = vmatprep.subr.mxu0 0.0
        %4144 = vmatpush1.msra.mxu0 0.0
        %4145 = vmatprep.subr.mxu0 0.0
        %4146 = vmatpush1.msra.mxu0 0.0
        %4147 = vmatprep.subr.mxu0 0.0
        %4148 = vmatpush1.msra.mxu0 0.0
        %4149 = vmatprep.subr.mxu0 0.0
        %4150 = vmatpush1.msra.mxu0 0.0
        %4151 = vmatprep.subr.mxu0 0.0
        %4152 = vmatpush1.msra.mxu0 0.0
        %4153 = vmatprep.subr.mxu0 0.0
        %4154 = vmatpush1.msra.mxu0 0.0
        %4155 = vmatprep.subr.mxu0 0.0
        %4156 = vmatpush1.msra.mxu0 0.0
        %4157 = vmatprep.subr.mxu0 0.0
        %4158 = vmatpush1.msra.mxu0 0.0
        %4159 = vmatprep.subr.mxu0 0.0
        %4160 = vmatpush1.msra.mxu0 0.0
        %4161 = vmatprep.subr.mxu0 0.0
        %4162 = vmatpush1.msra.mxu0 0.0
        %4163 = vmatprep.subr.mxu0 0.0
        %4164 = vmatpush1.msra.mxu0 0.0
        %4165 = vmatprep.subr.mxu0 0.0
        %4166 = vmatpush1.msra.mxu0 0.0
        %4167 = vmatprep.subr.mxu0 0.0
        %4168 = vmatpush1.msra.mxu0 0.0
        %4169 = vmatprep.subr.mxu0 0.0
        %4170 = vmatpush1.msra.mxu0 0.0
        %4171 = vmatprep.subr.mxu0 0.0
        %4172 = vmatpush1.msra.mxu0 0.0
        %4173 = vmatprep.subr.mxu0 0.0
        %4174 = vmatpush1.msra.mxu0 0.0
        %4175 = vmatprep.subr.mxu0 0.0
        %4176 = vmatpush1.msra.mxu0 0.0
        %4177 = vmatprep.subr.mxu0 0.0
        %4178 = vmatpush1.msra.mxu0 0.0
        %4179 = vmatprep.subr.mxu0 0.0
        %4180 = vmatpush1.msra.mxu0 0.0
        %4181 = vmatprep.subr.mxu0 0.0
        %4182 = vmatpush1.msra.mxu0 0.0
        %4183 = vmatprep.subr.mxu0 0.0
        %4184 = vmatpush1.msra.mxu0 0.0
        %4185 = vmatprep.subr.mxu0 0.0
        %4186 = vmatpush1.msra.mxu0 0.0
        %4187 = vmatprep.subr.mxu0 0.0
        %4188 = vmatpush1.msra.mxu0 0.0
        %4189 = vmatprep.subr.mxu0 0.0
        %4190 = vmatpush1.msra.mxu0 0.0
        %4191 = vmatprep.subr.mxu0 0.0
        %4192 = vmatpush1.msra.mxu0 0.0
        %4193 = vmatprep.subr.mxu0 0.0
        %4194 = vmatpush1.msra.mxu0 0.0
        %4195 = vmatprep.subr.mxu0 0.0
        %4196 = vmatpush1.msra.mxu0 0.0
        %4197 = vmatprep.subr.mxu0 0.0
        %4198 = vmatpush1.msra.mxu0 0.0
        %4199 = vmatprep.subr.mxu0 0.0
        %4200 = vmatpush1.msra.mxu0 0.0
        %4201 = vmatprep.subr.mxu0 0.0
        %4202 = vmatpush1.msra.mxu0 0.0
        %4203 = vmatprep.subr.mxu0 0.0
        %4204 = vmatpush1.msra.mxu0 0.0
        %4205 = vmatprep.mubr.f32.mxu0 0.0
        %4206 = vmatmul.mubr.f32.gmra.mrb[0].mxu0 %v4139
        %v4207 = vpop.f32.mrb[0].mxu0
        %v4208 = vadd.f32 0.0, %v4207
        %v4209 = vpop.f32.mrb[0].mxu0
        %v4210 = vadd.f32 0.0, %v4209
        %4211 = vdwg.mxu0
        %v4212 = vadd.f32 %v4132, %v4208
        %v4213 = vadd.f32 %v4134, %v4210
        %s4214 = scalar_lea.vmem %s8, 12
        %v4215 = vld [vmem:[%s4214] sm:$0xf]
        %v4217 = vsel %vm3987, %v4215, 0
        %4219 = vmatprep.subr.mxu0 %v3982
        %4220 = vmatpush1.msra.mxu0 %v3980
        %4221 = vmatprep.subr.mxu0 0.0
        %4222 = vmatpush1.msra.mxu0 0.0
        %4223 = vmatprep.subr.mxu0 0.0
        %4224 = vmatpush1.msra.mxu0 0.0
        %4225 = vmatprep.subr.mxu0 0.0
        %4226 = vmatpush1.msra.mxu0 0.0
        %4227 = vmatprep.subr.mxu0 0.0
        %4228 = vmatpush1.msra.mxu0 0.0
        %4229 = vmatprep.subr.mxu0 0.0
        %4230 = vmatpush1.msra.mxu0 0.0
        %4231 = vmatprep.subr.mxu0 0.0
        %4232 = vmatpush1.msra.mxu0 0.0
        %4233 = vmatprep.subr.mxu0 0.0
        %4234 = vmatpush1.msra.mxu0 0.0
        %4235 = vmatprep.subr.mxu0 0.0
        %4236 = vmatpush1.msra.mxu0 0.0
        %4237 = vmatprep.subr.mxu0 0.0
        %4238 = vmatpush1.msra.mxu0 0.0
        %4239 = vmatprep.subr.mxu0 0.0
        %4240 = vmatpush1.msra.mxu0 0.0
        %4241 = vmatprep.subr.mxu0 0.0
        %4242 = vmatpush1.msra.mxu0 0.0
        %4243 = vmatprep.subr.mxu0 0.0
        %4244 = vmatpush1.msra.mxu0 0.0
        %4245 = vmatprep.subr.mxu0 0.0
        %4246 = vmatpush1.msra.mxu0 0.0
        %4247 = vmatprep.subr.mxu0 0.0
        %4248 = vmatpush1.msra.mxu0 0.0
        %4249 = vmatprep.subr.mxu0 0.0
        %4250 = vmatpush1.msra.mxu0 0.0
        %4251 = vmatprep.subr.mxu0 0.0
        %4252 = vmatpush1.msra.mxu0 0.0
        %4253 = vmatprep.subr.mxu0 0.0
        %4254 = vmatpush1.msra.mxu0 0.0
        %4255 = vmatprep.subr.mxu0 0.0
        %4256 = vmatpush1.msra.mxu0 0.0
        %4257 = vmatprep.subr.mxu0 0.0
        %4258 = vmatpush1.msra.mxu0 0.0
        %4259 = vmatprep.subr.mxu0 0.0
        %4260 = vmatpush1.msra.mxu0 0.0
        %4261 = vmatprep.subr.mxu0 0.0
        %4262 = vmatpush1.msra.mxu0 0.0
        %4263 = vmatprep.subr.mxu0 0.0
        %4264 = vmatpush1.msra.mxu0 0.0
        %4265 = vmatprep.subr.mxu0 0.0
        %4266 = vmatpush1.msra.mxu0 0.0
        %4267 = vmatprep.subr.mxu0 0.0
        %4268 = vmatpush1.msra.mxu0 0.0
        %4269 = vmatprep.subr.mxu0 0.0
        %4270 = vmatpush1.msra.mxu0 0.0
        %4271 = vmatprep.subr.mxu0 0.0
        %4272 = vmatpush1.msra.mxu0 0.0
        %4273 = vmatprep.subr.mxu0 0.0
        %4274 = vmatpush1.msra.mxu0 0.0
        %4275 = vmatprep.subr.mxu0 0.0
        %4276 = vmatpush1.msra.mxu0 0.0
        %4277 = vmatprep.subr.mxu0 0.0
        %4278 = vmatpush1.msra.mxu0 0.0
        %4279 = vmatprep.subr.mxu0 0.0
        %4280 = vmatpush1.msra.mxu0 0.0
        %4281 = vmatprep.subr.mxu0 0.0
        %4282 = vmatpush1.msra.mxu0 0.0
        %4283 = vmatprep.mubr.f32.mxu0 0.0
        %4284 = vmatmul.mubr.f32.gmra.mrb[0].mxu0 %v4217
        %v4285 = vpop.f32.mrb[0].mxu0
        %v4286 = vadd.f32 0.0, %v4285
        %v4287 = vpop.f32.mrb[0].mxu0
        %v4288 = vadd.f32 0.0, %v4287
        %4289 = vdwg.mxu0
        %v4290 = vadd.f32 %v4212, %v4286
        %v4291 = vadd.f32 %v4213, %v4288
        %v4292 = vmax.f32 %v4290, 0.0
        %v4293 = vmax.f32 %v4291, 0.0
        %v4294 = vld [vmem:[%s9] sm:$0xff]
        %v4295 = vld [vmem:[%s9 + $0x8] sm:$0xff]
        %v4296 = vld [vmem:[%s9 + $0x10] sm:$0xff]
        %v4297 = vld [vmem:[%s9 + $0x18] sm:$0xff]
        %v4298 = vld [vmem:[%s9 + $0x20] sm:$0xff]
        %v4299 = vld [vmem:[%s9 + $0x28] sm:$0xff]
        %v4300 = vld [vmem:[%s9 + $0x30] sm:$0xff]
        %v4301 = vld [vmem:[%s9 + $0x38] sm:$0xff]
        %v4302 = vld [vmem:[%s9 + $0x40] sm:$0xff]
        %v4303 = vld [vmem:[%s9 + $0x48] sm:$0xff]
        %v4304 = vld [vmem:[%s9 + $0x50] sm:$0xff]
        %v4305 = vld [vmem:[%s9 + $0x58] sm:$0xff]
        %v4306 = vld [vmem:[%s9 + $0x60] sm:$0xff]
        %v4307 = vld [vmem:[%s9 + $0x68] sm:$0xff]
        %v4308 = vld [vmem:[%s9 + $0x70] sm:$0xff]
        %v4309 = vld [vmem:[%s9 + $0x78] sm:$0xff]
        %v4310 = vld [vmem:[%s9 + $0x80] sm:$0xff]
        %v4311 = vld [vmem:[%s9 + $0x88] sm:$0xff]
        %v4312 = vld [vmem:[%s9 + $0x90] sm:$0xff]
        %v4313 = vld [vmem:[%s9 + $0x98] sm:$0xff]
        %v4314 = vld [vmem:[%s9 + $0xa0] sm:$0xff]
        %v4315 = vld [vmem:[%s9 + $0xa8] sm:$0xff]
        %v4316 = vld [vmem:[%s9 + $0xb0] sm:$0xff]
        %v4317 = vld [vmem:[%s9 + $0xb8] sm:$0xff]
        %v4318 = vld [vmem:[%s9 + $0xc0] sm:$0xff]
        %v4319 = vld [vmem:[%s9 + $0xc8] sm:$0xff]
        %v4320 = vld [vmem:[%s9 + $0xd0] sm:$0xff]
        %v4321 = vld [vmem:[%s9 + $0xd8] sm:$0xff]
        %v4322 = vld [vmem:[%s9 + $0xe0] sm:$0xff]
        %v4323 = vld [vmem:[%s9 + $0xe8] sm:$0xff]
        %v4324 = vld [vmem:[%s9 + $0xf0] sm:$0xff]
        %v4325 = vld [vmem:[%s9 + $0xf8] sm:$0xff]
        %v4326 = vld [vmem:[%s9 + $0x100] sm:$0xff]
        %v4327 = vld [vmem:[%s9 + $0x108] sm:$0xff]
        %v4328 = vld [vmem:[%s9 + $0x110] sm:$0xff]
        %v4329 = vld [vmem:[%s9 + $0x118] sm:$0xff]
        %v4330 = vld [vmem:[%s9 + $0x120] sm:$0xff]
        %v4331 = vld [vmem:[%s9 + $0x128] sm:$0xff]
        %v4332 = vld [vmem:[%s9 + $0x130] sm:$0xff]
        %v4333 = vld [vmem:[%s9 + $0x138] sm:$0xff]
        %v4334 = vld [vmem:[%s9 + $0x140] sm:$0xff]
        %v4335 = vld [vmem:[%s9 + $0x148] sm:$0xff]
        %v4336 = vld [vmem:[%s9 + $0x150] sm:$0xff]
        %v4337 = vld [vmem:[%s9 + $0x158] sm:$0xff]
        %v4338 = vld [vmem:[%s9 + $0x160] sm:$0xff]
        %v4339 = vld [vmem:[%s9 + $0x168] sm:$0xff]
        %v4340 = vld [vmem:[%s9 + $0x170] sm:$0xff]
        %v4341 = vld [vmem:[%s9 + $0x178] sm:$0xff]
        %v4342 = vld [vmem:[%s9 + $0x180] sm:$0xff]
        %v4343 = vld [vmem:[%s9 + $0x188] sm:$0xff]
        %v4344 = vld [vmem:[%s9 + $0x190] sm:$0xff]
        %v4345 = vld [vmem:[%s9 + $0x198] sm:$0xff]
        %v4346 = vld [vmem:[%s9 + $0x1a0] sm:$0xff]
        %v4347 = vld [vmem:[%s9 + $0x1a8] sm:$0xff]
        %v4348 = vld [vmem:[%s9 + $0x1b0] sm:$0xff]
        %v4349 = vld [vmem:[%s9 + $0x1b8] sm:$0xff]
        %v4350 = vld [vmem:[%s9 + $0x1c0] sm:$0xff]
        %v4351 = vld [vmem:[%s9 + $0x1c8] sm:$0xff]
        %v4352 = vld [vmem:[%s9 + $0x1d0] sm:$0xff]
        %v4353 = vld [vmem:[%s9 + $0x1d8] sm:$0xff]
        %v4354 = vld [vmem:[%s9 + $0x1e0] sm:$0xff]
        %v4355 = vld [vmem:[%s9 + $0x1e8] sm:$0xff]
        %v4356 = vld [vmem:[%s9 + $0x1f0] sm:$0xff]
        %v4357 = vld [vmem:[%s9 + $0x1f8] sm:$0xff]
        %4358 = vmatprep.subr.mxu0 %v4295
        %4359 = vmatpush1.msra.mxu0 %v4294
        %4360 = vmatprep.subr.mxu0 %v4297
        %4361 = vmatpush1.msra.mxu0 %v4296
        %4362 = vmatprep.subr.mxu0 %v4299
        %4363 = vmatpush1.msra.mxu0 %v4298
        %4364 = vmatprep.subr.mxu0 %v4301
        %4365 = vmatpush1.msra.mxu0 %v4300
        %4366 = vmatprep.subr.mxu0 %v4303
        %4367 = vmatpush1.msra.mxu0 %v4302
        %4368 = vmatprep.subr.mxu0 %v4305
        %4369 = vmatpush1.msra.mxu0 %v4304
        %4370 = vmatprep.subr.mxu0 %v4307
        %4371 = vmatpush1.msra.mxu0 %v4306
        %4372 = vmatprep.subr.mxu0 %v4309
        %4373 = vmatpush1.msra.mxu0 %v4308
        %4374 = vmatprep.subr.mxu0 %v4311
        %4375 = vmatpush1.msra.mxu0 %v4310
        %4376 = vmatprep.subr.mxu0 %v4313
        %4377 = vmatpush1.msra.mxu0 %v4312
        %4378 = vmatprep.subr.mxu0 %v4315
        %4379 = vmatpush1.msra.mxu0 %v4314
        %4380 = vmatprep.subr.mxu0 %v4317
        %4381 = vmatpush1.msra.mxu0 %v4316
        %4382 = vmatprep.subr.mxu0 %v4319
        %4383 = vmatpush1.msra.mxu0 %v4318
        %4384 = vmatprep.subr.mxu0 %v4321
        %4385 = vmatpush1.msra.mxu0 %v4320
        %4386 = vmatprep.subr.mxu0 %v4323
        %4387 = vmatpush1.msra.mxu0 %v4322
        %4388 = vmatprep.subr.mxu0 %v4325
        %4389 = vmatpush1.msra.mxu0 %v4324
        %4390 = vmatprep.subr.mxu0 %v4327
        %4391 = vmatpush1.msra.mxu0 %v4326
        %4392 = vmatprep.subr.mxu0 %v4329
        %4393 = vmatpush1.msra.mxu0 %v4328
        %4394 = vmatprep.subr.mxu0 %v4331
        %4395 = vmatpush1.msra.mxu0 %v4330
        %4396 = vmatprep.subr.mxu0 %v4333
        %4397 = vmatpush1.msra.mxu0 %v4332
        %4398 = vmatprep.subr.mxu0 %v4335
        %4399 = vmatpush1.msra.mxu0 %v4334
        %4400 = vmatprep.subr.mxu0 %v4337
        %4401 = vmatpush1.msra.mxu0 %v4336
        %4402 = vmatprep.subr.mxu0 %v4339
        %4403 = vmatpush1.msra.mxu0 %v4338
        %4404 = vmatprep.subr.mxu0 %v4341
        %4405 = vmatpush1.msra.mxu0 %v4340
        %4406 = vmatprep.subr.mxu0 %v4343
        %4407 = vmatpush1.msra.mxu0 %v4342
        %4408 = vmatprep.subr.mxu0 %v4345
        %4409 = vmatpush1.msra.mxu0 %v4344
        %4410 = vmatprep.subr.mxu0 %v4347
        %4411 = vmatpush1.msra.mxu0 %v4346
        %4412 = vmatprep.subr.mxu0 %v4349
        %4413 = vmatpush1.msra.mxu0 %v4348
        %4414 = vmatprep.subr.mxu0 %v4351
        %4415 = vmatpush1.msra.mxu0 %v4350
        %4416 = vmatprep.subr.mxu0 %v4353
        %4417 = vmatpush1.msra.mxu0 %v4352
        %4418 = vmatprep.subr.mxu0 %v4355
        %4419 = vmatpush1.msra.mxu0 %v4354
        %4420 = vmatprep.subr.mxu0 %v4357
        %4421 = vmatpush1.msra.mxu0 %v4356
        %4422 = vmatprep.mubr.f32.mxu0 %v4293
        %4423 = vmatmul.mubr.f32.gmra.mrb[0].mxu0 %v4292
        %v4424 = vpop.f32.mrb[0].mxu0
        %v4425 = vadd.f32 0.0, %v4424
        %v4426 = vpop.f32.mrb[0].mxu0
        %v4427 = vadd.f32 0.0, %v4426
        %4428 = vdwg.mxu0
        %v4429 = vld [vmem:[%s10] sm:$0x1]
        %s4430 = scalar_lea.vmem %s10, 1
        %v4431 = vld [vmem:[%s4430] sm:$0x1]
        %4433 = vrot.lane.b32.xlu0 %v4425, 64
        %v4434 = vpop.permute.xlu0 %4433
        %vm4435 = vcmask 31744
        %v4437 = vsel %vm4435, %v4431, 0
        %vm4439 = vcmask 1043456
        %v4440 = vsel %vm4439, %v4434, 0
        %4442 = vmatprep.subr.mxu0 0.0
        %4443 = vmatpush1.msra.mxu0 %v4440
        %4444 = vmatprep.subr.mxu0 0.0
        %4445 = vmatpush1.msra.mxu0 0.0
        %4446 = vmatprep.subr.mxu0 0.0
        %4447 = vmatpush1.msra.mxu0 0.0
        %4448 = vmatprep.subr.mxu0 0.0
        %4449 = vmatpush1.msra.mxu0 0.0
        %4450 = vmatprep.subr.mxu0 0.0
        %4451 = vmatpush1.msra.mxu0 0.0
        %4452 = vmatprep.subr.mxu0 0.0
        %4453 = vmatpush1.msra.mxu0 0.0
        %4454 = vmatprep.subr.mxu0 0.0
        %4455 = vmatpush1.msra.mxu0 0.0
        %4456 = vmatprep.subr.mxu0 0.0
        %4457 = vmatpush1.msra.mxu0 0.0
        %4458 = vmatprep.subr.mxu0 0.0
        %4459 = vmatpush1.msra.mxu0 0.0
        %4460 = vmatprep.subr.mxu0 0.0
        %4461 = vmatpush1.msra.mxu0 0.0
        %4462 = vmatprep.subr.mxu0 0.0
        %4463 = vmatpush1.msra.mxu0 0.0
        %4464 = vmatprep.subr.mxu0 0.0
        %4465 = vmatpush1.msra.mxu0 0.0
        %4466 = vmatprep.subr.mxu0 0.0
        %4467 = vmatpush1.msra.mxu0 0.0
        %4468 = vmatprep.subr.mxu0 0.0
        %4469 = vmatpush1.msra.mxu0 0.0
        %4470 = vmatprep.subr.mxu0 0.0
        %4471 = vmatpush1.msra.mxu0 0.0
        %4472 = vmatprep.subr.mxu0 0.0
        %4473 = vmatpush1.msra.mxu0 0.0
        %4474 = vmatprep.subr.mxu0 0.0
        %4475 = vmatpush1.msra.mxu0 0.0
        %4476 = vmatprep.subr.mxu0 0.0
        %4477 = vmatpush1.msra.mxu0 0.0
        %4478 = vmatprep.subr.mxu0 0.0
        %4479 = vmatpush1.msra.mxu0 0.0
        %4480 = vmatprep.subr.mxu0 0.0
        %4481 = vmatpush1.msra.mxu0 0.0
        %4482 = vmatprep.subr.mxu0 0.0
        %4483 = vmatpush1.msra.mxu0 0.0
        %4484 = vmatprep.subr.mxu0 0.0
        %4485 = vmatpush1.msra.mxu0 0.0
        %4486 = vmatprep.subr.mxu0 0.0
        %4487 = vmatpush1.msra.mxu0 0.0
        %4488 = vmatprep.subr.mxu0 0.0
        %4489 = vmatpush1.msra.mxu0 0.0
        %4490 = vmatprep.subr.mxu0 0.0
        %4491 = vmatpush1.msra.mxu0 0.0
        %4492 = vmatprep.subr.mxu0 0.0
        %4493 = vmatpush1.msra.mxu0 0.0
        %4494 = vmatprep.subr.mxu0 0.0
        %4495 = vmatpush1.msra.mxu0 0.0
        %4496 = vmatprep.subr.mxu0 0.0
        %4497 = vmatpush1.msra.mxu0 0.0
        %4498 = vmatprep.subr.mxu0 0.0
        %4499 = vmatpush1.msra.mxu0 0.0
        %4500 = vmatprep.subr.mxu0 0.0
        %4501 = vmatpush1.msra.mxu0 0.0
        %4502 = vmatprep.subr.mxu0 0.0
        %4503 = vmatpush1.msra.mxu0 0.0
        %4504 = vmatprep.subr.mxu0 0.0
        %4505 = vmatpush1.msra.mxu0 0.0
        %4506 = vmatprep.mubr.f32.mxu0 0.0
        %4507 = vmatmul.mubr.f32.gmra.mrb[0].mxu0 %v4437
        %v4508 = vpop.f32.mrb[0].mxu0
        %v4509 = vadd.f32 0.0, %v4508
        %v4510 = vpop.f32.mrb[0].mxu0
        %4511 = vdwg.mxu0
        %v4513 = vsel %vm4435, %v4429, 0
        %v4515 = vsel %vm4439, %v4425, 0
        %4517 = vmatprep.subr.mxu0 0.0
        %4518 = vmatpush1.msra.mxu0 %v4515
        %4519 = vmatprep.subr.mxu0 0.0
        %4520 = vmatpush1.msra.mxu0 0.0
        %4521 = vmatprep.subr.mxu0 0.0
        %4522 = vmatpush1.msra.mxu0 0.0
        %4523 = vmatprep.subr.mxu0 0.0
        %4524 = vmatpush1.msra.mxu0 0.0
        %4525 = vmatprep.subr.mxu0 0.0
        %4526 = vmatpush1.msra.mxu0 0.0
        %4527 = vmatprep.subr.mxu0 0.0
        %4528 = vmatpush1.msra.mxu0 0.0
        %4529 = vmatprep.subr.mxu0 0.0
        %4530 = vmatpush1.msra.mxu0 0.0
        %4531 = vmatprep.subr.mxu0 0.0
        %4532 = vmatpush1.msra.mxu0 0.0
        %4533 = vmatprep.subr.mxu0 0.0
        %4534 = vmatpush1.msra.mxu0 0.0
        %4535 = vmatprep.subr.mxu0 0.0
        %4536 = vmatpush1.msra.mxu0 0.0
        %4537 = vmatprep.subr.mxu0 0.0
        %4538 = vmatpush1.msra.mxu0 0.0
        %4539 = vmatprep.subr.mxu0 0.0
        %4540 = vmatpush1.msra.mxu0 0.0
        %4541 = vmatprep.subr.mxu0 0.0
        %4542 = vmatpush1.msra.mxu0 0.0
        %4543 = vmatprep.subr.mxu0 0.0
        %4544 = vmatpush1.msra.mxu0 0.0
        %4545 = vmatprep.subr.mxu0 0.0
        %4546 = vmatpush1.msra.mxu0 0.0
        %4547 = vmatprep.subr.mxu0 0.0
        %4548 = vmatpush1.msra.mxu0 0.0
        %4549 = vmatprep.subr.mxu0 0.0
        %4550 = vmatpush1.msra.mxu0 0.0
        %4551 = vmatprep.subr.mxu0 0.0
        %4552 = vmatpush1.msra.mxu0 0.0
        %4553 = vmatprep.subr.mxu0 0.0
        %4554 = vmatpush1.msra.mxu0 0.0
        %4555 = vmatprep.subr.mxu0 0.0
        %4556 = vmatpush1.msra.mxu0 0.0
        %4557 = vmatprep.subr.mxu0 0.0
        %4558 = vmatpush1.msra.mxu0 0.0
        %4559 = vmatprep.subr.mxu0 0.0
        %4560 = vmatpush1.msra.mxu0 0.0
        %4561 = vmatprep.subr.mxu0 0.0
        %4562 = vmatpush1.msra.mxu0 0.0
        %4563 = vmatprep.subr.mxu0 0.0
        %4564 = vmatpush1.msra.mxu0 0.0
        %4565 = vmatprep.subr.mxu0 0.0
        %4566 = vmatpush1.msra.mxu0 0.0
        %4567 = vmatprep.subr.mxu0 0.0
        %4568 = vmatpush1.msra.mxu0 0.0
        %4569 = vmatprep.subr.mxu0 0.0
        %4570 = vmatpush1.msra.mxu0 0.0
        %4571 = vmatprep.subr.mxu0 0.0
        %4572 = vmatpush1.msra.mxu0 0.0
        %4573 = vmatprep.subr.mxu0 0.0
        %4574 = vmatpush1.msra.mxu0 0.0
        %4575 = vmatprep.subr.mxu0 0.0
        %4576 = vmatpush1.msra.mxu0 0.0
        %4577 = vmatprep.subr.mxu0 0.0
        %4578 = vmatpush1.msra.mxu0 0.0
        %4579 = vmatprep.subr.mxu0 0.0
        %4580 = vmatpush1.msra.mxu0 0.0
        %4581 = vmatprep.mubr.f32.mxu0 0.0
        %4582 = vmatmul.mubr.f32.gmra.mrb[0].mxu0 %v4513
        %v4583 = vpop.f32.mrb[0].mxu0
        %v4584 = vadd.f32 %v4509, %v4583
        %v4585 = vpop.f32.mrb[0].mxu0
        %4586 = vdwg.mxu0
        %s4587 = scalar_lea.vmem %s10, 2
        %v4588 = vld [vmem:[%s4587] sm:$0x1]
        %v4590 = vsel %vm4435, %v4588, 0
        %v4593 = vsel %vm4439, %v4427, 0
        %4595 = vmatprep.subr.mxu0 0.0
        %4596 = vmatpush1.msra.mxu0 %v4593
        %4597 = vmatprep.subr.mxu0 0.0
        %4598 = vmatpush1.msra.mxu0 0.0
        %4599 = vmatprep.subr.mxu0 0.0
        %4600 = vmatpush1.msra.mxu0 0.0
        %4601 = vmatprep.subr.mxu0 0.0
        %4602 = vmatpush1.msra.mxu0 0.0
        %4603 = vmatprep.subr.mxu0 0.0
        %4604 = vmatpush1.msra.mxu0 0.0
        %4605 = vmatprep.subr.mxu0 0.0
        %4606 = vmatpush1.msra.mxu0 0.0
        %4607 = vmatprep.subr.mxu0 0.0
        %4608 = vmatpush1.msra.mxu0 0.0
        %4609 = vmatprep.subr.mxu0 0.0
        %4610 = vmatpush1.msra.mxu0 0.0
        %4611 = vmatprep.subr.mxu0 0.0
        %4612 = vmatpush1.msra.mxu0 0.0
        %4613 = vmatprep.subr.mxu0 0.0
        %4614 = vmatpush1.msra.mxu0 0.0
        %4615 = vmatprep.subr.mxu0 0.0
        %4616 = vmatpush1.msra.mxu0 0.0
        %4617 = vmatprep.subr.mxu0 0.0
        %4618 = vmatpush1.msra.mxu0 0.0
        %4619 = vmatprep.subr.mxu0 0.0
        %4620 = vmatpush1.msra.mxu0 0.0
        %4621 = vmatprep.subr.mxu0 0.0
        %4622 = vmatpush1.msra.mxu0 0.0
        %4623 = vmatprep.subr.mxu0 0.0
        %4624 = vmatpush1.msra.mxu0 0.0
        %4625 = vmatprep.subr.mxu0 0.0
        %4626 = vmatpush1.msra.mxu0 0.0
        %4627 = vmatprep.subr.mxu0 0.0
        %4628 = vmatpush1.msra.mxu0 0.0
        %4629 = vmatprep.subr.mxu0 0.0
        %4630 = vmatpush1.msra.mxu0 0.0
        %4631 = vmatprep.subr.mxu0 0.0
        %4632 = vmatpush1.msra.mxu0 0.0
        %4633 = vmatprep.subr.mxu0 0.0
        %4634 = vmatpush1.msra.mxu0 0.0
        %4635 = vmatprep.subr.mxu0 0.0
        %4636 = vmatpush1.msra.mxu0 0.0
        %4637 = vmatprep.subr.mxu0 0.0
        %4638 = vmatpush1.msra.mxu0 0.0
        %4639 = vmatprep.subr.mxu0 0.0
        %4640 = vmatpush1.msra.mxu0 0.0
        %4641 = vmatprep.subr.mxu0 0.0
        %4642 = vmatpush1.msra.mxu0 0.0
        %4643 = vmatprep.subr.mxu0 0.0
        %4644 = vmatpush1.msra.mxu0 0.0
        %4645 = vmatprep.subr.mxu0 0.0
        %4646 = vmatpush1.msra.mxu0 0.0
        %4647 = vmatprep.subr.mxu0 0.0
        %4648 = vmatpush1.msra.mxu0 0.0
        %4649 = vmatprep.subr.mxu0 0.0
        %4650 = vmatpush1.msra.mxu0 0.0
        %4651 = vmatprep.subr.mxu0 0.0
        %4652 = vmatpush1.msra.mxu0 0.0
        %4653 = vmatprep.subr.mxu0 0.0
        %4654 = vmatpush1.msra.mxu0 0.0
        %4655 = vmatprep.subr.mxu0 0.0
        %4656 = vmatpush1.msra.mxu0 0.0
        %4657 = vmatprep.subr.mxu0 0.0
        %4658 = vmatpush1.msra.mxu0 0.0
        %4659 = vmatprep.mubr.f32.mxu0 0.0
        %4660 = vmatmul.mubr.f32.gmra.mrb[0].mxu0 %v4590
        %v4661 = vpop.f32.mrb[0].mxu0
        %v4662 = vadd.f32 0.0, %v4661
        %v4663 = vpop.f32.mrb[0].mxu0
        %4664 = vdwg.mxu0
        %v4665 = vadd.f32 %v4584, %v4662
        %s4666 = scalar_lea.vmem %s10, 3
        %v4667 = vld [vmem:[%s4666] sm:$0x1]
        %4668 = vrot.lane.b32.xlu0 %v4427, 64
        %v4669 = vpop.permute.xlu0 %4668
        %v4671 = vsel %vm4435, %v4667, 0
        %v4673 = vsel %vm4439, %v4669, 0
        %4675 = vmatprep.subr.mxu0 0.0
        %4676 = vmatpush1.msra.mxu0 %v4673
        %4677 = vmatprep.subr.mxu0 0.0
        %4678 = vmatpush1.msra.mxu0 0.0
        %4679 = vmatprep.subr.mxu0 0.0
        %4680 = vmatpush1.msra.mxu0 0.0
        %4681 = vmatprep.subr.mxu0 0.0
        %4682 = vmatpush1.msra.mxu0 0.0
        %4683 = vmatprep.subr.mxu0 0.0
        %4684 = vmatpush1.msra.mxu0 0.0
        %4685 = vmatprep.subr.mxu0 0.0
        %4686 = vmatpush1.msra.mxu0 0.0
        %4687 = vmatprep.subr.mxu0 0.0
        %4688 = vmatpush1.msra.mxu0 0.0
        %4689 = vmatprep.subr.mxu0 0.0
        %4690 = vmatpush1.msra.mxu0 0.0
        %4691 = vmatprep.subr.mxu0 0.0
        %4692 = vmatpush1.msra.mxu0 0.0
        %4693 = vmatprep.subr.mxu0 0.0
        %4694 = vmatpush1.msra.mxu0 0.0
        %4695 = vmatprep.subr.mxu0 0.0
        %4696 = vmatpush1.msra.mxu0 0.0
        %4697 = vmatprep.subr.mxu0 0.0
        %4698 = vmatpush1.msra.mxu0 0.0
        %4699 = vmatprep.subr.mxu0 0.0
        %4700 = vmatpush1.msra.mxu0 0.0
        %4701 = vmatprep.subr.mxu0 0.0
        %4702 = vmatpush1.msra.mxu0 0.0
        %4703 = vmatprep.subr.mxu0 0.0
        %4704 = vmatpush1.msra.mxu0 0.0
        %4705 = vmatprep.subr.mxu0 0.0
        %4706 = vmatpush1.msra.mxu0 0.0
        %4707 = vmatprep.subr.mxu0 0.0
        %4708 = vmatpush1.msra.mxu0 0.0
        %4709 = vmatprep.subr.mxu0 0.0
        %4710 = vmatpush1.msra.mxu0 0.0
        %4711 = vmatprep.subr.mxu0 0.0
        %4712 = vmatpush1.msra.mxu0 0.0
        %4713 = vmatprep.subr.mxu0 0.0
        %4714 = vmatpush1.msra.mxu0 0.0
        %4715 = vmatprep.subr.mxu0 0.0
        %4716 = vmatpush1.msra.mxu0 0.0
        %4717 = vmatprep.subr.mxu0 0.0
        %4718 = vmatpush1.msra.mxu0 0.0
        %4719 = vmatprep.subr.mxu0 0.0
        %4720 = vmatpush1.msra.mxu0 0.0
        %4721 = vmatprep.subr.mxu0 0.0
        %4722 = vmatpush1.msra.mxu0 0.0
        %4723 = vmatprep.subr.mxu0 0.0
        %4724 = vmatpush1.msra.mxu0 0.0
        %4725 = vmatprep.subr.mxu0 0.0
        %4726 = vmatpush1.msra.mxu0 0.0
        %4727 = vmatprep.subr.mxu0 0.0
        %4728 = vmatpush1.msra.mxu0 0.0
        %4729 = vmatprep.subr.mxu0 0.0
        %4730 = vmatpush1.msra.mxu0 0.0
        %4731 = vmatprep.subr.mxu0 0.0
        %4732 = vmatpush1.msra.mxu0 0.0
        %4733 = vmatprep.subr.mxu0 0.0
        %4734 = vmatpush1.msra.mxu0 0.0
        %4735 = vmatprep.subr.mxu0 0.0
        %4736 = vmatpush1.msra.mxu0 0.0
        %4737 = vmatprep.subr.mxu0 0.0
        %4738 = vmatpush1.msra.mxu0 0.0
        %4739 = vmatprep.mubr.f32.mxu0 0.0
        %4740 = vmatmul.mubr.f32.gmra.mrb[0].mxu0 %v4671
        %v4741 = vpop.f32.mrb[0].mxu0
        %v4742 = vadd.f32 0.0, %v4741
        %v4743 = vpop.f32.mrb[0].mxu0
        %4744 = vdwg.mxu0
        %v4745 = vadd.f32 %v4665, %v4742
        %v4746 = vmax.f32 %v4745, 0.0
        %v4747 = vld [vmem:[%s11] sm:$0xff]
        %v4748 = vld [vmem:[%s11 + $0x8] sm:$0xff]
        %v4749 = vld [vmem:[%s11 + $0x10] sm:$0xff]
        %v4750 = vld [vmem:[%s11 + $0x18] sm:$0xff]
        %v4751 = vld [vmem:[%s11 + $0x20] sm:$0xff]
        %v4752 = vld [vmem:[%s11 + $0x28] sm:$0xff]
        %v4753 = vld [vmem:[%s11 + $0x30] sm:$0xff]
        %v4754 = vld [vmem:[%s11 + $0x38] sm:$0xff]
        %v4756 = vsel %vm678, %v4746, 0
        %4758 = vmatprep.subr.mxu0 0.0
        %4759 = vmatpush1.msra.mxu0 %v4747
        %4760 = vmatprep.subr.mxu0 0.0
        %4761 = vmatpush1.msra.mxu0 %v4748
        %4762 = vmatprep.subr.mxu0 0.0
        %4763 = vmatpush1.msra.mxu0 %v4749
        %4764 = vmatprep.subr.mxu0 0.0
        %4765 = vmatpush1.msra.mxu0 %v4750
        %4766 = vmatprep.subr.mxu0 0.0
        %4767 = vmatpush1.msra.mxu0 %v4751
        %4768 = vmatprep.subr.mxu0 0.0
        %4769 = vmatpush1.msra.mxu0 %v4752
        %4770 = vmatprep.subr.mxu0 0.0
        %4771 = vmatpush1.msra.mxu0 %v4753
        %4772 = vmatprep.subr.mxu0 0.0
        %4773 = vmatpush1.msra.mxu0 %v4754
        %4774 = vmatprep.subr.mxu0 0.0
        %4775 = vmatpush1.msra.mxu0 0.0
        %4776 = vmatprep.subr.mxu0 0.0
        %4777 = vmatpush1.msra.mxu0 0.0
        %4778 = vmatprep.subr.mxu0 0.0
        %4779 = vmatpush1.msra.mxu0 0.0
        %4780 = vmatprep.subr.mxu0 0.0
        %4781 = vmatpush1.msra.mxu0 0.0
        %4782 = vmatprep.subr.mxu0 0.0
        %4783 = vmatpush1.msra.mxu0 0.0
        %4784 = vmatprep.subr.mxu0 0.0
        %4785 = vmatpush1.msra.mxu0 0.0
        %4786 = vmatprep.subr.mxu0 0.0
        %4787 = vmatpush1.msra.mxu0 0.0
        %4788 = vmatprep.subr.mxu0 0.0
        %4789 = vmatpush1.msra.mxu0 0.0
        %4790 = vmatprep.subr.mxu0 0.0
        %4791 = vmatpush1.msra.mxu0 0.0
        %4792 = vmatprep.subr.mxu0 0.0
        %4793 = vmatpush1.msra.mxu0 0.0
        %4794 = vmatprep.subr.mxu0 0.0
        %4795 = vmatpush1.msra.mxu0 0.0
        %4796 = vmatprep.subr.mxu0 0.0
        %4797 = vmatpush1.msra.mxu0 0.0
        %4798 = vmatprep.subr.mxu0 0.0
        %4799 = vmatpush1.msra.mxu0 0.0
        %4800 = vmatprep.subr.mxu0 0.0
        %4801 = vmatpush1.msra.mxu0 0.0
        %4802 = vmatprep.subr.mxu0 0.0
        %4803 = vmatpush1.msra.mxu0 0.0
        %4804 = vmatprep.subr.mxu0 0.0
        %4805 = vmatpush1.msra.mxu0 0.0
        %4806 = vmatprep.subr.mxu0 0.0
        %4807 = vmatpush1.msra.mxu0 0.0
        %4808 = vmatprep.subr.mxu0 0.0
        %4809 = vmatpush1.msra.mxu0 0.0
        %4810 = vmatprep.subr.mxu0 0.0
        %4811 = vmatpush1.msra.mxu0 0.0
        %4812 = vmatprep.subr.mxu0 0.0
        %4813 = vmatpush1.msra.mxu0 0.0
        %4814 = vmatprep.subr.mxu0 0.0
        %4815 = vmatpush1.msra.mxu0 0.0
        %4816 = vmatprep.subr.mxu0 0.0
        %4817 = vmatpush1.msra.mxu0 0.0
        %4818 = vmatprep.subr.mxu0 0.0
        %4819 = vmatpush1.msra.mxu0 0.0
        %4820 = vmatprep.subr.mxu0 0.0
        %4821 = vmatpush1.msra.mxu0 0.0
        %4822 = vmatprep.mubr.f32.mxu0 0.0
        %4823 = vmatmul.mubr.f32.gmra.mrb[0].mxu0 %v4756
        %v4824 = vpop.f32.mrb[0].mxu0
        %v4825 = vadd.f32 0.0, %v4824
        %v4826 = vpop.f32.mrb[0].mxu0
        %4827 = vdwg.mxu0
        %v4828 = vtanh.pop %v4825
        %vm4829 = vcmask 122880
        %4830 = vst.msk [vmem:[%s464] sm:$0x1] %vm4829, %v4828
        %s4831 = sand.u32 %s294, 1
        %s4832 = scalar_lea.sflag [#allocation4], %s4831
        %s4833 = sand.u32 %s294, 1
        %s4834 = scalar_lea.vmem [#allocation10], %s4833
        // Predicated region
        $region85: #{encoder_forward.1} parent=67 // pred_check
          %p4835 = pneg %p304
        $region86: #{encoder_forward.1} parent=67 // pred_check_branch
          %4837 = sbr.rel (%p4835) target = $region88
        $region87: #{encoder_forward.1} parent=67 // pred_region
          %s4839 = ssub.s32 16, 16
          %4840 = vsyncadd %s4832, %s4839
          %s4841 = smul.addr %s29, 16
          %s4842 = scalar_lea.hbm %s12, %s4841
          %s4844 = sshll.u32 %s4834, 4
          %s4845 = int_to_ptr.vmem [resolvable:$true] %s4844
          %4847 = dma.vmem_to_hbm [thread:$0]  %s4845, 16, %s4842, %s4832
        $region88: #{encoder_forward.1} parent=67 // pred_fallthru
          _
      $region68: #{encoder_forward.1} parent=5 // pred_fallthru
        _
      %p4848 = scmp.le.s32.totalorder 2, %s24
      // Predicated region
      $region89: #{encoder_forward.1} parent=5 // pred_check
        %p4849 = pneg %p4848
      $region90: #{encoder_forward.1} parent=5 // pred_check_branch
        %4851 = sbr.rel (%p4849) target = $region92
      $region91: #{encoder_forward.1} parent=5 // pred_region
        %s4852 = ssub.s32 %s24, 2
        // Predicated region
        $region93: #{encoder_forward.1} parent=91 // pred_check
          %p4853 = pneg %p310
        $region94: #{encoder_forward.1} parent=91 // pred_check_branch
          %4855 = sbr.rel (%p4853) target = $region96
        $region95: #{encoder_forward.1} parent=91 // pred_region
          %s4856 = sand.u32 %s295, 1
          %s4857 = scalar_lea.sflag [#allocation4], %s4856
          %s4858 = sand.u32 %s295, 1
          %s4859 = scalar_lea.vmem [#allocation10], %s4858
          %4860 = dma.done %s4857, 16
        $region96: #{encoder_forward.1} parent=91 // pred_fallthru
          _
      $region92: #{encoder_forward.1} parent=5 // pred_fallthru
        _
    $region6: #{encoder_forward.1} parent=1 // loop_footer
      %s28 = sadd.s32 1, %s24
    $region7: #{encoder_forward.1} parent=1 // loop_footer_branch
      %23 = sbr.rel target = $region3
    $region8: #{encoder_forward.1} parent=1 // loop_exit
      _
    %4861 = vsyncpa [#allocation3], 1
    %s4862 = scalar_lea.sflag [#allocation3], 1
    %4863 = vsyncpa %s4862, 1
    %4864 = vsyncpa [#allocation6], 1
    %4865 = vsyncpa [#allocation9], 1
    %4866 = vsyncpa [#allocation4], 1
    %s4867 = scalar_lea.sflag [#allocation4], 1
    %4868 = vsyncpa %s4867, 1

</llo_original>
